<compile_context>
chip_gen: v6e
topology: v6e:2x2x1
jax: 0.10.0
libtpu: 0.0.40
codegen_flags: <defaults>
</compile_context>

<pallas_src>
import functools

import jax
import jax.numpy as jnp
from jax import lax
from jax.experimental import pallas as pl
from jax.experimental.pallas import tpu as pltpu

_EPS = 1e-5
_LANE = 128
_SUBLANE = 8
_M_TARGET = 256          # matmul M-dim target per row tile


def _round_up(v, m):
    return (v + m - 1) // m * m


def _pick_row_tile(Ho, Wo_p, target=_M_TARGET):
    """Largest divisor of Ho with TR * Wo_p <= target (>= 1)."""
    best = 1
    for tr in range(1, Ho + 1):
        if Ho % tr == 0 and tr * Wo_p <= target:
            best = tr
    return best


def _vmem_limit_bytes():
    """~75% of physical VMEM, capped at 96 MiB; safe 48 MiB fallback (v7x)."""
    try:
        cap = int(pltpu.get_tpu_info().vmem_capacity_bytes)
        return min(cap * 3 // 4, 96 * 1024 * 1024)
    except Exception:
        return 48 * 1024 * 1024


# --------------------------------------------------------------------------- #
# Kernel
# --------------------------------------------------------------------------- #
def _bottleneck_kernel(has_shortcut, TR, Wo, Wo_p,
                       x_ref, rowm_ref, col_ref,
                       w1_ref, b1_ref, w2_ref, b2_ref, w3_ref, b3_ref, *rest):
    if has_shortcut:
        w4_ref, b4_ref, o_ref = rest
    else:
        (o_ref,) = rest

    Cin_p = x_ref.shape[-1]
    D_p = w1_ref.shape[-1]
    Cout_p = w3_ref.shape[-1]
    M_ext = (TR + 2) * Wo_p              # row tile + 1 halo row top & bottom
    M_int = TR * Wo_p                    # interior rows (the output tile)

    r = pl.program_id(1)
    row0 = pl.multiple_of(r * TR, TR)    # offset into the row-padded input

    # (TR+2)-row window of the padded NHWC input, flattened to the matmul M dim.
    xs = x_ref[0, pl.ds(row0, TR + 2), :, :]          # (TR+2, Wo_p, Cin_p) bf16
    xs_flat = xs.reshape(M_ext, Cin_p)

    # ---- conv1 (1x1, BN1 scale folded into w1) + bias + ReLU (f32 accum) ----
    h1 = jnp.dot(xs_flat, w1_ref[...], preferred_element_type=jnp.float32)
    h1 = jnp.maximum(h1 + b1_ref[...], 0.0)
    # Halo rows outside the image must contribute 0 to conv2 (not relu(b1)):
    # lane-1 precomputed row mask, then a single cast to bf16.
    h1 = (h1 * rowm_ref[0]).astype(jnp.bfloat16)

    # ---- conv2 (3x3, pad=1, stride=1) ----
    # Column +/-1 taps: zero-row concat on the flat tile (no wrap, no negative
    # roll); the image's left/right edges (conv zero padding) are enforced with
    # lane-1 column masks.  NOTE the right mask uses Wo-1 so output column Wo-1
    # never reads the non-zero relu(b1) pad column.
    col = col_ref[...]                                  # (M_ext, 1) int32
    zrow = jnp.zeros((1, D_p), jnp.bfloat16)
    xm1 = jnp.concatenate([zrow, h1[:-1, :]], axis=0)   # value at column x-1
    xp1 = jnp.concatenate([h1[1:, :], zrow], axis=0)    # value at column x+1
    left = jnp.where(col > 0, xm1, 0.0)
    right = jnp.where(col < Wo - 1, xp1, 0.0)
    # Fuse the 3 dx taps along K: 3 matmuls + 2 adds instead of 9 + 8.
    lhs = jnp.concatenate([left, h1, right], axis=1)    # (M_ext, 3*D_p) bf16

    acc = None
    for dy in range(3):
        lo = dy * Wo_p                                  # aligned static slice
        d = jnp.dot(lhs[lo:lo + M_int, :], w2_ref[dy],
                    preferred_element_type=jnp.float32)
        acc = d if acc is None else acc + d
    h2 = jnp.maximum(acc + b2_ref[...], 0.0).astype(jnp.bfloat16)

    # ---- conv3 (1x1) + bias, shortcut accumulated in place ----
    out = jnp.dot(h2, w3_ref[...], preferred_element_type=jnp.float32) + b3_ref[...]
    xi = xs_flat[Wo_p:Wo_p + M_int, :]                  # interior input rows
    if has_shortcut:
        out = out + (jnp.dot(xi, w4_ref[...], preferred_element_type=jnp.float32)
                     + b4_ref[...])
    else:
        out = out + xi.astype(jnp.float32)              # identity (Cin_p == Cout_p)

    o_ref[0] = jnp.maximum(out, 0.0).reshape(TR, Wo_p, Cout_p).astype(o_ref.dtype)


# --------------------------------------------------------------------------- #
# Wrappers
# --------------------------------------------------------------------------- #
def _fold_bn(bn):
    gamma, beta, mean, var = bn
    s = gamma / jnp.sqrt(var + _EPS)
    b = beta - mean * s
    return s.astype(jnp.float32), b.astype(jnp.float32)


def _pad_to(a, shape):
    return jnp.pad(a, [(0, t - s) for s, t in zip(a.shape, shape)])


def resnext_block_padded(xp, params, *, Wo, Cin, has_shortcut=False, cardinality=1):
    """One bottleneck block on an already padded activation.

    xp: (N, Ho+2, Wo_p, Cin_p) bfloat16 NHWC with a zero halo row top & bottom,
        zero width padding beyond Wo and zero channel padding beyond Cin.
    Returns (N, Ho, Wo_p, Cout_p) bfloat16 (padded layout, padded channels are
    exactly zero) -- chain blocks with just a cheap 1-row jnp.pad, no slice /
    re-pad of W or C and no f32 round-trip.
    """
    if cardinality != 1:
        # TODO(synk): grouped 3x3 conv (cardinality > 1) not implemented in-kernel.
        raise NotImplementedError("cardinality > 1 not supported")

    xp = xp.astype(jnp.bfloat16)
    N, Hp2, Wo_p, Cin_p = xp.shape
    Ho = Hp2 - 2
    assert Wo_p % _SUBLANE == 0 and Cin_p % _LANE == 0 and 1 <= Wo <= Wo_p
    assert Cin <= Cin_p

    w1, w2, w3 = params["w1"], params["w2"], params["w3"]
    D, Cout = w1.shape[1], w3.shape[1]
    s1, b1 = _fold_bn(params["bn1"])
    s2, b2 = _fold_bn(params["bn2"])
    s3, b3 = _fold_bn(params["bn3"])
    D_p = _round_up(D, _LANE)
    Cout_p = _round_up(Cout, _LANE)

    if not has_shortcut:
        assert Cin == Cout and Cin_p == Cout_p, \
            "identity shortcut needs matching channel shapes"

    # Fold BN scales into conv weights, pad lane-dense, bf16 operands.
    w1p = _pad_to(w1 * s1[None, :], (Cin_p, D_p)).astype(jnp.bfloat16)
    w2p = _pad_to(w2 * s2[None, None, None, :], (3, 3, D_p, D_p))
    w2cat = w2p.reshape(3, 3 * D_p, D_p).astype(jnp.bfloat16)   # dx concat on K
    w3p = _pad_to(w3 * s3[None, :], (D_p, Cout_p)).astype(jnp.bfloat16)
    b1p = _pad_to(b1.reshape(1, D), (1, D_p))
    b2p = _pad_to(b2.reshape(1, D), (1, D_p))
    b3p = _pad_to(b3.reshape(1, Cout), (1, Cout_p))

    TR = _pick_row_tile(Ho, Wo_p)
    R = Ho // TR
    M_ext = (TR + 2) * Wo_p

    # Lane-1 masks precomputed on the host/XLA side (no in-kernel iota/div/mod):
    #   rowmask[r, p] = 1 iff padded row (r*TR + p//Wo_p) is inside the image.
    rows = jnp.arange(M_ext, dtype=jnp.int32) // Wo_p
    row_g = jnp.arange(R, dtype=jnp.int32)[:, None] * TR + rows[None, :]
    rowmask = ((row_g >= 1) & (row_g <= Ho)).astype(jnp.float32).reshape(R, M_ext, 1)
    col_idx = jnp.tile(jnp.arange(Wo_p, dtype=jnp.int32), TR + 2).reshape(M_ext, 1)

    inputs = [xp, rowmask, col_idx, w1p, b1p, w2cat, b2p, w3p, b3p]
    in_specs = [
        pl.BlockSpec((1, Ho + 2, Wo_p, Cin_p), lambda n, r: (n, 0, 0, 0)),
        pl.BlockSpec((1, M_ext, 1), lambda n, r: (r, 0, 0)),
        pl.BlockSpec((M_ext, 1), lambda n, r: (0, 0)),
        pl.BlockSpec((Cin_p, D_p), lambda n, r: (0, 0)),
        pl.BlockSpec((1, D_p), lambda n, r: (0, 0)),
        pl.BlockSpec((3, 3 * D_p, D_p), lambda n, r: (0, 0, 0)),
        pl.BlockSpec((1, D_p), lambda n, r: (0, 0)),
        pl.BlockSpec((D_p, Cout_p), lambda n, r: (0, 0)),
        pl.BlockSpec((1, Cout_p), lambda n, r: (0, 0)),
    ]
    if has_shortcut:
        s4, b4 = _fold_bn(params["bn4"])
        w4p = _pad_to(params["w4"] * s4[None, :], (Cin_p, Cout_p)).astype(jnp.bfloat16)
        b4p = _pad_to(b4.reshape(1, Cout), (1, Cout_p))
        inputs += [w4p, b4p]
        in_specs += [
            pl.BlockSpec((Cin_p, Cout_p), lambda n, r: (0, 0)),
            pl.BlockSpec((1, Cout_p), lambda n, r: (0, 0)),
        ]

    flops = 2 * N * Ho * Wo_p * (Cin_p * D_p + 9 * D_p * D_p + D_p * Cout_p
                                 + (Cin_p * Cout_p if has_shortcut else 0))
    weight_bytes = sum(int(a.size) * a.dtype.itemsize for a in inputs[1:])
    bytes_accessed = int(xp.size) * 2 + N * Ho * Wo_p * Cout_p * 2 + weight_bytes

    kernel = functools.partial(_bottleneck_kernel, has_shortcut, TR, Wo, Wo_p)

    out = pl.pallas_call(
        kernel,
        out_shape=jax.ShapeDtypeStruct((N, Ho, Wo_p, Cout_p), jnp.bfloat16),
        grid=(N, R),
        in_specs=in_specs,
        out_specs=pl.BlockSpec((1, TR, Wo_p, Cout_p), lambda n, r: (n, r, 0, 0)),
        compiler_params=pltpu.CompilerParams(
            dimension_semantics=("parallel", "parallel"),
            vmem_limit_bytes=_vmem_limit_bytes(),
        ),
        cost_estimate=pl.CostEstimate(flops=flops, transcendentals=0,
                                      bytes_accessed=bytes_accessed),
    )(*inputs)
    return out


def resnext_bottleneck_nhwc(x_nhwc, params, *, stride=1, has_shortcut=False,
                            cardinality=1):
    """NHWC convenience entry: pads, runs the kernel, returns unpadded f32 NHWC."""
    # stride-s 1x1 convs (conv1 / conv4) == stride-1 on the subsampled input.
    xs = x_nhwc[:, ::stride, ::stride, :]
    N, Ho, Wo, Cin = xs.shape
    Cin_p = _round_up(Cin, _LANE)
    Wo_p = _round_up(Wo, _SUBLANE)
    # Cast to bf16 BEFORE padding: no f32 round trip, half the pad HBM traffic.
    xp = jnp.pad(xs.astype(jnp.bfloat16),
                 ((0, 0), (1, 1), (0, Wo_p - Wo), (0, Cin_p - Cin)))
    Cout = params["w3"].shape[1]
    out = resnext_block_padded(xp, params, Wo=Wo, Cin=Cin,
                               has_shortcut=has_shortcut, cardinality=cardinality)
    return out[:, :, :Wo, :Cout].astype(jnp.float32)


def resnext_bottleneck(x_nchw, params, *, stride=1, has_shortcut=False, cardinality=1):
    """PyTorch-layout (NCHW) wrapper around the NHWC kernel."""
    x = jnp.transpose(x_nchw, (0, 2, 3, 1))
    y = resnext_bottleneck_nhwc(x, params, stride=stride,
                                has_shortcut=has_shortcut, cardinality=cardinality)
    return jnp.transpose(y, (0, 3, 1, 2))


# --------------------------------------------------------------------------- #
# Parameters + pure-JAX reference (for correctness validation)
# --------------------------------------------------------------------------- #
def init_params(key, inplanes, outplanes, *, widen_factor=1, has_shortcut=False,
                cardinality=1, base_width=64):
    """Deterministic synthetic parameters matching the module's shapes.
    Conv weights are stored as (Cin, Cout) / (kh, kw, Cin, Cout) (HWIO)."""
    D = cardinality * base_width * 2 ** (widen_factor - 1)
    ks = jax.random.split(key, 8)

    def bn(k, c):
        kk = jax.random.split(k, 4)
        gamma = 1.0 + 0.1 * jax.random.normal(kk[0], (c,), jnp.float32)
        beta = 0.1 * jax.random.normal(kk[1], (c,), jnp.float32)
        mean = 0.1 * jax.random.normal(kk[2], (c,), jnp.float32)
        var = jnp.abs(jax.random.normal(kk[3], (c,), jnp.float32)) + 0.5
        return (gamma, beta, mean, var)

    p = {
        "w1": 0.1 * jax.random.normal(ks[0], (inplanes, D), jnp.float32),
        "w2": 0.1 * jax.random.normal(ks[1], (3, 3, D, D), jnp.float32),
        "w3": 0.1 * jax.random.normal(ks[2], (D, outplanes), jnp.float32),
        "bn1": bn(ks[3], D),
        "bn2": bn(ks[4], D),
        "bn3": bn(ks[5], outplanes),
    }
    if has_shortcut:
        p["w4"] = 0.1 * jax.random.normal(ks[6], (inplanes, outplanes), jnp.float32)
        p["bn4"] = bn(ks[7], outplanes)
    return p, D


def _ref_block(x_nchw, params, *, stride=1, has_shortcut=False):
    """Pure-JAX f32 reference of the module forward (eval-mode BN)."""
    def bnf(h, bn):
        g, b, m, v = bn
        return (h - m) / jnp.sqrt(v + _EPS) * g + b

    x = jnp.transpose(x_nchw, (0, 2, 3, 1)).astype(jnp.float32)
    xs = x[:, ::stride, ::stride, :]
    h = jnp.einsum("nhwc,cd->nhwd", xs, params["w1"])
    h = jax.nn.relu(bnf(h, params["bn1"]))
    h = lax.conv_general_dilated(h, params["w2"], (1, 1), "SAME",
                                 dimension_numbers=("NHWC", "HWIO", "NHWC"))
    h = jax.nn.relu(bnf(h, params["bn2"]))
    h = jnp.einsum("nhwd,de->nhwe", h, params["w3"])
    h = bnf(h, params["bn3"])
    if has_shortcut:
        r = bnf(jnp.einsum("nhwc,ce->nhwe", xs, params["w4"]), params["bn4"])
    else:
        r = xs
    out = jax.nn.relu(h + r)
    return jnp.transpose(out, (0, 3, 1, 2))


# --------------------------------------------------------------------------- #
if __name__ == "__main__":
    key = jax.random.PRNGKey(0)
    kx, kp1, kp2, kp3 = jax.random.split(key, 4)

    x = jax.random.normal(kx, (2, 4, 16, 16), jnp.float32)      # NCHW, like PyTorch

    # Block 1 (projection shortcut): ResnetXtBottleneck(4, 16, 1, 1, True, 1, 8)
    # Run via the padded NHWC entry point so block 2 can chain without re-padding.
    p1, _ = init_params(kp1, 4, 16, widen_factor=1, has_shortcut=True,
                        cardinality=1, base_width=8)
    x_nhwc = jnp.transpose(x, (0, 2, 3, 1))
    Wo_p = _round_up(16, _SUBLANE)
    Cin_p = _round_up(4, _LANE)
    xp = jnp.pad(x_nhwc.astype(jnp.bfloat16),
                 ((0, 0), (1, 1), (0, Wo_p - 16), (0, Cin_p - 4)))
    y1_pad = resnext_block_padded(xp, p1, Wo=16, Cin=4, has_shortcut=True)
    jax.block_until_ready(y1_pad)
    y1 = jnp.transpose(y1_pad[:, :, :16, :16].astype(jnp.float32), (0, 3, 1, 2))
    assert y1.shape == (2, 16, 16, 16)
    r1 = _ref_block(x, p1, stride=1, has_shortcut=True)
    assert jnp.allclose(y1, r1, atol=5e-2, rtol=5e-2), \
        f"block1 max err {float(jnp.max(jnp.abs(y1 - r1)))}"

    # Block 2 (identity shortcut), chained in the padded bf16 NHWC layout:
    # only a 1-row halo pad between blocks, no width/channel slice + re-pad.
    p2, _ = init_params(kp2, 16, 16, widen_factor=1, has_shortcut=False,
                        cardinality=1, base_width=8)
    xp2 = jnp.pad(y1_pad, ((0, 0), (1, 1), (0, 0), (0, 0)))
    y2_pad = resnext_block_padded(xp2, p2, Wo=16, Cin=16, has_shortcut=False)
    jax.block_until_ready(y2_pad)
    y2 = jnp.transpose(y2_pad[:, :, :16, :16].astype(jnp.float32), (0, 3, 1, 2))
    assert y2.shape == (2, 16, 16, 16)
    r2 = _ref_block(y1, p2, stride=1, has_shortcut=False)       # isolate block-2 error
    assert jnp.allclose(y2, r2, atol=5e-2, rtol=5e-2), \
        f"block2 max err {float(jnp.max(jnp.abs(y2 - r2)))}"

    # Block 3 (strided projection) via the NCHW convenience wrapper:
    # ResnetXtBottleneck(4, 16, 2, 1, True, 1, 8)
    p3, _ = init_params(kp3, 4, 16, widen_factor=1, has_shortcut=True,
                        cardinality=1, base_width=8)
    y3 = resnext_bottleneck(x, p3, stride=2, has_shortcut=True, cardinality=1)
    jax.block_until_ready(y3)
    assert y3.shape == (2, 16, 8, 8)
    r3 = _ref_block(x, p3, stride=2, has_shortcut=True)
    assert jnp.allclose(y3, r3, atol=5e-2, rtol=5e-2), \
        f"block3 max err {float(jnp.max(jnp.abs(y3 - r3)))}"

    print("KERNEL_OK")
</pallas_src>

<mosaic_0001>
module attributes {stable_mosaic.version = 11 : i64} {
  func.func @_bottleneck_kernel(%arg0: i32, %arg1: i32, %arg2: memref<1x18x16x128xbf16, #tpu.memory_space<vmem>>, %arg3: memref<1x288x1xf32, #tpu.memory_space<vmem>>, %arg4: memref<288x1xi32, #tpu.memory_space<vmem>>, %arg5: memref<128x128xbf16, #tpu.memory_space<vmem>>, %arg6: memref<1x128xf32, #tpu.memory_space<vmem>>, %arg7: memref<3x384x128xbf16, #tpu.memory_space<vmem>>, %arg8: memref<1x128xf32, #tpu.memory_space<vmem>>, %arg9: memref<128x128xbf16, #tpu.memory_space<vmem>>, %arg10: memref<1x128xf32, #tpu.memory_space<vmem>>, %arg11: memref<128x128xbf16, #tpu.memory_space<vmem>>, %arg12: memref<1x128xf32, #tpu.memory_space<vmem>>, %arg13: memref<1x16x16x128xbf16, #tpu.memory_space<vmem>>) attributes {dimension_semantics = [#tpu.dimension_semantics<parallel>, #tpu.dimension_semantics<parallel>], iteration_bounds = array<i64: 2, 1>, scalar_prefetch = 0 : i64, scratch_operands = 0 : i64, tpu.core_type = #tpu.core_type<tc>, window_params = [{transform_indices = @transform_0, window_bounds = array<i64: 1, 18, 16, 128>}, {transform_indices = @transform_1, window_bounds = array<i64: 1, 288, 1>}, {pipeline_mode = #tpu.pipeline_mode<synchronous>, transform_indices = @transform_2, window_bounds = array<i64: 288, 1>}, {pipeline_mode = #tpu.pipeline_mode<synchronous>, transform_indices = @transform_3, window_bounds = array<i64: 128, 128>}, {pipeline_mode = #tpu.pipeline_mode<synchronous>, transform_indices = @transform_4, window_bounds = array<i64: 1, 128>}, {pipeline_mode = #tpu.pipeline_mode<synchronous>, transform_indices = @transform_5, window_bounds = array<i64: 3, 384, 128>}, {pipeline_mode = #tpu.pipeline_mode<synchronous>, transform_indices = @transform_6, window_bounds = array<i64: 1, 128>}, {pipeline_mode = #tpu.pipeline_mode<synchronous>, transform_indices = @transform_7, window_bounds = array<i64: 128, 128>}, {pipeline_mode = #tpu.pipeline_mode<synchronous>, transform_indices = @transform_8, window_bounds = array<i64: 1, 128>}, {pipeline_mode = #tpu.pipeline_mode<synchronous>, transform_indices = @transform_9, window_bounds = array<i64: 128, 128>}, {pipeline_mode = #tpu.pipeline_mode<synchronous>, transform_indices = @transform_10, window_bounds = array<i64: 1, 128>}, {transform_indices = @transform_11, window_bounds = array<i64: 1, 16, 16, 128>}]} {
    %c16_i32 = arith.constant 16 : i32
    %0 = arith.muli %arg1, %c16_i32 : i32
    %1 = tpu.assume_multiple %0, 16 : i32
    %c0 = arith.constant 0 : index
    %2 = arith.index_cast %1 : i32 to index
    %c0_0 = arith.constant 0 : index
    %c0_1 = arith.constant 0 : index
    %3 = vector.load %arg2[%c0, %2, %c0_0, %c0_1] : memref<1x18x16x128xbf16, #tpu.memory_space<vmem>>, vector<1x18x16x128xbf16>
    %4 = vector.shape_cast %3 : vector<1x18x16x128xbf16> to vector<18x16x128xbf16>
    %5 = vector.shape_cast %4 : vector<18x16x128xbf16> to vector<288x128xbf16>
    %c0_2 = arith.constant 0 : index
    %c0_3 = arith.constant 0 : index
    %6 = vector.load %arg5[%c0_2, %c0_3] : memref<128x128xbf16, #tpu.memory_space<vmem>>, vector<128x128xbf16>
    %cst = arith.constant dense<0.000000e+00> : vector<288x128xf32>
    %7 = tpu.matmul %5, %6, %cst {dimension_numbers = #tpu.dot_dimension_numbers<[1], [0], [0], [1], [0, 0, 1, 1], [], []>} : vector<288x128xbf16>, vector<128x128xbf16>, vector<288x128xf32> -> vector<288x128xf32>
    %c0_4 = arith.constant 0 : index
    %c0_5 = arith.constant 0 : index
    %8 = vector.load %arg6[%c0_4, %c0_5] : memref<1x128xf32, #tpu.memory_space<vmem>>, vector<1x128xf32>
    %9 = vector.broadcast %8 : vector<1x128xf32> to vector<288x128xf32>
    %10 = arith.addf %7, %9 : vector<288x128xf32>
    %cst_6 = arith.constant 0.000000e+00 : f32
    %11 = vector.broadcast %cst_6 : f32 to vector<288x128xf32>
    %12 = arith.maximumf %10, %11 : vector<288x128xf32>
    %c0_7 = arith.constant 0 : index
    %c0_8 = arith.constant 0 : index
    %c0_9 = arith.constant 0 : index
    %13 = vector.load %arg3[%c0_7, %c0_8, %c0_9] : memref<1x288x1xf32, #tpu.memory_space<vmem>>, vector<1x288x1xf32>
    %14 = vector.shape_cast %13 : vector<1x288x1xf32> to vector<288x1xf32>
    %15 = vector.broadcast %14 : vector<288x1xf32> to vector<288x128xf32>
    %16 = arith.mulf %12, %15 : vector<288x128xf32>
    %17 = arith.truncf %16 : vector<288x128xf32> to vector<288x128xbf16>
    %c0_10 = arith.constant 0 : index
    %c0_11 = arith.constant 0 : index
    %18 = vector.load %arg4[%c0_10, %c0_11] : memref<288x1xi32, #tpu.memory_space<vmem>>, vector<288x1xi32>
    %cst_12 = arith.constant 0.000000e+00 : bf16
    %19 = vector.broadcast %cst_12 : bf16 to vector<1x128xbf16>
    %20 = vector.extract_strided_slice %17 {offsets = [0, 0], sizes = [287, 128], strides = [1, 1]} : vector<288x128xbf16> to vector<287x128xbf16>
    %21 = tpu.concatenate %19, %20 in 0 : vector<1x128xbf16>, vector<287x128xbf16> -> vector<288x128xbf16>
    %22 = vector.extract_strided_slice %17 {offsets = [1, 0], sizes = [287, 128], strides = [1, 1]} : vector<288x128xbf16> to vector<287x128xbf16>
    %23 = tpu.concatenate %22, %19 in 0 : vector<287x128xbf16>, vector<1x128xbf16> -> vector<288x128xbf16>
    %c0_i32 = arith.constant 0 : i32
    %24 = vector.broadcast %c0_i32 : i32 to vector<288x1xi32>
    %25 = arith.cmpi sgt, %18, %24 : vector<288x1xi32>
    %cst_13 = arith.constant 0.000000e+00 : f32
    %26 = arith.truncf %cst_13 : f32 to bf16
    %27 = vector.shape_cast %25 : vector<288x1xi1> to vector<288x1xi1>
    %28 = vector.broadcast %27 : vector<288x1xi1> to vector<288x128xi1>
    %29 = vector.broadcast %26 : bf16 to vector<288x128xbf16>
    %30 = arith.select %28, %21, %29 : vector<288x128xi1>, vector<288x128xbf16>
    %c15_i32 = arith.constant 15 : i32
    %31 = vector.broadcast %c15_i32 : i32 to vector<288x1xi32>
    %32 = arith.cmpi slt, %18, %31 : vector<288x1xi32>
    %cst_14 = arith.constant 0.000000e+00 : f32
    %33 = arith.truncf %cst_14 : f32 to bf16
    %34 = vector.shape_cast %32 : vector<288x1xi1> to vector<288x1xi1>
    %35 = vector.broadcast %34 : vector<288x1xi1> to vector<288x128xi1>
    %36 = vector.broadcast %33 : bf16 to vector<288x128xbf16>
    %37 = arith.select %35, %23, %36 : vector<288x128xi1>, vector<288x128xbf16>
    %38 = tpu.concatenate %30, %17, %37 in 1 : vector<288x128xbf16>, vector<288x128xbf16>, vector<288x128xbf16> -> vector<288x384xbf16>
    %39 = vector.extract_strided_slice %38 {offsets = [0, 0], sizes = [256, 384], strides = [1, 1]} : vector<288x384xbf16> to vector<256x384xbf16>
    %c0_15 = arith.constant 0 : index
    %c0_16 = arith.constant 0 : index
    %c0_17 = arith.constant 0 : index
    %40 = vector.load %arg7[%c0_15, %c0_16, %c0_17] : memref<3x384x128xbf16, #tpu.memory_space<vmem>>, vector<1x384x128xbf16>
    %41 = vector.shape_cast %40 : vector<1x384x128xbf16> to vector<384x128xbf16>
    %cst_18 = arith.constant dense<0.000000e+00> : vector<256x128xf32>
    %42 = tpu.matmul %39, %41, %cst_18 {dimension_numbers = #tpu.dot_dimension_numbers<[1], [0], [0], [1], [0, 0, 1, 1], [], []>} : vector<256x384xbf16>, vector<384x128xbf16>, vector<256x128xf32> -> vector<256x128xf32>
    %43 = vector.extract_strided_slice %38 {offsets = [16, 0], sizes = [256, 384], strides = [1, 1]} : vector<288x384xbf16> to vector<256x384xbf16>
    %c1 = arith.constant 1 : index
    %c0_19 = arith.constant 0 : index
    %c0_20 = arith.constant 0 : index
    %44 = vector.load %arg7[%c1, %c0_19, %c0_20] : memref<3x384x128xbf16, #tpu.memory_space<vmem>>, vector<1x384x128xbf16>
    %45 = vector.shape_cast %44 : vector<1x384x128xbf16> to vector<384x128xbf16>
    %cst_21 = arith.constant dense<0.000000e+00> : vector<256x128xf32>
    %46 = tpu.matmul %43, %45, %cst_21 {dimension_numbers = #tpu.dot_dimension_numbers<[1], [0], [0], [1], [0, 0, 1, 1], [], []>} : vector<256x384xbf16>, vector<384x128xbf16>, vector<256x128xf32> -> vector<256x128xf32>
    %47 = arith.addf %42, %46 : vector<256x128xf32>
    %48 = vector.extract_strided_slice %38 {offsets = [32, 0], sizes = [256, 384], strides = [1, 1]} : vector<288x384xbf16> to vector<256x384xbf16>
    %c2 = arith.constant 2 : index
    %c0_22 = arith.constant 0 : index
    %c0_23 = arith.constant 0 : index
    %49 = vector.load %arg7[%c2, %c0_22, %c0_23] : memref<3x384x128xbf16, #tpu.memory_space<vmem>>, vector<1x384x128xbf16>
    %50 = vector.shape_cast %49 : vector<1x384x128xbf16> to vector<384x128xbf16>
    %cst_24 = arith.constant dense<0.000000e+00> : vector<256x128xf32>
    %51 = tpu.matmul %48, %50, %cst_24 {dimension_numbers = #tpu.dot_dimension_numbers<[1], [0], [0], [1], [0, 0, 1, 1], [], []>} : vector<256x384xbf16>, vector<384x128xbf16>, vector<256x128xf32> -> vector<256x128xf32>
    %52 = arith.addf %47, %51 : vector<256x128xf32>
    %c0_25 = arith.constant 0 : index
    %c0_26 = arith.constant 0 : index
    %53 = vector.load %arg8[%c0_25, %c0_26] : memref<1x128xf32, #tpu.memory_space<vmem>>, vector<1x128xf32>
    %54 = vector.broadcast %53 : vector<1x128xf32> to vector<256x128xf32>
    %55 = arith.addf %52, %54 : vector<256x128xf32>
    %cst_27 = arith.constant 0.000000e+00 : f32
    %56 = vector.broadcast %cst_27 : f32 to vector<256x128xf32>
    %57 = arith.maximumf %55, %56 : vector<256x128xf32>
    %58 = arith.truncf %57 : vector<256x128xf32> to vector<256x128xbf16>
    %c0_28 = arith.constant 0 : index
    %c0_29 = arith.constant 0 : index
    %59 = vector.load %arg9[%c0_28, %c0_29] : memref<128x128xbf16, #tpu.memory_space<vmem>>, vector<128x128xbf16>
    %cst_30 = arith.constant dense<0.000000e+00> : vector<256x128xf32>
    %60 = tpu.matmul %58, %59, %cst_30 {dimension_numbers = #tpu.dot_dimension_numbers<[1], [0], [0], [1], [0, 0, 1, 1], [], []>} : vector<256x128xbf16>, vector<128x128xbf16>, vector<256x128xf32> -> vector<256x128xf32>
    %c0_31 = arith.constant 0 : index
    %c0_32 = arith.constant 0 : index
    %61 = vector.load %arg10[%c0_31, %c0_32] : memref<1x128xf32, #tpu.memory_space<vmem>>, vector<1x128xf32>
    %62 = vector.broadcast %61 : vector<1x128xf32> to vector<256x128xf32>
    %63 = arith.addf %60, %62 : vector<256x128xf32>
    %64 = vector.extract_strided_slice %5 {offsets = [16, 0], sizes = [256, 128], strides = [1, 1]} : vector<288x128xbf16> to vector<256x128xbf16>
    %c0_33 = arith.constant 0 : index
    %c0_34 = arith.constant 0 : index
    %65 = vector.load %arg11[%c0_33, %c0_34] : memref<128x128xbf16, #tpu.memory_space<vmem>>, vector<128x128xbf16>
    %cst_35 = arith.constant dense<0.000000e+00> : vector<256x128xf32>
    %66 = tpu.matmul %64, %65, %cst_35 {dimension_numbers = #tpu.dot_dimension_numbers<[1], [0], [0], [1], [0, 0, 1, 1], [], []>} : vector<256x128xbf16>, vector<128x128xbf16>, vector<256x128xf32> -> vector<256x128xf32>
    %c0_36 = arith.constant 0 : index
    %c0_37 = arith.constant 0 : index
    %67 = vector.load %arg12[%c0_36, %c0_37] : memref<1x128xf32, #tpu.memory_space<vmem>>, vector<1x128xf32>
    %68 = vector.broadcast %67 : vector<1x128xf32> to vector<256x128xf32>
    %69 = arith.addf %66, %68 : vector<256x128xf32>
    %70 = arith.addf %63, %69 : vector<256x128xf32>
    %cst_38 = arith.constant 0.000000e+00 : f32
    %71 = vector.broadcast %cst_38 : f32 to vector<256x128xf32>
    %72 = arith.maximumf %70, %71 : vector<256x128xf32>
    %73 = vector.shape_cast %72 : vector<256x128xf32> to vector<16x16x128xf32>
    %74 = arith.truncf %73 : vector<16x16x128xf32> to vector<16x16x128xbf16>
    %c0_39 = arith.constant 0 : index
    %c0_40 = arith.constant 0 : index
    %c0_41 = arith.constant 0 : index
    %c0_42 = arith.constant 0 : index
    %75 = vector.load %arg13[%c0_39, %c0_40, %c0_41, %c0_42] : memref<1x16x16x128xbf16, #tpu.memory_space<vmem>>, vector<1x16x16x128xbf16>
    %76 = vector.shape_cast %75 : vector<1x16x16x128xbf16> to vector<16x16x128xbf16>
    %77 = vector.shape_cast %74 : vector<16x16x128xbf16> to vector<1x16x16x128xbf16>
    tpu.vector_store %arg13[%c0_39, %c0_40, %c0_41, %c0_42], %77 {strides = array<i32>} : memref<1x16x16x128xbf16, #tpu.memory_space<vmem>>, vector<1x16x16x128xbf16>,
    return
  }
  func.func @transform_0(%arg0: i32, %arg1: i32) -> (i32, i32, i32, i32) {
    %c0_i32 = arith.constant 0 : i32
    %c0_i32_0 = arith.constant 0 : i32
    %c0_i32_1 = arith.constant 0 : i32
    %c0_i32_2 = arith.constant 0 : i32
    return %arg0, %c0_i32, %c0_i32_0, %c0_i32_1 : i32, i32, i32, i32
  }
  func.func @transform_1(%arg0: i32, %arg1: i32) -> (i32, i32, i32) {
    %c0_i32 = arith.constant 0 : i32
    %c0_i32_0 = arith.constant 0 : i32
    %c0_i32_1 = arith.constant 0 : i32
    return %arg1, %c0_i32, %c0_i32_0 : i32, i32, i32
  }
  func.func @transform_2(%arg0: i32, %arg1: i32) -> (i32, i32) {
    %c0_i32 = arith.constant 0 : i32
    %c0_i32_0 = arith.constant 0 : i32
    %c0_i32_1 = arith.constant 0 : i32
    return %c0_i32, %c0_i32_0 : i32, i32
  }
  func.func @transform_3(%arg0: i32, %arg1: i32) -> (i32, i32) {
    %c0_i32 = arith.constant 0 : i32
    %c0_i32_0 = arith.constant 0 : i32
    %c0_i32_1 = arith.constant 0 : i32
    return %c0_i32, %c0_i32_0 : i32, i32
  }
  func.func @transform_4(%arg0: i32, %arg1: i32) -> (i32, i32) {
    %c0_i32 = arith.constant 0 : i32
    %c0_i32_0 = arith.constant 0 : i32
    %c0_i32_1 = arith.constant 0 : i32
    return %c0_i32, %c0_i32_0 : i32, i32
  }
  func.func @transform_5(%arg0: i32, %arg1: i32) -> (i32, i32, i32) {
    %c0_i32 = arith.constant 0 : i32
    %c0_i32_0 = arith.constant 0 : i32
    %c0_i32_1 = arith.constant 0 : i32
    %c0_i32_2 = arith.constant 0 : i32
    return %c0_i32, %c0_i32_0, %c0_i32_1 : i32, i32, i32
  }
  func.func @transform_6(%arg0: i32, %arg1: i32) -> (i32, i32) {
    %c0_i32 = arith.constant 0 : i32
    %c0_i32_0 = arith.constant 0 : i32
    %c0_i32_1 = arith.constant 0 : i32
    return %c0_i32, %c0_i32_0 : i32, i32
  }
  func.func @transform_7(%arg0: i32, %arg1: i32) -> (i32, i32) {
    %c0_i32 = arith.constant 0 : i32
    %c0_i32_0 = arith.constant 0 : i32
    %c0_i32_1 = arith.constant 0 : i32
    return %c0_i32, %c0_i32_0 : i32, i32
  }
  func.func @transform_8(%arg0: i32, %arg1: i32) -> (i32, i32) {
    %c0_i32 = arith.constant 0 : i32
    %c0_i32_0 = arith.constant 0 : i32
    %c0_i32_1 = arith.constant 0 : i32
    return %c0_i32, %c0_i32_0 : i32, i32
  }
  func.func @transform_9(%arg0: i32, %arg1: i32) -> (i32, i32) {
    %c0_i32 = arith.constant 0 : i32
    %c0_i32_0 = arith.constant 0 : i32
    %c0_i32_1 = arith.constant 0 : i32
    return %c0_i32, %c0_i32_0 : i32, i32
  }
  func.func @transform_10(%arg0: i32, %arg1: i32) -> (i32, i32) {
    %c0_i32 = arith.constant 0 : i32
    %c0_i32_0 = arith.constant 0 : i32
    %c0_i32_1 = arith.constant 0 : i32
    return %c0_i32, %c0_i32_0 : i32, i32
  }
  func.func @transform_11(%arg0: i32, %arg1: i32) -> (i32, i32, i32, i32) {
    %c0_i32 = arith.constant 0 : i32
    %c0_i32_0 = arith.constant 0 : i32
    %c0_i32_1 = arith.constant 0 : i32
    return %arg0, %arg1, %c0_i32, %c0_i32_0 : i32, i32, i32, i32
  }
}

</mosaic_0001>

<llo_original>
// kernel: tpu_custom_call.1
$region0: #{tpu_custom_call.1}
  #allocation0 [shape = 'u32[]', space=smem, size = 0x4, offset = 0x4, fixed_abs, tag = 'smem constant byte address 0x4 - core index']
  #allocation1 [shape = 'u32[144,128]{1,0:T(1,128)}', space=vmem, size = 0x12000, scoped, tag = 'internal scratch']
  %s0 = inlined_call_operand.hbm [shape: bf16[2,18,16,128], index: 0, kind: input, shape index: {}]
  %s1 = inlined_call_operand.vmem [shape: f32[1,288,1], index: 1, kind: input, shape index: {}]
  %s2 = inlined_call_operand.vmem [shape: s32[288,1], index: 2, kind: input, shape index: {}]
  %s3 = inlined_call_operand.hbm [shape: bf16[128,128], index: 3, kind: input, shape index: {}]
  %s4 = inlined_call_operand.vmem [shape: f32[1,128], index: 4, kind: input, shape index: {}]
  %s5 = inlined_call_operand.vmem [shape: bf16[3,384,128], index: 5, kind: input, shape index: {}]
  %s6 = inlined_call_operand.vmem [shape: f32[1,128], index: 6, kind: input, shape index: {}]
  %s7 = inlined_call_operand.hbm [shape: bf16[128,128], index: 7, kind: input, shape index: {}]
  %s8 = inlined_call_operand.vmem [shape: f32[1,128], index: 8, kind: input, shape index: {}]
  %s9 = inlined_call_operand.hbm [shape: bf16[128,128], index: 9, kind: input, shape index: {}]
  %s10 = inlined_call_operand.vmem [shape: f32[1,128], index: 10, kind: input, shape index: {}]
  %s11 = inlined_call_operand.hbm [shape: bf16[2,16,16,128], index: 11, kind: output, shape index: {}]
  %s12 = sld [smem:[#allocation0]]
  $region93: #{tpu_custom_call.1} parent=0
    _
  %s14 = ssub.s32 1, %s12
  %s15 = scalar_select 0, %s14, %s12
  $region1: #{tpu_custom_call.1} parent=0
    #allocation2 [shape = 'u8[147456]{0}', space=vmem, size = 0x24000, scoped, tag = 'input window, operand 0']
    #allocation3 [shape = 's32[2]{0}', space=sflag, size = 0x8, scoped, tag = 'scoped memory for tpu_custom_call.1']
    #allocation4 [shape = 's32[2]{0}', space=sflag, size = 0x8, scoped, tag = 'scoped memory for tpu_custom_call.1']
    #allocation5 [shape = 'u8[32768]{0}', space=vmem, size = 0x8000, scoped, tag = 'input window, operand 3, single buffered']
    #allocation6 [shape = 's32[1]{0}', space=sflag, size = 0x4, scoped, tag = 'scoped memory for tpu_custom_call.1']
    #allocation7 [shape = 'u8[32768]{0}', space=vmem, size = 0x8000, scoped, tag = 'input window, operand 7, single buffered']
    #allocation8 [shape = 'u8[32768]{0}', space=vmem, size = 0x8000, scoped, tag = 'input window, operand 9, single buffered']
    #allocation9 [shape = 's32[1]{0}', space=sflag, size = 0x4, scoped, tag = 'scoped memory for tpu_custom_call.1']
    #allocation10 [shape = 'u8[131072]{0}', space=vmem, size = 0x20000, scoped, tag = 'output window, operand 0']
    %16 = vsyncpa [#allocation3], 0
    %s17 = scalar_lea.sflag [#allocation3], 1
    %18 = vsyncpa %s17, 0
    %19 = vsyncpa [#allocation6], 0
    %20 = vsyncpa [#allocation9], 0
    %21 = vsyncpa [#allocation4], 0
    %s22 = scalar_lea.sflag [#allocation4], 1
    %23 = vsyncpa %s22, 0
    loop: start=0, step=1, limit=4
    $region2: #{tpu_custom_call.1} parent=1 // loop_pre_header
      _
    $region3: #{tpu_custom_call.1} parent=1 // loop_header
      %s25 = sphi 0, %s29
      %p26 = scmp.ge.s32.totalorder %s25, 4
      %s32 = sphi 0, %s44
      %s33 = sphi 0, %s40
      %s34 = sphi 0, %s32
      %s35 = sphi 0, %s33
      %s36 = sphi 0, %s34
      %s37 = sphi 0, %s35
      %s47 = sphi 0, %s49
      %s50 = sphi 0, %s47
      %s51 = sphi 0, %s50
      %s67 = sphi 0, %s51
      %s73 = sphi 0, %s75
      %s76 = sphi 0, %s73
      %s77 = sphi 0, %s76
      %s93 = sphi 0, %s77
      %s97 = sphi 0, %s97
      %s99 = sphi 0, %s97
      %s100 = sphi 0, %s99
      %s114 = sphi 0, %s100
      %s118 = sphi 0, %s118
      %s120 = sphi 0, %s118
      %s121 = sphi 0, %s120
      %s135 = sphi 0, %s121
      %s139 = sphi 0, %s139
      %s141 = sphi 0, %s139
      %s142 = sphi 0, %s141
      %s156 = sphi 0, %s142
      %s160 = sphi 0, %s160
      %s162 = sphi 0, %s160
      %s163 = sphi 0, %s162
      %s177 = sphi 0, %s163
      %s181 = sphi 0, %s181
      %s183 = sphi 0, %s181
      %s184 = sphi 0, %s183
      %s198 = sphi 0, %s184
      %s202 = sphi 0, %s202
      %s204 = sphi 0, %s202
      %s205 = sphi 0, %s204
      %s219 = sphi 0, %s205
      %s223 = sphi 0, %s223
      %s225 = sphi 0, %s223
      %s226 = sphi 0, %s225
      %s240 = sphi 0, %s226
      %s244 = sphi 0, %s244
      %s246 = sphi 0, %s244
      %s247 = sphi 0, %s246
      %s261 = sphi 0, %s247
      %s265 = sphi 0, %s265
      %s267 = sphi 0, %s265
      %s268 = sphi 0, %s267
      %s282 = sphi 0, %s268
      %s290 = sphi 0, %s292
      %s293 = sphi 0, %s290
      %s294 = sphi 0, %s293
      %s310 = sphi 0, %s294
    $region4: #{tpu_custom_call.1} parent=1 // loop_header_branch
      %28 = sbr.rel (%p26) target = $region8
    $region5: #{tpu_custom_call.1} parent=1 // loop_body
      %s30 = ssub.s32 %s25, 1
      %s31 = ssub.s32 %s25, 2
      %s38 = sadd.s32 1, %s33
      %p39 = scmp.ge.s32.totalorder %s38, 1
      %s40 = scalar_select %p39, 0, %s38
      %s41 = sadd.s32 1, %s32
      %s42 = scalar_select %p39, %s41, %s32
      %p43 = scmp.ge.s32.totalorder %s42, 2
      %s44 = scalar_select %p43, 0, %s42
      %s45 = ssub.s32 %s32, %s44
      %p46 = scmp.eq.s32.totalorder %s45, 0
      %s48 = sadd.s32 %s47, 1
      %s49 = scalar_select %p46, %s47, %s48
      %p52 = pneg %p46
      %p53 = scmp.eq.s32.totalorder %s25, 1
      %p54 = por %p52, %p53
      %p55 = scmp.ne.s32.totalorder %s47, %s50
      %p56 = scmp.eq.s32.totalorder %s25, 0
      %p57 = por %p55, %p56
      %p58 = scmp.ne.s32.totalorder %s47, %s50
      %p59 = scmp.eq.s32.totalorder %s30, 1
      %p60 = por %p58, %p59
      %p61 = scmp.ne.s32.totalorder %s50, %s51
      %p62 = scmp.eq.s32.totalorder %s30, 0
      %p63 = por %p61, %p62
      %p64 = scmp.ne.s32.totalorder %s50, %s51
      %p65 = scmp.eq.s32.totalorder %s31, 1
      %p66 = por %p64, %p65
      %p68 = scmp.ne.s32.totalorder %s51, %s67
      %p69 = scmp.eq.s32.totalorder %s31, 0
      %p70 = por %p68, %p69
      %s71 = ssub.s32 %s33, %s40
      %p72 = scmp.eq.s32.totalorder %s71, 0
      %s74 = sadd.s32 %s73, 1
      %s75 = scalar_select %p72, %s73, %s74
      %p78 = pneg %p72
      %p79 = scmp.eq.s32.totalorder %s25, 1
      %p80 = por %p78, %p79
      %p81 = scmp.ne.s32.totalorder %s73, %s76
      %p82 = scmp.eq.s32.totalorder %s25, 0
      %p83 = por %p81, %p82
      %p84 = scmp.ne.s32.totalorder %s73, %s76
      %p85 = scmp.eq.s32.totalorder %s30, 1
      %p86 = por %p84, %p85
      %p87 = scmp.ne.s32.totalorder %s76, %s77
      %p88 = scmp.eq.s32.totalorder %s30, 0
      %p89 = por %p87, %p88
      %p90 = scmp.ne.s32.totalorder %s76, %s77
      %p91 = scmp.eq.s32.totalorder %s31, 1
      %p92 = por %p90, %p91
      %p94 = scmp.ne.s32.totalorder %s77, %s93
      %p95 = scmp.eq.s32.totalorder %s31, 0
      %p96 = por %p94, %p95
      %s98 = sadd.s32 %s97, 1
      %p101 = scmp.eq.s32.totalorder %s25, 1
      %p102 = scmp.ne.s32.totalorder %s97, %s99
      %p103 = scmp.eq.s32.totalorder %s25, 0
      %p104 = por %p102, %p103
      %p105 = scmp.ne.s32.totalorder %s97, %s99
      %p106 = scmp.eq.s32.totalorder %s30, 1
      %p107 = por %p105, %p106
      %p108 = scmp.ne.s32.totalorder %s99, %s100
      %p109 = scmp.eq.s32.totalorder %s30, 0
      %p110 = por %p108, %p109
      %p111 = scmp.ne.s32.totalorder %s99, %s100
      %p112 = scmp.eq.s32.totalorder %s31, 1
      %p113 = por %p111, %p112
      %p115 = scmp.ne.s32.totalorder %s100, %s114
      %p116 = scmp.eq.s32.totalorder %s31, 0
      %p117 = por %p115, %p116
      %s119 = sadd.s32 %s118, 1
      %p122 = scmp.eq.s32.totalorder %s25, 1
      %p123 = scmp.ne.s32.totalorder %s118, %s120
      %p124 = scmp.eq.s32.totalorder %s25, 0
      %p125 = por %p123, %p124
      %p126 = scmp.ne.s32.totalorder %s118, %s120
      %p127 = scmp.eq.s32.totalorder %s30, 1
      %p128 = por %p126, %p127
      %p129 = scmp.ne.s32.totalorder %s120, %s121
      %p130 = scmp.eq.s32.totalorder %s30, 0
      %p131 = por %p129, %p130
      %p132 = scmp.ne.s32.totalorder %s120, %s121
      %p133 = scmp.eq.s32.totalorder %s31, 1
      %p134 = por %p132, %p133
      %p136 = scmp.ne.s32.totalorder %s121, %s135
      %p137 = scmp.eq.s32.totalorder %s31, 0
      %p138 = por %p136, %p137
      %s140 = sadd.s32 %s139, 1
      %p143 = scmp.eq.s32.totalorder %s25, 1
      %p144 = scmp.ne.s32.totalorder %s139, %s141
      %p145 = scmp.eq.s32.totalorder %s25, 0
      %p146 = por %p144, %p145
      %p147 = scmp.ne.s32.totalorder %s139, %s141
      %p148 = scmp.eq.s32.totalorder %s30, 1
      %p149 = por %p147, %p148
      %p150 = scmp.ne.s32.totalorder %s141, %s142
      %p151 = scmp.eq.s32.totalorder %s30, 0
      %p152 = por %p150, %p151
      %p153 = scmp.ne.s32.totalorder %s141, %s142
      %p154 = scmp.eq.s32.totalorder %s31, 1
      %p155 = por %p153, %p154
      %p157 = scmp.ne.s32.totalorder %s142, %s156
      %p158 = scmp.eq.s32.totalorder %s31, 0
      %p159 = por %p157, %p158
      %s161 = sadd.s32 %s160, 1
      %p164 = scmp.eq.s32.totalorder %s25, 1
      %p165 = scmp.ne.s32.totalorder %s160, %s162
      %p166 = scmp.eq.s32.totalorder %s25, 0
      %p167 = por %p165, %p166
      %p168 = scmp.ne.s32.totalorder %s160, %s162
      %p169 = scmp.eq.s32.totalorder %s30, 1
      %p170 = por %p168, %p169
      %p171 = scmp.ne.s32.totalorder %s162, %s163
      %p172 = scmp.eq.s32.totalorder %s30, 0
      %p173 = por %p171, %p172
      %p174 = scmp.ne.s32.totalorder %s162, %s163
      %p175 = scmp.eq.s32.totalorder %s31, 1
      %p176 = por %p174, %p175
      %p178 = scmp.ne.s32.totalorder %s163, %s177
      %p179 = scmp.eq.s32.totalorder %s31, 0
      %p180 = por %p178, %p179
      %s182 = sadd.s32 %s181, 1
      %p185 = scmp.eq.s32.totalorder %s25, 1
      %p186 = scmp.ne.s32.totalorder %s181, %s183
      %p187 = scmp.eq.s32.totalorder %s25, 0
      %p188 = por %p186, %p187
      %p189 = scmp.ne.s32.totalorder %s181, %s183
      %p190 = scmp.eq.s32.totalorder %s30, 1
      %p191 = por %p189, %p190
      %p192 = scmp.ne.s32.totalorder %s183, %s184
      %p193 = scmp.eq.s32.totalorder %s30, 0
      %p194 = por %p192, %p193
      %p195 = scmp.ne.s32.totalorder %s183, %s184
      %p196 = scmp.eq.s32.totalorder %s31, 1
      %p197 = por %p195, %p196
      %p199 = scmp.ne.s32.totalorder %s184, %s198
      %p200 = scmp.eq.s32.totalorder %s31, 0
      %p201 = por %p199, %p200
      %s203 = sadd.s32 %s202, 1
      %p206 = scmp.eq.s32.totalorder %s25, 1
      %p207 = scmp.ne.s32.totalorder %s202, %s204
      %p208 = scmp.eq.s32.totalorder %s25, 0
      %p209 = por %p207, %p208
      %p210 = scmp.ne.s32.totalorder %s202, %s204
      %p211 = scmp.eq.s32.totalorder %s30, 1
      %p212 = por %p210, %p211
      %p213 = scmp.ne.s32.totalorder %s204, %s205
      %p214 = scmp.eq.s32.totalorder %s30, 0
      %p215 = por %p213, %p214
      %p216 = scmp.ne.s32.totalorder %s204, %s205
      %p217 = scmp.eq.s32.totalorder %s31, 1
      %p218 = por %p216, %p217
      %p220 = scmp.ne.s32.totalorder %s205, %s219
      %p221 = scmp.eq.s32.totalorder %s31, 0
      %p222 = por %p220, %p221
      %s224 = sadd.s32 %s223, 1
      %p227 = scmp.eq.s32.totalorder %s25, 1
      %p228 = scmp.ne.s32.totalorder %s223, %s225
      %p229 = scmp.eq.s32.totalorder %s25, 0
      %p230 = por %p228, %p229
      %p231 = scmp.ne.s32.totalorder %s223, %s225
      %p232 = scmp.eq.s32.totalorder %s30, 1
      %p233 = por %p231, %p232
      %p234 = scmp.ne.s32.totalorder %s225, %s226
      %p235 = scmp.eq.s32.totalorder %s30, 0
      %p236 = por %p234, %p235
      %p237 = scmp.ne.s32.totalorder %s225, %s226
      %p238 = scmp.eq.s32.totalorder %s31, 1
      %p239 = por %p237, %p238
      %p241 = scmp.ne.s32.totalorder %s226, %s240
      %p242 = scmp.eq.s32.totalorder %s31, 0
      %p243 = por %p241, %p242
      %s245 = sadd.s32 %s244, 1
      %p248 = scmp.eq.s32.totalorder %s25, 1
      %p249 = scmp.ne.s32.totalorder %s244, %s246
      %p250 = scmp.eq.s32.totalorder %s25, 0
      %p251 = por %p249, %p250
      %p252 = scmp.ne.s32.totalorder %s244, %s246
      %p253 = scmp.eq.s32.totalorder %s30, 1
      %p254 = por %p252, %p253
      %p255 = scmp.ne.s32.totalorder %s246, %s247
      %p256 = scmp.eq.s32.totalorder %s30, 0
      %p257 = por %p255, %p256
      %p258 = scmp.ne.s32.totalorder %s246, %s247
      %p259 = scmp.eq.s32.totalorder %s31, 1
      %p260 = por %p258, %p259
      %p262 = scmp.ne.s32.totalorder %s247, %s261
      %p263 = scmp.eq.s32.totalorder %s31, 0
      %p264 = por %p262, %p263
      %s266 = sadd.s32 %s265, 1
      %p269 = scmp.eq.s32.totalorder %s25, 1
      %p270 = scmp.ne.s32.totalorder %s265, %s267
      %p271 = scmp.eq.s32.totalorder %s25, 0
      %p272 = por %p270, %p271
      %p273 = scmp.ne.s32.totalorder %s265, %s267
      %p274 = scmp.eq.s32.totalorder %s30, 1
      %p275 = por %p273, %p274
      %p276 = scmp.ne.s32.totalorder %s267, %s268
      %p277 = scmp.eq.s32.totalorder %s30, 0
      %p278 = por %p276, %p277
      %p279 = scmp.ne.s32.totalorder %s267, %s268
      %p280 = scmp.eq.s32.totalorder %s31, 1
      %p281 = por %p279, %p280
      %p283 = scmp.ne.s32.totalorder %s268, %s282
      %p284 = scmp.eq.s32.totalorder %s31, 0
      %p285 = por %p283, %p284
      %s286 = ssub.s32 %s32, %s44
      %s287 = ssub.s32 %s33, %s40
      %s288 = sor.u32 %s286, %s287
      %p289 = scmp.eq.s32.totalorder %s288, 0
      %s291 = sadd.s32 %s290, 1
      %s292 = scalar_select %p289, %s290, %s291
      %p295 = pneg %p289
      %p296 = scmp.eq.s32.totalorder %s25, 1
      %p297 = por %p295, %p296
      %p298 = scmp.ne.s32.totalorder %s290, %s293
      %p299 = scmp.eq.s32.totalorder %s25, 0
      %p300 = por %p298, %p299
      %p301 = scmp.ne.s32.totalorder %s290, %s293
      %p302 = scmp.eq.s32.totalorder %s30, 1
      %p303 = por %p301, %p302
      %p304 = scmp.ne.s32.totalorder %s293, %s294
      %p305 = scmp.eq.s32.totalorder %s30, 0
      %p306 = por %p304, %p305
      %p307 = scmp.ne.s32.totalorder %s293, %s294
      %p308 = scmp.eq.s32.totalorder %s31, 1
      %p309 = por %p307, %p308
      %p311 = scmp.ne.s32.totalorder %s294, %s310
      %p312 = scmp.eq.s32.totalorder %s31, 0
      %p313 = por %p311, %p312
      %p314 = scmp.le.s32.totalorder 1, %s25
      %p315 = scmp.lt.s32.totalorder %s25, 3
      %p316 = pnand %p314, %p315
      %p317 = pneg %p316
      // Predicated region
      $region9: #{tpu_custom_call.1} parent=5 // pred_check
        _
      $region10: #{tpu_custom_call.1} parent=5 // pred_check_branch
        %319 = sbr.rel (%p316) target = $region12
      $region11: #{tpu_custom_call.1} parent=5 // pred_region
        %s320 = ssub.s32 %s25, 1
        // Predicated region
        $region13: #{tpu_custom_call.1} parent=11 // pred_check
          %p321 = pneg %p89
        $region14: #{tpu_custom_call.1} parent=11 // pred_check_branch
          %323 = sbr.rel (%p321) target = $region16
        $region15: #{tpu_custom_call.1} parent=11 // pred_region
          %p324 = scmp.lt.s32.totalorder %s35, 0
          %s325 = scalar_select %p324, %s35, 0
          %s326 = smul.addr %s325, 36
          %s327 = smul.addr %s326, 8
          %s328 = scalar_lea.vmem %s1, %s327
        $region16: #{tpu_custom_call.1} parent=11 // pred_fallthru
          _
        // Predicated region
        $region17: #{tpu_custom_call.1} parent=11 // pred_check
          %p329 = pneg %p110
        $region18: #{tpu_custom_call.1} parent=11 // pred_check_branch
          %331 = sbr.rel (%p329) target = $region20
        $region19: #{tpu_custom_call.1} parent=11 // pred_region
          _
        $region20: #{tpu_custom_call.1} parent=11 // pred_fallthru
          _
        // Predicated region
        $region21: #{tpu_custom_call.1} parent=11 // pred_check
          %p332 = pneg %p131
        $region22: #{tpu_custom_call.1} parent=11 // pred_check_branch
          %334 = sbr.rel (%p332) target = $region24
        $region23: #{tpu_custom_call.1} parent=11 // pred_region
          %s336 = ssub.s32 1024, 1024
          %337 = vsyncadd [#allocation6], %s336
          %s338 = sshll.u32 [#allocation5], 4
          %s339 = int_to_ptr.vmem [resolvable:$true] %s338
          %344 = dma.hbm_to_vmem [thread:$0]  %s3, 1024, %s339, [#allocation6], 64, 64, 4
        $region24: #{tpu_custom_call.1} parent=11 // pred_fallthru
          _
        // Predicated region
        $region25: #{tpu_custom_call.1} parent=11 // pred_check
          %p345 = pneg %p152
        $region26: #{tpu_custom_call.1} parent=11 // pred_check_branch
          %347 = sbr.rel (%p345) target = $region28
        $region27: #{tpu_custom_call.1} parent=11 // pred_region
          _
        $region28: #{tpu_custom_call.1} parent=11 // pred_fallthru
          _
        // Predicated region
        $region29: #{tpu_custom_call.1} parent=11 // pred_check
          %p348 = pneg %p173
        $region30: #{tpu_custom_call.1} parent=11 // pred_check_branch
          %350 = sbr.rel (%p348) target = $region32
        $region31: #{tpu_custom_call.1} parent=11 // pred_region
          _
        $region32: #{tpu_custom_call.1} parent=11 // pred_fallthru
          _
        // Predicated region
        $region33: #{tpu_custom_call.1} parent=11 // pred_check
          %p351 = pneg %p194
        $region34: #{tpu_custom_call.1} parent=11 // pred_check_branch
          %353 = sbr.rel (%p351) target = $region36
        $region35: #{tpu_custom_call.1} parent=11 // pred_region
          _
        $region36: #{tpu_custom_call.1} parent=11 // pred_fallthru
          _
        // Predicated region
        $region37: #{tpu_custom_call.1} parent=11 // pred_check
          %p354 = pneg %p215
        $region38: #{tpu_custom_call.1} parent=11 // pred_check_branch
          %356 = sbr.rel (%p354) target = $region40
        $region39: #{tpu_custom_call.1} parent=11 // pred_region
          %s358 = ssub.s32 1024, 1024
          %359 = vsyncadd [#allocation6], %s358
          %s360 = sshll.u32 [#allocation7], 4
          %s361 = int_to_ptr.vmem [resolvable:$true] %s360
          %366 = dma.hbm_to_vmem [thread:$0]  %s7, 1024, %s361, [#allocation6], 64, 64, 4
        $region40: #{tpu_custom_call.1} parent=11 // pred_fallthru
          _
        // Predicated region
        $region41: #{tpu_custom_call.1} parent=11 // pred_check
          %p367 = pneg %p236
        $region42: #{tpu_custom_call.1} parent=11 // pred_check_branch
          %369 = sbr.rel (%p367) target = $region44
        $region43: #{tpu_custom_call.1} parent=11 // pred_region
          _
        $region44: #{tpu_custom_call.1} parent=11 // pred_fallthru
          _
        // Predicated region
        $region45: #{tpu_custom_call.1} parent=11 // pred_check
          %p370 = pneg %p257
        $region46: #{tpu_custom_call.1} parent=11 // pred_check_branch
          %372 = sbr.rel (%p370) target = $region48
        $region47: #{tpu_custom_call.1} parent=11 // pred_region
          %s374 = ssub.s32 1024, 1024
          %375 = vsyncadd [#allocation9], %s374
          %s376 = sshll.u32 [#allocation8], 4
          %s377 = int_to_ptr.vmem [resolvable:$true] %s376
          %382 = dma.hbm_to_vmem [thread:$0]  %s9, 1024, %s377, [#allocation9], 64, 64, 4
        $region48: #{tpu_custom_call.1} parent=11 // pred_fallthru
          _
        // Predicated region
        $region49: #{tpu_custom_call.1} parent=11 // pred_check
          %p383 = pneg %p278
        $region50: #{tpu_custom_call.1} parent=11 // pred_check_branch
          %385 = sbr.rel (%p383) target = $region52
        $region51: #{tpu_custom_call.1} parent=11 // pred_region
          _
        $region52: #{tpu_custom_call.1} parent=11 // pred_fallthru
          _
      $region12: #{tpu_custom_call.1} parent=5 // pred_fallthru
        _
      %p386 = scmp.lt.s32.totalorder %s25, 2
      // Predicated region
      $region53: #{tpu_custom_call.1} parent=5 // pred_check
        %p387 = pneg %p386
      $region54: #{tpu_custom_call.1} parent=5 // pred_check_branch
        %389 = sbr.rel (%p387) target = $region56
      $region55: #{tpu_custom_call.1} parent=5 // pred_region
        // Predicated region
        $region57: #{tpu_custom_call.1} parent=55 // pred_check
          %p390 = pneg %p57
        $region58: #{tpu_custom_call.1} parent=55 // pred_check_branch
          %392 = sbr.rel (%p390) target = $region60
        $region59: #{tpu_custom_call.1} parent=55 // pred_region
          %s393 = sand.u32 %s47, 1
          %s394 = scalar_lea.sflag [#allocation3], %s393
          %s395 = sand.u32 %s47, 1
          %s396 = smul.addr %s395, 144
          %s397 = scalar_lea.vmem [#allocation2], %s396
          %s399 = ssub.s32 2304, 2304
          %400 = vsyncadd %s394, %s399
          %s401 = smul.addr %s32, 36
          %s402 = smul.addr %s401, 64
          %s403 = scalar_lea.hbm %s0, %s402
          %s404 = sshll.u32 %s397, 4
          %s405 = int_to_ptr.vmem [resolvable:$true] %s404
          %410 = dma.hbm_to_vmem [thread:$0]  %s403, 2304, %s405, %s394, 64, 64, 4
        $region60: #{tpu_custom_call.1} parent=55 // pred_fallthru
          _
      $region56: #{tpu_custom_call.1} parent=5 // pred_fallthru
        _
      %p411 = scmp.le.s32.totalorder 1, %s25
      %p412 = scmp.lt.s32.totalorder %s25, 3
      %p413 = pnand %p411, %p412
      %p414 = pneg %p413
      // Predicated region
      $region61: #{tpu_custom_call.1} parent=5 // pred_check
        _
      $region62: #{tpu_custom_call.1} parent=5 // pred_check_branch
        %416 = sbr.rel (%p413) target = $region64
      $region63: #{tpu_custom_call.1} parent=5 // pred_region
        %s417 = ssub.s32 %s25, 1
        %s418 = sand.u32 %s50, 1
        %s419 = scalar_lea.sflag [#allocation3], %s418
        %s420 = sand.u32 %s50, 1
        %s421 = smul.addr %s420, 144
        %s422 = scalar_lea.vmem [#allocation2], %s421
        // Predicated region
        $region65: #{tpu_custom_call.1} parent=63 // pred_check
          %p423 = pneg %p63
        $region66: #{tpu_custom_call.1} parent=63 // pred_check_branch
          %425 = sbr.rel (%p423) target = $region68
        $region67: #{tpu_custom_call.1} parent=63 // pred_region
          %426 = dma.done %s419, 2304
        $region68: #{tpu_custom_call.1} parent=63 // pred_fallthru
          _
        // Predicated region
        $region69: #{tpu_custom_call.1} parent=63 // pred_check
          %p427 = pneg %p131
        $region70: #{tpu_custom_call.1} parent=63 // pred_check_branch
          %429 = sbr.rel (%p427) target = $region72
        $region71: #{tpu_custom_call.1} parent=63 // pred_region
          %430 = dma.done [#allocation6], 1024
        $region72: #{tpu_custom_call.1} parent=63 // pred_fallthru
          _
        // Predicated region
        $region73: #{tpu_custom_call.1} parent=63 // pred_check
          %p431 = pneg %p215
        $region74: #{tpu_custom_call.1} parent=63 // pred_check_branch
          %433 = sbr.rel (%p431) target = $region76
        $region75: #{tpu_custom_call.1} parent=63 // pred_region
          %434 = dma.done [#allocation6], 1024
        $region76: #{tpu_custom_call.1} parent=63 // pred_fallthru
          _
        // Predicated region
        $region77: #{tpu_custom_call.1} parent=63 // pred_check
          %p435 = pneg %p257
        $region78: #{tpu_custom_call.1} parent=63 // pred_check_branch
          %437 = sbr.rel (%p435) target = $region80
        $region79: #{tpu_custom_call.1} parent=63 // pred_region
          %438 = dma.done [#allocation9], 1024
        $region80: #{tpu_custom_call.1} parent=63 // pred_fallthru
          _
        %s439 = sand.u32 %s50, 1
        %s440 = scalar_lea.sflag [#allocation3], %s439
        %s441 = sand.u32 %s50, 1
        %s442 = smul.addr %s441, 144
        %s443 = scalar_lea.vmem [#allocation2], %s442
        %p444 = pneg %p63
        %p445 = pneg %p60
        %p446 = scmp.lt.s32.totalorder %s35, 0
        %s447 = scalar_select %p446, %s35, 0
        %s448 = smul.addr %s447, 36
        %s449 = smul.addr %s448, 8
        %s450 = scalar_lea.vmem %s1, %s449
        %p451 = pneg %p89
        %p452 = pneg %p86
        %p453 = pneg %p110
        %p454 = pneg %p107
        %p455 = pneg %p131
        %p456 = pneg %p128
        %p457 = pneg %p152
        %p458 = pneg %p149
        %p459 = pneg %p173
        %p460 = pneg %p170
        %p461 = pneg %p194
        %p462 = pneg %p191
        %p463 = pneg %p215
        %p464 = pneg %p212
        %p465 = pneg %p236
        %p466 = pneg %p233
        %p467 = pneg %p257
        %p468 = pneg %p254
        %p469 = pneg %p278
        %p470 = pneg %p275
        %p471 = pneg %p306
        %p472 = pneg %p303
        %s473 = sand.u32 %s293, 1
        %s474 = scalar_lea.sflag [#allocation4], %s473
        %s475 = sand.u32 %s293, 1
        %s476 = smul.addr %s475, 128
        %s477 = scalar_lea.vmem [#allocation10], %s476
        %p478 = scmp.lt.s32.totalorder %s35, 0
        %s479 = scalar_select %p478, %s35, 0
        %s480 = smul.addr %s479, 36
        %s481 = smul.addr %s480, 8
        %s482 = scalar_lea.vmem %s1, %s481
        %s483 = smul.u32 16, %s35
        %s487 = smul.u32 %s35, 16
        %s488 = smul.u32 %s487, 2
        %s489 = smul.addr %s488, 4
        %s490 = scalar_lea.vmem %s422, %s489 [#allocation2]
        %v491 = vld [vmem:[%s490] sm:$0xf]
        %v492 = vld [vmem:[%s490 + $0x4] sm:$0xf]
        %v493 = vld [vmem:[%s490 + $0x8] sm:$0xf]
        %v494 = vld [vmem:[%s490 + $0xc] sm:$0xf]
        %v495 = vld [vmem:[%s490 + $0x10] sm:$0xf]
        %v496 = vld [vmem:[%s490 + $0x14] sm:$0xf]
        %v497 = vld [vmem:[%s490 + $0x18] sm:$0xf]
        %v498 = vld [vmem:[%s490 + $0x1c] sm:$0xf]
        %v499 = vld [vmem:[%s490 + $0x20] sm:$0xf]
        %v500 = vld [vmem:[%s490 + $0x24] sm:$0xf]
        %v501 = vld [vmem:[%s490 + $0x28] sm:$0xf]
        %v502 = vld [vmem:[%s490 + $0x2c] sm:$0xf]
        %v503 = vld [vmem:[%s490 + $0x30] sm:$0xf]
        %v504 = vld [vmem:[%s490 + $0x34] sm:$0xf]
        %v505 = vld [vmem:[%s490 + $0x38] sm:$0xf]
        %v506 = vld [vmem:[%s490 + $0x3c] sm:$0xf]
        %v507 = vld [vmem:[%s490 + $0x40] sm:$0xf]
        %v508 = vld [vmem:[%s490 + $0x44] sm:$0xf]
        %v509 = vld [vmem:[%s490 + $0x48] sm:$0xf]
        %v510 = vld [vmem:[%s490 + $0x4c] sm:$0xf]
        %v511 = vld [vmem:[%s490 + $0x50] sm:$0xf]
        %v512 = vld [vmem:[%s490 + $0x54] sm:$0xf]
        %v513 = vld [vmem:[%s490 + $0x58] sm:$0xf]
        %v514 = vld [vmem:[%s490 + $0x5c] sm:$0xf]
        %v515 = vld [vmem:[%s490 + $0x60] sm:$0xf]
        %v516 = vld [vmem:[%s490 + $0x64] sm:$0xf]
        %v517 = vld [vmem:[%s490 + $0x68] sm:$0xf]
        %v518 = vld [vmem:[%s490 + $0x6c] sm:$0xf]
        %v519 = vld [vmem:[%s490 + $0x70] sm:$0xf]
        %v520 = vld [vmem:[%s490 + $0x74] sm:$0xf]
        %v521 = vld [vmem:[%s490 + $0x78] sm:$0xf]
        %v522 = vld [vmem:[%s490 + $0x7c] sm:$0xf]
        %v523 = vld [vmem:[%s490 + $0x80] sm:$0xf]
        %v524 = vld [vmem:[%s490 + $0x84] sm:$0xf]
        %v525 = vld [vmem:[%s490 + $0x88] sm:$0xf]
        %v526 = vld [vmem:[%s490 + $0x8c] sm:$0xf]
        %v527 = vld [vmem:[#allocation5] sm:$0xf]
        %v528 = vld [vmem:[#allocation5 + $0x4] sm:$0xf]
        %v529 = vld [vmem:[#allocation5 + $0x8] sm:$0xf]
        %v530 = vld [vmem:[#allocation5 + $0xc] sm:$0xf]
        %v531 = vld [vmem:[#allocation5 + $0x10] sm:$0xf]
        %v532 = vld [vmem:[#allocation5 + $0x14] sm:$0xf]
        %v533 = vld [vmem:[#allocation5 + $0x18] sm:$0xf]
        %v534 = vld [vmem:[#allocation5 + $0x1c] sm:$0xf]
        %v535 = vld [vmem:[#allocation5 + $0x20] sm:$0xf]
        %v536 = vld [vmem:[#allocation5 + $0x24] sm:$0xf]
        %v537 = vld [vmem:[#allocation5 + $0x28] sm:$0xf]
        %v538 = vld [vmem:[#allocation5 + $0x2c] sm:$0xf]
        %v539 = vld [vmem:[#allocation5 + $0x30] sm:$0xf]
        %v540 = vld [vmem:[#allocation5 + $0x34] sm:$0xf]
        %v541 = vld [vmem:[#allocation5 + $0x38] sm:$0xf]
        %v542 = vld [vmem:[#allocation5 + $0x3c] sm:$0xf]
        %v543 = vld [vmem:[%s4] sm:$0x1]
        %v545 = vlaneseq
        %v546 = vshrl.u32 %v545, 7
        %v547 = vsub.s32 0, %v546
        %v548 = vrot.slane %v543, %v547
        %v586 = vunpack.c.l.b16 %v491
        %v587 = vunpack.c.l.b16 %v492
        %v588 = vunpack.c.l.b16 %v493
        %v589 = vunpack.c.l.b16 %v494
        %v590 = vunpack.c.l.b16 %v495
        %v591 = vunpack.c.l.b16 %v496
        %v592 = vunpack.c.l.b16 %v497
        %v593 = vunpack.c.l.b16 %v498
        %v594 = vunpack.c.l.b16 %v499
        %v595 = vunpack.c.l.b16 %v500
        %v596 = vunpack.c.l.b16 %v501
        %v597 = vunpack.c.l.b16 %v502
        %v598 = vunpack.c.l.b16 %v503
        %v599 = vunpack.c.l.b16 %v504
        %v600 = vunpack.c.l.b16 %v505
        %v601 = vunpack.c.l.b16 %v506
        %v602 = vunpack.c.l.b16 %v507
        %v603 = vunpack.c.l.b16 %v508
        %v604 = vunpack.c.l.b16 %v509
        %v605 = vunpack.c.l.b16 %v510
        %v606 = vunpack.c.l.b16 %v511
        %v607 = vunpack.c.l.b16 %v512
        %v608 = vunpack.c.l.b16 %v513
        %v609 = vunpack.c.l.b16 %v514
        %v610 = vunpack.c.l.b16 %v515
        %v611 = vunpack.c.l.b16 %v516
        %v612 = vunpack.c.l.b16 %v517
        %v613 = vunpack.c.l.b16 %v518
        %v614 = vunpack.c.l.b16 %v519
        %v615 = vunpack.c.l.b16 %v520
        %v616 = vunpack.c.l.b16 %v521
        %v617 = vunpack.c.l.b16 %v522
        %v618 = vunpack.c.l.b16 %v523
        %v619 = vunpack.c.l.b16 %v524
        %v620 = vunpack.c.l.b16 %v525
        %v621 = vunpack.c.l.b16 %v526
        %v622 = vpack.c.b16 %v587, %v586
        %v623 = vpack.c.b16 %v589, %v588
        %v624 = vpack.c.b16 %v591, %v590
        %v625 = vpack.c.b16 %v593, %v592
        %v626 = vpack.c.b16 %v595, %v594
        %v627 = vpack.c.b16 %v597, %v596
        %v628 = vpack.c.b16 %v599, %v598
        %v629 = vpack.c.b16 %v601, %v600
        %v630 = vpack.c.b16 %v603, %v602
        %v631 = vpack.c.b16 %v605, %v604
        %v632 = vpack.c.b16 %v607, %v606
        %v633 = vpack.c.b16 %v609, %v608
        %v634 = vpack.c.b16 %v611, %v610
        %v635 = vpack.c.b16 %v613, %v612
        %v636 = vpack.c.b16 %v615, %v614
        %v637 = vpack.c.b16 %v617, %v616
        %v638 = vpack.c.b16 %v619, %v618
        %v639 = vpack.c.b16 %v621, %v620
        %v674 = vunpack.c.l.b16 %v527
        %v675 = vunpack.c.l.b16 %v528
        %v676 = vunpack.c.l.b16 %v529
        %v677 = vunpack.c.l.b16 %v530
        %v678 = vunpack.c.l.b16 %v531
        %v679 = vunpack.c.l.b16 %v532
        %v680 = vunpack.c.l.b16 %v533
        %v681 = vunpack.c.l.b16 %v534
        %v682 = vunpack.c.l.b16 %v535
        %v683 = vunpack.c.l.b16 %v536
        %v684 = vunpack.c.l.b16 %v537
        %v685 = vunpack.c.l.b16 %v538
        %v686 = vunpack.c.l.b16 %v539
        %v687 = vunpack.c.l.b16 %v540
        %v688 = vunpack.c.l.b16 %v541
        %v689 = vunpack.c.l.b16 %v542
        %v690 = vpack.c.b16 %v675, %v674
        %v691 = vpack.c.b16 %v677, %v676
        %v692 = vpack.c.b16 %v679, %v678
        %v693 = vpack.c.b16 %v681, %v680
        %v694 = vpack.c.b16 %v683, %v682
        %v695 = vpack.c.b16 %v685, %v684
        %v696 = vpack.c.b16 %v687, %v686
        %v697 = vpack.c.b16 %v689, %v688
        %706 = vmatprep.subr.bf16.mxu0 0
        %707 = vmatpush1.bf16.msra.mxu0 %v697
        %708 = vmatprep.subr.bf16.mxu0 0
        %709 = vmatpush1.bf16.msra.mxu0 %v696
        %710 = vmatprep.subr.bf16.mxu0 0
        %711 = vmatpush1.bf16.msra.mxu0 %v695
        %712 = vmatprep.subr.bf16.mxu0 0
        %713 = vmatpush1.bf16.msra.mxu0 %v694
        %714 = vmatprep.subr.bf16.mxu0 0
        %715 = vmatpush1.bf16.msra.mxu0 %v693
        %716 = vmatprep.subr.bf16.mxu0 0
        %717 = vmatpush1.bf16.msra.mxu0 %v692
        %718 = vmatprep.subr.bf16.mxu0 0
        %719 = vmatpush1.bf16.msra.mxu0 %v691
        %720 = vmatprep.subr.bf16.mxu0 0
        %721 = vmatpush1.bf16.msra.mxu0 %v690
        %722 = vmatprep.subr.bf16.mxu0 0
        %723 = vmatpush2.bf16.msra.mxu0 0
        %724 = vmatprep.subr.bf16.mxu0 0
        %725 = vmatpush2.bf16.msra.mxu0 0
        %726 = vmatprep.subr.bf16.mxu0 0
        %727 = vmatpush2.bf16.msra.mxu0 0
        %728 = vmatprep.subr.bf16.mxu0 0
        %729 = vmatpush2.bf16.msra.mxu0 0
        %730 = vmatprep.subr.bf16.mxu0 0
        %731 = vmatpush2.bf16.msra.mxu0 0
        %732 = vmatprep.subr.bf16.mxu0 0
        %733 = vmatpush2.bf16.msra.mxu0 0
        %734 = vmatprep.subr.bf16.mxu0 0
        %735 = vmatpush2.bf16.msra.mxu0 0
        %736 = vmatprep.subr.bf16.mxu0 0
        %737 = vmatpush2.bf16.msra.mxu0 0
        %738 = vmatprep.mubr.bf16.mxu0 0
        %739 = vmatmul.mubr.bf16.gmra.mxu0 %v622
        %v740 = vpop.f32.mrf.mxu0
        %v741 = vadd.f32 %v548, %v740
        %v742 = vpop.f32.mrf.mxu0
        %v743 = vpop.f32.mrf.mxu0
        %v744 = vadd.f32 %v548, %v743
        %v745 = vpop.f32.mrf.mxu0
        %746 = vmatprep.mubr.bf16.mxu0 0
        %747 = vmatmul.mubr.bf16.gmra.mxu0 %v623
        %v748 = vpop.f32.mrf.mxu0
        %v749 = vadd.f32 %v548, %v748
        %v750 = vpop.f32.mrf.mxu0
        %v751 = vpop.f32.mrf.mxu0
        %v752 = vadd.f32 %v548, %v751
        %v753 = vpop.f32.mrf.mxu0
        %754 = vmatprep.mubr.bf16.mxu0 0
        %755 = vmatmul.mubr.bf16.gmra.mxu0 %v624
        %v756 = vpop.f32.mrf.mxu0
        %v757 = vadd.f32 %v548, %v756
        %v758 = vpop.f32.mrf.mxu0
        %v759 = vpop.f32.mrf.mxu0
        %v760 = vadd.f32 %v548, %v759
        %v761 = vpop.f32.mrf.mxu0
        %762 = vmatprep.mubr.bf16.mxu0 0
        %763 = vmatmul.mubr.bf16.gmra.mxu0 %v625
        %v764 = vpop.f32.mrf.mxu0
        %v765 = vadd.f32 %v548, %v764
        %v766 = vpop.f32.mrf.mxu0
        %v767 = vpop.f32.mrf.mxu0
        %v768 = vadd.f32 %v548, %v767
        %v769 = vpop.f32.mrf.mxu0
        %770 = vmatprep.mubr.bf16.mxu0 0
        %771 = vmatmul.mubr.bf16.gmra.mxu0 %v626
        %v772 = vpop.f32.mrf.mxu0
        %v773 = vadd.f32 %v548, %v772
        %v774 = vpop.f32.mrf.mxu0
        %v775 = vpop.f32.mrf.mxu0
        %v776 = vadd.f32 %v548, %v775
        %v777 = vpop.f32.mrf.mxu0
        %778 = vmatprep.mubr.bf16.mxu0 0
        %779 = vmatmul.mubr.bf16.gmra.mxu0 %v627
        %v780 = vpop.f32.mrf.mxu0
        %v781 = vadd.f32 %v548, %v780
        %v782 = vpop.f32.mrf.mxu0
        %v783 = vpop.f32.mrf.mxu0
        %v784 = vadd.f32 %v548, %v783
        %v785 = vpop.f32.mrf.mxu0
        %786 = vmatprep.mubr.bf16.mxu0 0
        %787 = vmatmul.mubr.bf16.gmra.mxu0 %v628
        %v788 = vpop.f32.mrf.mxu0
        %v789 = vadd.f32 %v548, %v788
        %v790 = vpop.f32.mrf.mxu0
        %v791 = vpop.f32.mrf.mxu0
        %v792 = vadd.f32 %v548, %v791
        %v793 = vpop.f32.mrf.mxu0
        %794 = vmatprep.mubr.bf16.mxu0 0
        %795 = vmatmul.mubr.bf16.gmra.mxu0 %v629
        %v796 = vpop.f32.mrf.mxu0
        %v797 = vadd.f32 %v548, %v796
        %v798 = vpop.f32.mrf.mxu0
        %v799 = vpop.f32.mrf.mxu0
        %v800 = vadd.f32 %v548, %v799
        %v801 = vpop.f32.mrf.mxu0
        %802 = vmatprep.mubr.bf16.mxu0 0
        %803 = vmatmul.mubr.bf16.gmra.mxu0 %v630
        %v804 = vpop.f32.mrf.mxu0
        %v805 = vadd.f32 %v548, %v804
        %v806 = vpop.f32.mrf.mxu0
        %v807 = vpop.f32.mrf.mxu0
        %v808 = vadd.f32 %v548, %v807
        %v809 = vpop.f32.mrf.mxu0
        %810 = vmatprep.mubr.bf16.mxu0 0
        %811 = vmatmul.mubr.bf16.gmra.mxu0 %v631
        %v812 = vpop.f32.mrf.mxu0
        %v813 = vadd.f32 %v548, %v812
        %v814 = vpop.f32.mrf.mxu0
        %v815 = vpop.f32.mrf.mxu0
        %v816 = vadd.f32 %v548, %v815
        %v817 = vpop.f32.mrf.mxu0
        %818 = vmatprep.mubr.bf16.mxu0 0
        %819 = vmatmul.mubr.bf16.gmra.mxu0 %v632
        %v820 = vpop.f32.mrf.mxu0
        %v821 = vadd.f32 %v548, %v820
        %v822 = vpop.f32.mrf.mxu0
        %v823 = vpop.f32.mrf.mxu0
        %v824 = vadd.f32 %v548, %v823
        %v825 = vpop.f32.mrf.mxu0
        %826 = vmatprep.mubr.bf16.mxu0 0
        %827 = vmatmul.mubr.bf16.gmra.mxu0 %v633
        %v828 = vpop.f32.mrf.mxu0
        %v829 = vadd.f32 %v548, %v828
        %v830 = vpop.f32.mrf.mxu0
        %v831 = vpop.f32.mrf.mxu0
        %v832 = vadd.f32 %v548, %v831
        %v833 = vpop.f32.mrf.mxu0
        %834 = vmatprep.mubr.bf16.mxu0 0
        %835 = vmatmul.mubr.bf16.gmra.mxu0 %v634
        %v836 = vpop.f32.mrf.mxu0
        %v837 = vadd.f32 %v548, %v836
        %v838 = vpop.f32.mrf.mxu0
        %v839 = vpop.f32.mrf.mxu0
        %v840 = vadd.f32 %v548, %v839
        %v841 = vpop.f32.mrf.mxu0
        %842 = vmatprep.mubr.bf16.mxu0 0
        %843 = vmatmul.mubr.bf16.gmra.mxu0 %v635
        %v844 = vpop.f32.mrf.mxu0
        %v845 = vadd.f32 %v548, %v844
        %v846 = vpop.f32.mrf.mxu0
        %v847 = vpop.f32.mrf.mxu0
        %v848 = vadd.f32 %v548, %v847
        %v849 = vpop.f32.mrf.mxu0
        %850 = vmatprep.mubr.bf16.mxu0 0
        %851 = vmatmul.mubr.bf16.gmra.mxu0 %v636
        %v852 = vpop.f32.mrf.mxu0
        %v853 = vadd.f32 %v548, %v852
        %v854 = vpop.f32.mrf.mxu0
        %v855 = vpop.f32.mrf.mxu0
        %v856 = vadd.f32 %v548, %v855
        %v857 = vpop.f32.mrf.mxu0
        %858 = vmatprep.mubr.bf16.mxu0 0
        %859 = vmatmul.mubr.bf16.gmra.mxu0 %v637
        %v860 = vpop.f32.mrf.mxu0
        %v861 = vadd.f32 %v548, %v860
        %v862 = vpop.f32.mrf.mxu0
        %v863 = vpop.f32.mrf.mxu0
        %v864 = vadd.f32 %v548, %v863
        %v865 = vpop.f32.mrf.mxu0
        %866 = vmatprep.mubr.bf16.mxu0 0
        %867 = vmatmul.mubr.bf16.gmra.mxu0 %v638
        %v868 = vpop.f32.mrf.mxu0
        %v869 = vadd.f32 %v548, %v868
        %v870 = vpop.f32.mrf.mxu0
        %v871 = vpop.f32.mrf.mxu0
        %v872 = vadd.f32 %v548, %v871
        %v873 = vpop.f32.mrf.mxu0
        %874 = vmatprep.mubr.bf16.mxu0 0
        %875 = vmatmul.mubr.bf16.gmra.mxu0 %v639
        %v876 = vpop.f32.mrf.mxu0
        %v877 = vadd.f32 %v548, %v876
        %v878 = vpop.f32.mrf.mxu0
        %v879 = vpop.f32.mrf.mxu0
        %v880 = vadd.f32 %v548, %v879
        %v881 = vpop.f32.mrf.mxu0
        %882 = vdwg.mxu0
        %v883 = vmax.f32 %v741, 0.0
        %v884 = vmax.f32 %v744, 0.0
        %v885 = vmax.f32 %v749, 0.0
        %v886 = vmax.f32 %v752, 0.0
        %v887 = vmax.f32 %v757, 0.0
        %v888 = vmax.f32 %v760, 0.0
        %v889 = vmax.f32 %v765, 0.0
        %v890 = vmax.f32 %v768, 0.0
        %v891 = vmax.f32 %v773, 0.0
        %v892 = vmax.f32 %v776, 0.0
        %v893 = vmax.f32 %v781, 0.0
        %v894 = vmax.f32 %v784, 0.0
        %v895 = vmax.f32 %v789, 0.0
        %v896 = vmax.f32 %v792, 0.0
        %v897 = vmax.f32 %v797, 0.0
        %v898 = vmax.f32 %v800, 0.0
        %v899 = vmax.f32 %v805, 0.0
        %v900 = vmax.f32 %v808, 0.0
        %v901 = vmax.f32 %v813, 0.0
        %v902 = vmax.f32 %v816, 0.0
        %v903 = vmax.f32 %v821, 0.0
        %v904 = vmax.f32 %v824, 0.0
        %v905 = vmax.f32 %v829, 0.0
        %v906 = vmax.f32 %v832, 0.0
        %v907 = vmax.f32 %v837, 0.0
        %v908 = vmax.f32 %v840, 0.0
        %v909 = vmax.f32 %v845, 0.0
        %v910 = vmax.f32 %v848, 0.0
        %v911 = vmax.f32 %v853, 0.0
        %v912 = vmax.f32 %v856, 0.0
        %v913 = vmax.f32 %v861, 0.0
        %v914 = vmax.f32 %v864, 0.0
        %v915 = vmax.f32 %v869, 0.0
        %v916 = vmax.f32 %v872, 0.0
        %v917 = vmax.f32 %v877, 0.0
        %v918 = vmax.f32 %v880, 0.0
        %v919 = vld [vmem:[%s482] sm:$0xff]
        %v920 = vld [vmem:[%s482 + $0x8] sm:$0xff]
        %v921 = vld [vmem:[%s482 + $0x10] sm:$0xff]
        %v922 = vld [vmem:[%s482 + $0x18] sm:$0xff]
        %v923 = vld [vmem:[%s482 + $0x20] sm:$0xff]
        %v924 = vld [vmem:[%s482 + $0x28] sm:$0xff]
        %v925 = vld [vmem:[%s482 + $0x30] sm:$0xff]
        %v926 = vld [vmem:[%s482 + $0x38] sm:$0xff]
        %v927 = vld [vmem:[%s482 + $0x40] sm:$0xff]
        %v928 = vld [vmem:[%s482 + $0x48] sm:$0xff]
        %v929 = vld [vmem:[%s482 + $0x50] sm:$0xff]
        %v930 = vld [vmem:[%s482 + $0x58] sm:$0xff]
        %v931 = vld [vmem:[%s482 + $0x60] sm:$0xff]
        %v932 = vld [vmem:[%s482 + $0x68] sm:$0xff]
        %v933 = vld [vmem:[%s482 + $0x70] sm:$0xff]
        %v934 = vld [vmem:[%s482 + $0x78] sm:$0xff]
        %v935 = vld [vmem:[%s482 + $0x80] sm:$0xff]
        %v936 = vld [vmem:[%s482 + $0x88] sm:$0xff]
        %v937 = vld [vmem:[%s482 + $0x90] sm:$0xff]
        %v938 = vld [vmem:[%s482 + $0x98] sm:$0xff]
        %v939 = vld [vmem:[%s482 + $0xa0] sm:$0xff]
        %v940 = vld [vmem:[%s482 + $0xa8] sm:$0xff]
        %v941 = vld [vmem:[%s482 + $0xb0] sm:$0xff]
        %v942 = vld [vmem:[%s482 + $0xb8] sm:$0xff]
        %v943 = vld [vmem:[%s482 + $0xc0] sm:$0xff]
        %v944 = vld [vmem:[%s482 + $0xc8] sm:$0xff]
        %v945 = vld [vmem:[%s482 + $0xd0] sm:$0xff]
        %v946 = vld [vmem:[%s482 + $0xd8] sm:$0xff]
        %v947 = vld [vmem:[%s482 + $0xe0] sm:$0xff]
        %v948 = vld [vmem:[%s482 + $0xe8] sm:$0xff]
        %v949 = vld [vmem:[%s482 + $0xf0] sm:$0xff]
        %v950 = vld [vmem:[%s482 + $0xf8] sm:$0xff]
        %v951 = vld [vmem:[%s482 + $0x100] sm:$0xff]
        %v952 = vld [vmem:[%s482 + $0x108] sm:$0xff]
        %v953 = vld [vmem:[%s482 + $0x110] sm:$0xff]
        %v954 = vld [vmem:[%s482 + $0x118] sm:$0xff]
        %956 = vset.pattern.permute.xlu0 0
        %957 = vperm.xlu0 %956, %v919
        %v958 = vpop.permute.xlu0 %957
        %961 = vset.pattern.permute.xlu0 0
        %962 = vperm.xlu0 %961, %v920
        %v963 = vpop.permute.xlu0 %962
        %966 = vset.pattern.permute.xlu0 0
        %967 = vperm.xlu0 %966, %v921
        %v968 = vpop.permute.xlu0 %967
        %971 = vset.pattern.permute.xlu0 0
        %972 = vperm.xlu0 %971, %v922
        %v973 = vpop.permute.xlu0 %972
        %976 = vset.pattern.permute.xlu0 0
        %977 = vperm.xlu0 %976, %v923
        %v978 = vpop.permute.xlu0 %977
        %981 = vset.pattern.permute.xlu0 0
        %982 = vperm.xlu0 %981, %v924
        %v983 = vpop.permute.xlu0 %982
        %986 = vset.pattern.permute.xlu0 0
        %987 = vperm.xlu0 %986, %v925
        %v988 = vpop.permute.xlu0 %987
        %991 = vset.pattern.permute.xlu0 0
        %992 = vperm.xlu0 %991, %v926
        %v993 = vpop.permute.xlu0 %992
        %996 = vset.pattern.permute.xlu0 0
        %997 = vperm.xlu0 %996, %v927
        %v998 = vpop.permute.xlu0 %997
        %1001 = vset.pattern.permute.xlu0 0
        %1002 = vperm.xlu0 %1001, %v928
        %v1003 = vpop.permute.xlu0 %1002
        %1006 = vset.pattern.permute.xlu0 0
        %1007 = vperm.xlu0 %1006, %v929
        %v1008 = vpop.permute.xlu0 %1007
        %1011 = vset.pattern.permute.xlu0 0
        %1012 = vperm.xlu0 %1011, %v930
        %v1013 = vpop.permute.xlu0 %1012
        %1016 = vset.pattern.permute.xlu0 0
        %1017 = vperm.xlu0 %1016, %v931
        %v1018 = vpop.permute.xlu0 %1017
        %1021 = vset.pattern.permute.xlu0 0
        %1022 = vperm.xlu0 %1021, %v932
        %v1023 = vpop.permute.xlu0 %1022
        %1026 = vset.pattern.permute.xlu0 0
        %1027 = vperm.xlu0 %1026, %v933
        %v1028 = vpop.permute.xlu0 %1027
        %1031 = vset.pattern.permute.xlu0 0
        %1032 = vperm.xlu0 %1031, %v934
        %v1033 = vpop.permute.xlu0 %1032
        %1036 = vset.pattern.permute.xlu0 0
        %1037 = vperm.xlu0 %1036, %v935
        %v1038 = vpop.permute.xlu0 %1037
        %1041 = vset.pattern.permute.xlu0 0
        %1042 = vperm.xlu0 %1041, %v936
        %v1043 = vpop.permute.xlu0 %1042
        %1046 = vset.pattern.permute.xlu0 0
        %1047 = vperm.xlu0 %1046, %v937
        %v1048 = vpop.permute.xlu0 %1047
        %1051 = vset.pattern.permute.xlu0 0
        %1052 = vperm.xlu0 %1051, %v938
        %v1053 = vpop.permute.xlu0 %1052
        %1056 = vset.pattern.permute.xlu0 0
        %1057 = vperm.xlu0 %1056, %v939
        %v1058 = vpop.permute.xlu0 %1057
        %1061 = vset.pattern.permute.xlu0 0
        %1062 = vperm.xlu0 %1061, %v940
        %v1063 = vpop.permute.xlu0 %1062
        %1066 = vset.pattern.permute.xlu0 0
        %1067 = vperm.xlu0 %1066, %v941
        %v1068 = vpop.permute.xlu0 %1067
        %1071 = vset.pattern.permute.xlu0 0
        %1072 = vperm.xlu0 %1071, %v942
        %v1073 = vpop.permute.xlu0 %1072
        %1076 = vset.pattern.permute.xlu0 0
        %1077 = vperm.xlu0 %1076, %v943
        %v1078 = vpop.permute.xlu0 %1077
        %1081 = vset.pattern.permute.xlu0 0
        %1082 = vperm.xlu0 %1081, %v944
        %v1083 = vpop.permute.xlu0 %1082
        %1086 = vset.pattern.permute.xlu0 0
        %1087 = vperm.xlu0 %1086, %v945
        %v1088 = vpop.permute.xlu0 %1087
        %1091 = vset.pattern.permute.xlu0 0
        %1092 = vperm.xlu0 %1091, %v946
        %v1093 = vpop.permute.xlu0 %1092
        %1096 = vset.pattern.permute.xlu0 0
        %1097 = vperm.xlu0 %1096, %v947
        %v1098 = vpop.permute.xlu0 %1097
        %1101 = vset.pattern.permute.xlu0 0
        %1102 = vperm.xlu0 %1101, %v948
        %v1103 = vpop.permute.xlu0 %1102
        %1106 = vset.pattern.permute.xlu0 0
        %1107 = vperm.xlu0 %1106, %v949
        %v1108 = vpop.permute.xlu0 %1107
        %1111 = vset.pattern.permute.xlu0 0
        %1112 = vperm.xlu0 %1111, %v950
        %v1113 = vpop.permute.xlu0 %1112
        %1116 = vset.pattern.permute.xlu0 0
        %1117 = vperm.xlu0 %1116, %v951
        %v1118 = vpop.permute.xlu0 %1117
        %1121 = vset.pattern.permute.xlu0 0
        %1122 = vperm.xlu0 %1121, %v952
        %v1123 = vpop.permute.xlu0 %1122
        %1126 = vset.pattern.permute.xlu0 0
        %1127 = vperm.xlu0 %1126, %v953
        %v1128 = vpop.permute.xlu0 %1127
        %1131 = vset.pattern.permute.xlu0 0
        %1132 = vperm.xlu0 %1131, %v954
        %v1133 = vpop.permute.xlu0 %1132
        %v1135 = vmul.f32 %v883, %v958
        %v1136 = vmul.f32 %v884, %v963
        %v1137 = vmul.f32 %v885, %v968
        %v1138 = vmul.f32 %v886, %v973
        %v1139 = vmul.f32 %v887, %v978
        %v1140 = vmul.f32 %v888, %v983
        %v1141 = vmul.f32 %v889, %v988
        %v1142 = vmul.f32 %v890, %v993
        %v1143 = vmul.f32 %v891, %v998
        %v1144 = vmul.f32 %v892, %v1003
        %v1145 = vmul.f32 %v893, %v1008
        %v1146 = vmul.f32 %v894, %v1013
        %v1147 = vmul.f32 %v895, %v1018
        %v1148 = vmul.f32 %v896, %v1023
        %v1149 = vmul.f32 %v897, %v1028
        %v1150 = vmul.f32 %v898, %v1033
        %v1151 = vmul.f32 %v899, %v1038
        %v1152 = vmul.f32 %v900, %v1043
        %v1153 = vmul.f32 %v901, %v1048
        %v1154 = vmul.f32 %v902, %v1053
        %v1155 = vmul.f32 %v903, %v1058
        %v1156 = vmul.f32 %v904, %v1063
        %v1157 = vmul.f32 %v905, %v1068
        %v1158 = vmul.f32 %v906, %v1073
        %v1159 = vmul.f32 %v907, %v1078
        %v1160 = vmul.f32 %v908, %v1083
        %v1161 = vmul.f32 %v909, %v1088
        %v1162 = vmul.f32 %v910, %v1093
        %v1163 = vmul.f32 %v911, %v1098
        %v1164 = vmul.f32 %v912, %v1103
        %v1165 = vmul.f32 %v913, %v1108
        %v1166 = vmul.f32 %v914, %v1113
        %v1167 = vmul.f32 %v915, %v1118
        %v1168 = vmul.f32 %v916, %v1123
        %v1169 = vmul.f32 %v917, %v1128
        %v1170 = vmul.f32 %v918, %v1133
        %v1171 = vpack.c.bf16 %v1136, %v1135
        %v1172 = vpack.c.bf16 %v1138, %v1137
        %v1173 = vpack.c.bf16 %v1140, %v1139
        %v1174 = vpack.c.bf16 %v1142, %v1141
        %v1175 = vpack.c.bf16 %v1144, %v1143
        %v1176 = vpack.c.bf16 %v1146, %v1145
        %v1177 = vpack.c.bf16 %v1148, %v1147
        %v1178 = vpack.c.bf16 %v1150, %v1149
        %v1179 = vpack.c.bf16 %v1152, %v1151
        %v1180 = vpack.c.bf16 %v1154, %v1153
        %v1181 = vpack.c.bf16 %v1156, %v1155
        %v1182 = vpack.c.bf16 %v1158, %v1157
        %v1183 = vpack.c.bf16 %v1160, %v1159
        %v1184 = vpack.c.bf16 %v1162, %v1161
        %v1185 = vpack.c.bf16 %v1164, %v1163
        %v1186 = vpack.c.bf16 %v1166, %v1165
        %v1187 = vpack.c.bf16 %v1168, %v1167
        %v1188 = vpack.c.bf16 %v1170, %v1169
        %v1189 = vld [vmem:[%s2] sm:$0xff]
        %v1190 = vld [vmem:[%s2 + $0x8] sm:$0xff]
        %v1191 = vld [vmem:[%s2 + $0x10] sm:$0xff]
        %v1192 = vld [vmem:[%s2 + $0x18] sm:$0xff]
        %v1193 = vld [vmem:[%s2 + $0x20] sm:$0xff]
        %v1194 = vld [vmem:[%s2 + $0x28] sm:$0xff]
        %v1195 = vld [vmem:[%s2 + $0x30] sm:$0xff]
        %v1196 = vld [vmem:[%s2 + $0x38] sm:$0xff]
        %v1197 = vld [vmem:[%s2 + $0x40] sm:$0xff]
        %v1198 = vld [vmem:[%s2 + $0x48] sm:$0xff]
        %v1199 = vld [vmem:[%s2 + $0x50] sm:$0xff]
        %v1200 = vld [vmem:[%s2 + $0x58] sm:$0xff]
        %v1201 = vld [vmem:[%s2 + $0x60] sm:$0xff]
        %v1202 = vld [vmem:[%s2 + $0x68] sm:$0xff]
        %v1203 = vld [vmem:[%s2 + $0x70] sm:$0xff]
        %v1204 = vld [vmem:[%s2 + $0x78] sm:$0xff]
        %v1205 = vld [vmem:[%s2 + $0x80] sm:$0xff]
        %v1206 = vld [vmem:[%s2 + $0x88] sm:$0xff]
        %v1207 = vld [vmem:[%s2 + $0x90] sm:$0xff]
        %v1208 = vld [vmem:[%s2 + $0x98] sm:$0xff]
        %v1209 = vld [vmem:[%s2 + $0xa0] sm:$0xff]
        %v1210 = vld [vmem:[%s2 + $0xa8] sm:$0xff]
        %v1211 = vld [vmem:[%s2 + $0xb0] sm:$0xff]
        %v1212 = vld [vmem:[%s2 + $0xb8] sm:$0xff]
        %v1213 = vld [vmem:[%s2 + $0xc0] sm:$0xff]
        %v1214 = vld [vmem:[%s2 + $0xc8] sm:$0xff]
        %v1215 = vld [vmem:[%s2 + $0xd0] sm:$0xff]
        %v1216 = vld [vmem:[%s2 + $0xd8] sm:$0xff]
        %v1217 = vld [vmem:[%s2 + $0xe0] sm:$0xff]
        %v1218 = vld [vmem:[%s2 + $0xe8] sm:$0xff]
        %v1219 = vld [vmem:[%s2 + $0xf0] sm:$0xff]
        %v1220 = vld [vmem:[%s2 + $0xf8] sm:$0xff]
        %v1221 = vld [vmem:[%s2 + $0x100] sm:$0xff]
        %v1222 = vld [vmem:[%s2 + $0x108] sm:$0xff]
        %v1223 = vld [vmem:[%s2 + $0x110] sm:$0xff]
        %v1224 = vld [vmem:[%s2 + $0x118] sm:$0xff]
        %vm1225 = vsmask.f32 256
        %v1227 = vshrl.u32 %v1171, 16
        %v1229 = vrot.slane %v1227, 7
        %v1230 = vshll.u32 %v1171, 16
        %v1232 = vor.u32 %v1229, %v1230
        %v1234 = vshrl.u32 %v1172, 16
        %v1236 = vrot.slane %v1234, 7
        %v1237 = vshll.u32 %v1172, 16
        %v1239 = vor.u32 %v1236, %v1237
        %v1240 = vsel %vm1225, %v1229, %v1239
        %v1242 = vshrl.u32 %v1173, 16
        %v1244 = vrot.slane %v1242, 7
        %v1245 = vshll.u32 %v1173, 16
        %v1247 = vor.u32 %v1244, %v1245
        %v1248 = vsel %vm1225, %v1236, %v1247
        %v1250 = vshrl.u32 %v1174, 16
        %v1252 = vrot.slane %v1250, 7
        %v1253 = vshll.u32 %v1174, 16
        %v1255 = vor.u32 %v1252, %v1253
        %v1256 = vsel %vm1225, %v1244, %v1255
        %v1258 = vshrl.u32 %v1175, 16
        %v1260 = vrot.slane %v1258, 7
        %v1261 = vshll.u32 %v1175, 16
        %v1263 = vor.u32 %v1260, %v1261
        %v1264 = vsel %vm1225, %v1252, %v1263
        %v1266 = vshrl.u32 %v1176, 16
        %v1268 = vrot.slane %v1266, 7
        %v1269 = vshll.u32 %v1176, 16
        %v1271 = vor.u32 %v1268, %v1269
        %v1272 = vsel %vm1225, %v1260, %v1271
        %v1274 = vshrl.u32 %v1177, 16
        %v1276 = vrot.slane %v1274, 7
        %v1277 = vshll.u32 %v1177, 16
        %v1279 = vor.u32 %v1276, %v1277
        %v1280 = vsel %vm1225, %v1268, %v1279
        %v1282 = vshrl.u32 %v1178, 16
        %v1284 = vrot.slane %v1282, 7
        %v1285 = vshll.u32 %v1178, 16
        %v1287 = vor.u32 %v1284, %v1285
        %v1288 = vsel %vm1225, %v1276, %v1287
        %v1290 = vshrl.u32 %v1179, 16
        %v1292 = vrot.slane %v1290, 7
        %v1293 = vshll.u32 %v1179, 16
        %v1295 = vor.u32 %v1292, %v1293
        %v1296 = vsel %vm1225, %v1284, %v1295
        %v1298 = vshrl.u32 %v1180, 16
        %v1300 = vrot.slane %v1298, 7
        %v1301 = vshll.u32 %v1180, 16
        %v1303 = vor.u32 %v1300, %v1301
        %v1304 = vsel %vm1225, %v1292, %v1303
        %v1306 = vshrl.u32 %v1181, 16
        %v1308 = vrot.slane %v1306, 7
        %v1309 = vshll.u32 %v1181, 16
        %v1311 = vor.u32 %v1308, %v1309
        %v1312 = vsel %vm1225, %v1300, %v1311
        %v1314 = vshrl.u32 %v1182, 16
        %v1316 = vrot.slane %v1314, 7
        %v1317 = vshll.u32 %v1182, 16
        %v1319 = vor.u32 %v1316, %v1317
        %v1320 = vsel %vm1225, %v1308, %v1319
        %v1322 = vshrl.u32 %v1183, 16
        %v1324 = vrot.slane %v1322, 7
        %v1325 = vshll.u32 %v1183, 16
        %v1327 = vor.u32 %v1324, %v1325
        %v1328 = vsel %vm1225, %v1316, %v1327
        %v1330 = vshrl.u32 %v1184, 16
        %v1332 = vrot.slane %v1330, 7
        %v1333 = vshll.u32 %v1184, 16
        %v1335 = vor.u32 %v1332, %v1333
        %v1336 = vsel %vm1225, %v1324, %v1335
        %v1338 = vshrl.u32 %v1185, 16
        %v1340 = vrot.slane %v1338, 7
        %v1341 = vshll.u32 %v1185, 16
        %v1343 = vor.u32 %v1340, %v1341
        %v1344 = vsel %vm1225, %v1332, %v1343
        %v1346 = vshrl.u32 %v1186, 16
        %v1348 = vrot.slane %v1346, 7
        %v1349 = vshll.u32 %v1186, 16
        %v1351 = vor.u32 %v1348, %v1349
        %v1352 = vsel %vm1225, %v1340, %v1351
        %v1354 = vshrl.u32 %v1187, 16
        %v1356 = vrot.slane %v1354, 7
        %v1357 = vshll.u32 %v1187, 16
        %v1359 = vor.u32 %v1356, %v1357
        %v1360 = vsel %vm1225, %v1348, %v1359
        %v1362 = vshrl.u32 %v1188, 16
        %v1364 = vrot.slane %v1362, 7
        %v1365 = vshll.u32 %v1188, 16
        %v1367 = vor.u32 %v1364, %v1365
        %v1368 = vsel %vm1225, %v1356, %v1367
        %vm1387 = vcmask 1040384
        %vm1388 = vmand %vm1387, %vm1225
        %v1389 = vsel %vm1388, 0, %v1232
        %vm1390 = vsmask.f32 7424
        %v1391 = vrot.slane %v1230, 1
        %v1392 = vor.u32 %v1227, %v1391
        %v1393 = vrot.slane %v1237, 1
        %v1394 = vsel %vm1390, %v1392, %v1393
        %v1395 = vor.u32 %v1234, %v1393
        %v1396 = vrot.slane %v1245, 1
        %v1397 = vsel %vm1390, %v1395, %v1396
        %v1398 = vor.u32 %v1242, %v1396
        %v1399 = vrot.slane %v1253, 1
        %v1400 = vsel %vm1390, %v1398, %v1399
        %v1401 = vor.u32 %v1250, %v1399
        %v1402 = vrot.slane %v1261, 1
        %v1403 = vsel %vm1390, %v1401, %v1402
        %v1404 = vor.u32 %v1258, %v1402
        %v1405 = vrot.slane %v1269, 1
        %v1406 = vsel %vm1390, %v1404, %v1405
        %v1407 = vor.u32 %v1266, %v1405
        %v1408 = vrot.slane %v1277, 1
        %v1409 = vsel %vm1390, %v1407, %v1408
        %v1410 = vor.u32 %v1274, %v1408
        %v1411 = vrot.slane %v1285, 1
        %v1412 = vsel %vm1390, %v1410, %v1411
        %v1413 = vor.u32 %v1282, %v1411
        %v1414 = vrot.slane %v1293, 1
        %v1415 = vsel %vm1390, %v1413, %v1414
        %v1416 = vor.u32 %v1290, %v1414
        %v1417 = vrot.slane %v1301, 1
        %v1418 = vsel %vm1390, %v1416, %v1417
        %v1419 = vor.u32 %v1298, %v1417
        %v1420 = vrot.slane %v1309, 1
        %v1421 = vsel %vm1390, %v1419, %v1420
        %v1422 = vor.u32 %v1306, %v1420
        %v1423 = vrot.slane %v1317, 1
        %v1424 = vsel %vm1390, %v1422, %v1423
        %v1425 = vor.u32 %v1314, %v1423
        %v1426 = vrot.slane %v1325, 1
        %v1427 = vsel %vm1390, %v1425, %v1426
        %v1428 = vor.u32 %v1322, %v1426
        %v1429 = vrot.slane %v1333, 1
        %v1430 = vsel %vm1390, %v1428, %v1429
        %v1431 = vor.u32 %v1330, %v1429
        %v1432 = vrot.slane %v1341, 1
        %v1433 = vsel %vm1390, %v1431, %v1432
        %v1434 = vor.u32 %v1338, %v1432
        %v1435 = vrot.slane %v1349, 1
        %v1436 = vsel %vm1390, %v1434, %v1435
        %v1437 = vor.u32 %v1346, %v1435
        %v1438 = vrot.slane %v1357, 1
        %v1439 = vsel %vm1390, %v1437, %v1438
        %v1440 = vor.u32 %v1354, %v1438
        %v1441 = vrot.slane %v1365, 1
        %v1442 = vsel %vm1390, %v1440, %v1441
        %v1443 = vor.u32 %v1362, %v1441
        %vm1462 = vcmask 1047552
        %vm1463 = vmand %vm1462, %vm1390
        %v1464 = vsel %vm1463, %v1443, 0
        %vm1465 = vcmp.gt.s32.totalorder %v1189, 0
        %vm1466 = vcmp.gt.s32.totalorder %v1190, 0
        %vm1467 = vcmp.gt.s32.totalorder %v1191, 0
        %vm1468 = vcmp.gt.s32.totalorder %v1192, 0
        %vm1469 = vcmp.gt.s32.totalorder %v1193, 0
        %vm1470 = vcmp.gt.s32.totalorder %v1194, 0
        %vm1471 = vcmp.gt.s32.totalorder %v1195, 0
        %vm1472 = vcmp.gt.s32.totalorder %v1196, 0
        %vm1473 = vcmp.gt.s32.totalorder %v1197, 0
        %vm1474 = vcmp.gt.s32.totalorder %v1198, 0
        %vm1475 = vcmp.gt.s32.totalorder %v1199, 0
        %vm1476 = vcmp.gt.s32.totalorder %v1200, 0
        %vm1477 = vcmp.gt.s32.totalorder %v1201, 0
        %vm1478 = vcmp.gt.s32.totalorder %v1202, 0
        %vm1479 = vcmp.gt.s32.totalorder %v1203, 0
        %vm1480 = vcmp.gt.s32.totalorder %v1204, 0
        %vm1481 = vcmp.gt.s32.totalorder %v1205, 0
        %vm1482 = vcmp.gt.s32.totalorder %v1206, 0
        %vm1483 = vcmp.gt.s32.totalorder %v1207, 0
        %vm1484 = vcmp.gt.s32.totalorder %v1208, 0
        %vm1485 = vcmp.gt.s32.totalorder %v1209, 0
        %vm1486 = vcmp.gt.s32.totalorder %v1210, 0
        %vm1487 = vcmp.gt.s32.totalorder %v1211, 0
        %vm1488 = vcmp.gt.s32.totalorder %v1212, 0
        %vm1489 = vcmp.gt.s32.totalorder %v1213, 0
        %vm1490 = vcmp.gt.s32.totalorder %v1214, 0
        %vm1491 = vcmp.gt.s32.totalorder %v1215, 0
        %vm1492 = vcmp.gt.s32.totalorder %v1216, 0
        %vm1493 = vcmp.gt.s32.totalorder %v1217, 0
        %vm1494 = vcmp.gt.s32.totalorder %v1218, 0
        %vm1495 = vcmp.gt.s32.totalorder %v1219, 0
        %vm1496 = vcmp.gt.s32.totalorder %v1220, 0
        %vm1497 = vcmp.gt.s32.totalorder %v1221, 0
        %vm1498 = vcmp.gt.s32.totalorder %v1222, 0
        %vm1499 = vcmp.gt.s32.totalorder %v1223, 0
        %vm1500 = vcmp.gt.s32.totalorder %v1224, 0
        %v1501 = vsel %vm1465, 1, 0
        %v1502 = vsel %vm1466, 1, 0
        %v1503 = vsel %vm1467, 1, 0
        %v1504 = vsel %vm1468, 1, 0
        %v1505 = vsel %vm1469, 1, 0
        %v1506 = vsel %vm1470, 1, 0
        %v1507 = vsel %vm1471, 1, 0
        %v1508 = vsel %vm1472, 1, 0
        %v1509 = vsel %vm1473, 1, 0
        %v1510 = vsel %vm1474, 1, 0
        %v1511 = vsel %vm1475, 1, 0
        %v1512 = vsel %vm1476, 1, 0
        %v1513 = vsel %vm1477, 1, 0
        %v1514 = vsel %vm1478, 1, 0
        %v1515 = vsel %vm1479, 1, 0
        %v1516 = vsel %vm1480, 1, 0
        %v1517 = vsel %vm1481, 1, 0
        %v1518 = vsel %vm1482, 1, 0
        %v1519 = vsel %vm1483, 1, 0
        %v1520 = vsel %vm1484, 1, 0
        %v1521 = vsel %vm1485, 1, 0
        %v1522 = vsel %vm1486, 1, 0
        %v1523 = vsel %vm1487, 1, 0
        %v1524 = vsel %vm1488, 1, 0
        %v1525 = vsel %vm1489, 1, 0
        %v1526 = vsel %vm1490, 1, 0
        %v1527 = vsel %vm1491, 1, 0
        %v1528 = vsel %vm1492, 1, 0
        %v1529 = vsel %vm1493, 1, 0
        %v1530 = vsel %vm1494, 1, 0
        %v1531 = vsel %vm1495, 1, 0
        %v1532 = vsel %vm1496, 1, 0
        %v1533 = vsel %vm1497, 1, 0
        %v1534 = vsel %vm1498, 1, 0
        %v1535 = vsel %vm1499, 1, 0
        %v1536 = vsel %vm1500, 1, 0
        %1537 = vset.pattern.permute.xlu0 0
        %1538 = vperm.xlu0 %1537, %v1501
        %v1539 = vpop.permute.xlu0 %1538
        %1540 = vset.pattern.permute.xlu0 0
        %1541 = vperm.xlu0 %1540, %v1502
        %v1542 = vpop.permute.xlu0 %1541
        %1543 = vset.pattern.permute.xlu0 0
        %1544 = vperm.xlu0 %1543, %v1503
        %v1545 = vpop.permute.xlu0 %1544
        %1546 = vset.pattern.permute.xlu0 0
        %1547 = vperm.xlu0 %1546, %v1504
        %v1548 = vpop.permute.xlu0 %1547
        %1549 = vset.pattern.permute.xlu0 0
        %1550 = vperm.xlu0 %1549, %v1505
        %v1551 = vpop.permute.xlu0 %1550
        %1552 = vset.pattern.permute.xlu0 0
        %1553 = vperm.xlu0 %1552, %v1506
        %v1554 = vpop.permute.xlu0 %1553
        %1555 = vset.pattern.permute.xlu0 0
        %1556 = vperm.xlu0 %1555, %v1507
        %v1557 = vpop.permute.xlu0 %1556
        %1558 = vset.pattern.permute.xlu0 0
        %1559 = vperm.xlu0 %1558, %v1508
        %v1560 = vpop.permute.xlu0 %1559
        %1561 = vset.pattern.permute.xlu0 0
        %1562 = vperm.xlu0 %1561, %v1509
        %v1563 = vpop.permute.xlu0 %1562
        %1564 = vset.pattern.permute.xlu0 0
        %1565 = vperm.xlu0 %1564, %v1510
        %v1566 = vpop.permute.xlu0 %1565
        %1567 = vset.pattern.permute.xlu0 0
        %1568 = vperm.xlu0 %1567, %v1511
        %v1569 = vpop.permute.xlu0 %1568
        %1570 = vset.pattern.permute.xlu0 0
        %1571 = vperm.xlu0 %1570, %v1512
        %v1572 = vpop.permute.xlu0 %1571
        %1573 = vset.pattern.permute.xlu0 0
        %1574 = vperm.xlu0 %1573, %v1513
        %v1575 = vpop.permute.xlu0 %1574
        %1576 = vset.pattern.permute.xlu0 0
        %1577 = vperm.xlu0 %1576, %v1514
        %v1578 = vpop.permute.xlu0 %1577
        %1579 = vset.pattern.permute.xlu0 0
        %1580 = vperm.xlu0 %1579, %v1515
        %v1581 = vpop.permute.xlu0 %1580
        %1582 = vset.pattern.permute.xlu0 0
        %1583 = vperm.xlu0 %1582, %v1516
        %v1584 = vpop.permute.xlu0 %1583
        %1585 = vset.pattern.permute.xlu0 0
        %1586 = vperm.xlu0 %1585, %v1517
        %v1587 = vpop.permute.xlu0 %1586
        %1588 = vset.pattern.permute.xlu0 0
        %1589 = vperm.xlu0 %1588, %v1518
        %v1590 = vpop.permute.xlu0 %1589
        %1591 = vset.pattern.permute.xlu0 0
        %1592 = vperm.xlu0 %1591, %v1519
        %v1593 = vpop.permute.xlu0 %1592
        %1594 = vset.pattern.permute.xlu0 0
        %1595 = vperm.xlu0 %1594, %v1520
        %v1596 = vpop.permute.xlu0 %1595
        %1597 = vset.pattern.permute.xlu0 0
        %1598 = vperm.xlu0 %1597, %v1521
        %v1599 = vpop.permute.xlu0 %1598
        %1600 = vset.pattern.permute.xlu0 0
        %1601 = vperm.xlu0 %1600, %v1522
        %v1602 = vpop.permute.xlu0 %1601
        %1603 = vset.pattern.permute.xlu0 0
        %1604 = vperm.xlu0 %1603, %v1523
        %v1605 = vpop.permute.xlu0 %1604
        %1606 = vset.pattern.permute.xlu0 0
        %1607 = vperm.xlu0 %1606, %v1524
        %v1608 = vpop.permute.xlu0 %1607
        %1609 = vset.pattern.permute.xlu0 0
        %1610 = vperm.xlu0 %1609, %v1525
        %v1611 = vpop.permute.xlu0 %1610
        %1612 = vset.pattern.permute.xlu0 0
        %1613 = vperm.xlu0 %1612, %v1526
        %v1614 = vpop.permute.xlu0 %1613
        %1615 = vset.pattern.permute.xlu0 0
        %1616 = vperm.xlu0 %1615, %v1527
        %v1617 = vpop.permute.xlu0 %1616
        %1618 = vset.pattern.permute.xlu0 0
        %1619 = vperm.xlu0 %1618, %v1528
        %v1620 = vpop.permute.xlu0 %1619
        %1621 = vset.pattern.permute.xlu0 0
        %1622 = vperm.xlu0 %1621, %v1529
        %v1623 = vpop.permute.xlu0 %1622
        %1624 = vset.pattern.permute.xlu0 0
        %1625 = vperm.xlu0 %1624, %v1530
        %v1626 = vpop.permute.xlu0 %1625
        %1627 = vset.pattern.permute.xlu0 0
        %1628 = vperm.xlu0 %1627, %v1531
        %v1629 = vpop.permute.xlu0 %1628
        %1630 = vset.pattern.permute.xlu0 0
        %1631 = vperm.xlu0 %1630, %v1532
        %v1632 = vpop.permute.xlu0 %1631
        %1633 = vset.pattern.permute.xlu0 0
        %1634 = vperm.xlu0 %1633, %v1533
        %v1635 = vpop.permute.xlu0 %1634
        %1636 = vset.pattern.permute.xlu0 0
        %1637 = vperm.xlu0 %1636, %v1534
        %v1638 = vpop.permute.xlu0 %1637
        %1639 = vset.pattern.permute.xlu0 0
        %1640 = vperm.xlu0 %1639, %v1535
        %v1641 = vpop.permute.xlu0 %1640
        %1642 = vset.pattern.permute.xlu0 0
        %1643 = vperm.xlu0 %1642, %v1536
        %v1644 = vpop.permute.xlu0 %1643
        %vm1645 = vcmp.eq.s32.totalorder %v1539, 1
        %vm1646 = vcmp.eq.s32.totalorder %v1542, 1
        %vm1647 = vcmp.eq.s32.totalorder %v1545, 1
        %vm1648 = vcmp.eq.s32.totalorder %v1548, 1
        %vm1649 = vcmp.eq.s32.totalorder %v1551, 1
        %vm1650 = vcmp.eq.s32.totalorder %v1554, 1
        %vm1651 = vcmp.eq.s32.totalorder %v1557, 1
        %vm1652 = vcmp.eq.s32.totalorder %v1560, 1
        %vm1653 = vcmp.eq.s32.totalorder %v1563, 1
        %vm1654 = vcmp.eq.s32.totalorder %v1566, 1
        %vm1655 = vcmp.eq.s32.totalorder %v1569, 1
        %vm1656 = vcmp.eq.s32.totalorder %v1572, 1
        %vm1657 = vcmp.eq.s32.totalorder %v1575, 1
        %vm1658 = vcmp.eq.s32.totalorder %v1578, 1
        %vm1659 = vcmp.eq.s32.totalorder %v1581, 1
        %vm1660 = vcmp.eq.s32.totalorder %v1584, 1
        %vm1661 = vcmp.eq.s32.totalorder %v1587, 1
        %vm1662 = vcmp.eq.s32.totalorder %v1590, 1
        %vm1663 = vcmp.eq.s32.totalorder %v1593, 1
        %vm1664 = vcmp.eq.s32.totalorder %v1596, 1
        %vm1665 = vcmp.eq.s32.totalorder %v1599, 1
        %vm1666 = vcmp.eq.s32.totalorder %v1602, 1
        %vm1667 = vcmp.eq.s32.totalorder %v1605, 1
        %vm1668 = vcmp.eq.s32.totalorder %v1608, 1
        %vm1669 = vcmp.eq.s32.totalorder %v1611, 1
        %vm1670 = vcmp.eq.s32.totalorder %v1614, 1
        %vm1671 = vcmp.eq.s32.totalorder %v1617, 1
        %vm1672 = vcmp.eq.s32.totalorder %v1620, 1
        %vm1673 = vcmp.eq.s32.totalorder %v1623, 1
        %vm1674 = vcmp.eq.s32.totalorder %v1626, 1
        %vm1675 = vcmp.eq.s32.totalorder %v1629, 1
        %vm1676 = vcmp.eq.s32.totalorder %v1632, 1
        %vm1677 = vcmp.eq.s32.totalorder %v1635, 1
        %vm1678 = vcmp.eq.s32.totalorder %v1638, 1
        %vm1679 = vcmp.eq.s32.totalorder %v1641, 1
        %vm1680 = vcmp.eq.s32.totalorder %v1644, 1
        %vm1681 = vmpackc.low %vm1645, %vm1645
        %vm1682 = vmpackc.low %vm1646, %vm1646
        %vm1683 = vmpackc.low %vm1647, %vm1647
        %vm1684 = vmpackc.low %vm1648, %vm1648
        %vm1685 = vmpackc.low %vm1649, %vm1649
        %vm1686 = vmpackc.low %vm1650, %vm1650
        %vm1687 = vmpackc.low %vm1651, %vm1651
        %vm1688 = vmpackc.low %vm1652, %vm1652
        %vm1689 = vmpackc.low %vm1653, %vm1653
        %vm1690 = vmpackc.low %vm1654, %vm1654
        %vm1691 = vmpackc.low %vm1655, %vm1655
        %vm1692 = vmpackc.low %vm1656, %vm1656
        %vm1693 = vmpackc.low %vm1657, %vm1657
        %vm1694 = vmpackc.low %vm1658, %vm1658
        %vm1695 = vmpackc.low %vm1659, %vm1659
        %vm1696 = vmpackc.low %vm1660, %vm1660
        %vm1697 = vmpackc.low %vm1661, %vm1661
        %vm1698 = vmpackc.low %vm1662, %vm1662
        %vm1699 = vmpackc.low %vm1663, %vm1663
        %vm1700 = vmpackc.low %vm1664, %vm1664
        %vm1701 = vmpackc.low %vm1665, %vm1665
        %vm1702 = vmpackc.low %vm1666, %vm1666
        %vm1703 = vmpackc.low %vm1667, %vm1667
        %vm1704 = vmpackc.low %vm1668, %vm1668
        %vm1705 = vmpackc.low %vm1669, %vm1669
        %vm1706 = vmpackc.low %vm1670, %vm1670
        %vm1707 = vmpackc.low %vm1671, %vm1671
        %vm1708 = vmpackc.low %vm1672, %vm1672
        %vm1709 = vmpackc.low %vm1673, %vm1673
        %vm1710 = vmpackc.low %vm1674, %vm1674
        %vm1711 = vmpackc.low %vm1675, %vm1675
        %vm1712 = vmpackc.low %vm1676, %vm1676
        %vm1713 = vmpackc.low %vm1677, %vm1677
        %vm1714 = vmpackc.low %vm1678, %vm1678
        %vm1715 = vmpackc.low %vm1679, %vm1679
        %vm1716 = vmpackc.low %vm1680, %vm1680
        %v1717 = vsel %vm1681, 65537, 0
        %v1718 = vsel %vm1682, 65537, 0
        %v1719 = vsel %vm1683, 65537, 0
        %v1720 = vsel %vm1684, 65537, 0
        %v1721 = vsel %vm1685, 65537, 0
        %v1722 = vsel %vm1686, 65537, 0
        %v1723 = vsel %vm1687, 65537, 0
        %v1724 = vsel %vm1688, 65537, 0
        %v1725 = vsel %vm1689, 65537, 0
        %v1726 = vsel %vm1690, 65537, 0
        %v1727 = vsel %vm1691, 65537, 0
        %v1728 = vsel %vm1692, 65537, 0
        %v1729 = vsel %vm1693, 65537, 0
        %v1730 = vsel %vm1694, 65537, 0
        %v1731 = vsel %vm1695, 65537, 0
        %v1732 = vsel %vm1696, 65537, 0
        %v1733 = vsel %vm1697, 65537, 0
        %v1734 = vsel %vm1698, 65537, 0
        %v1735 = vsel %vm1699, 65537, 0
        %v1736 = vsel %vm1700, 65537, 0
        %v1737 = vsel %vm1701, 65537, 0
        %v1738 = vsel %vm1702, 65537, 0
        %v1739 = vsel %vm1703, 65537, 0
        %v1740 = vsel %vm1704, 65537, 0
        %v1741 = vsel %vm1705, 65537, 0
        %v1742 = vsel %vm1706, 65537, 0
        %v1743 = vsel %vm1707, 65537, 0
        %v1744 = vsel %vm1708, 65537, 0
        %v1745 = vsel %vm1709, 65537, 0
        %v1746 = vsel %vm1710, 65537, 0
        %v1747 = vsel %vm1711, 65537, 0
        %v1748 = vsel %vm1712, 65537, 0
        %v1749 = vsel %vm1713, 65537, 0
        %v1750 = vsel %vm1714, 65537, 0
        %v1751 = vsel %vm1715, 65537, 0
        %v1752 = vsel %vm1716, 65537, 0
        %v1753 = vunpack.c.l.b16 %v1717
        %v1754 = vunpack.c.l.b16 %v1718
        %v1755 = vunpack.c.l.b16 %v1719
        %v1756 = vunpack.c.l.b16 %v1720
        %v1757 = vunpack.c.l.b16 %v1721
        %v1758 = vunpack.c.l.b16 %v1722
        %v1759 = vunpack.c.l.b16 %v1723
        %v1760 = vunpack.c.l.b16 %v1724
        %v1761 = vunpack.c.l.b16 %v1725
        %v1762 = vunpack.c.l.b16 %v1726
        %v1763 = vunpack.c.l.b16 %v1727
        %v1764 = vunpack.c.l.b16 %v1728
        %v1765 = vunpack.c.l.b16 %v1729
        %v1766 = vunpack.c.l.b16 %v1730
        %v1767 = vunpack.c.l.b16 %v1731
        %v1768 = vunpack.c.l.b16 %v1732
        %v1769 = vunpack.c.l.b16 %v1733
        %v1770 = vunpack.c.l.b16 %v1734
        %v1771 = vunpack.c.l.b16 %v1735
        %v1772 = vunpack.c.l.b16 %v1736
        %v1773 = vunpack.c.l.b16 %v1737
        %v1774 = vunpack.c.l.b16 %v1738
        %v1775 = vunpack.c.l.b16 %v1739
        %v1776 = vunpack.c.l.b16 %v1740
        %v1777 = vunpack.c.l.b16 %v1741
        %v1778 = vunpack.c.l.b16 %v1742
        %v1779 = vunpack.c.l.b16 %v1743
        %v1780 = vunpack.c.l.b16 %v1744
        %v1781 = vunpack.c.l.b16 %v1745
        %v1782 = vunpack.c.l.b16 %v1746
        %v1783 = vunpack.c.l.b16 %v1747
        %v1784 = vunpack.c.l.b16 %v1748
        %v1785 = vunpack.c.l.b16 %v1749
        %v1786 = vunpack.c.l.b16 %v1750
        %v1787 = vunpack.c.l.b16 %v1751
        %v1788 = vunpack.c.l.b16 %v1752
        %v1789 = vpack.c.b16 %v1754, %v1753
        %v1790 = vpack.c.b16 %v1756, %v1755
        %v1791 = vpack.c.b16 %v1758, %v1757
        %v1792 = vpack.c.b16 %v1760, %v1759
        %v1793 = vpack.c.b16 %v1762, %v1761
        %v1794 = vpack.c.b16 %v1764, %v1763
        %v1795 = vpack.c.b16 %v1766, %v1765
        %v1796 = vpack.c.b16 %v1768, %v1767
        %v1797 = vpack.c.b16 %v1770, %v1769
        %v1798 = vpack.c.b16 %v1772, %v1771
        %v1799 = vpack.c.b16 %v1774, %v1773
        %v1800 = vpack.c.b16 %v1776, %v1775
        %v1801 = vpack.c.b16 %v1778, %v1777
        %v1802 = vpack.c.b16 %v1780, %v1779
        %v1803 = vpack.c.b16 %v1782, %v1781
        %v1804 = vpack.c.b16 %v1784, %v1783
        %v1805 = vpack.c.b16 %v1786, %v1785
        %v1806 = vpack.c.b16 %v1788, %v1787
        %vm1807 = vcmp.ne.s16.totalorder %v1789, 0
        %vm1808 = vcmp.ne.s16.totalorder %v1790, 0
        %vm1809 = vcmp.ne.s16.totalorder %v1791, 0
        %vm1810 = vcmp.ne.s16.totalorder %v1792, 0
        %vm1811 = vcmp.ne.s16.totalorder %v1793, 0
        %vm1812 = vcmp.ne.s16.totalorder %v1794, 0
        %vm1813 = vcmp.ne.s16.totalorder %v1795, 0
        %vm1814 = vcmp.ne.s16.totalorder %v1796, 0
        %vm1815 = vcmp.ne.s16.totalorder %v1797, 0
        %vm1816 = vcmp.ne.s16.totalorder %v1798, 0
        %vm1817 = vcmp.ne.s16.totalorder %v1799, 0
        %vm1818 = vcmp.ne.s16.totalorder %v1800, 0
        %vm1819 = vcmp.ne.s16.totalorder %v1801, 0
        %vm1820 = vcmp.ne.s16.totalorder %v1802, 0
        %vm1821 = vcmp.ne.s16.totalorder %v1803, 0
        %vm1822 = vcmp.ne.s16.totalorder %v1804, 0
        %vm1823 = vcmp.ne.s16.totalorder %v1805, 0
        %vm1824 = vcmp.ne.s16.totalorder %v1806, 0
        %v1825 = vsel %vm1807, %v1389, 0
        %v1826 = vsel %vm1808, %v1240, 0
        %v1827 = vsel %vm1809, %v1248, 0
        %v1828 = vsel %vm1810, %v1256, 0
        %v1829 = vsel %vm1811, %v1264, 0
        %v1830 = vsel %vm1812, %v1272, 0
        %v1831 = vsel %vm1813, %v1280, 0
        %v1832 = vsel %vm1814, %v1288, 0
        %v1833 = vsel %vm1815, %v1296, 0
        %v1834 = vsel %vm1816, %v1304, 0
        %v1835 = vsel %vm1817, %v1312, 0
        %v1836 = vsel %vm1818, %v1320, 0
        %v1837 = vsel %vm1819, %v1328, 0
        %v1838 = vsel %vm1820, %v1336, 0
        %v1839 = vsel %vm1821, %v1344, 0
        %v1840 = vsel %vm1822, %v1352, 0
        %v1841 = vsel %vm1823, %v1360, 0
        %v1842 = vsel %vm1824, %v1368, 0
        %vm1843 = vcmp.lt.s32.totalorder %v1189, 15
        %vm1844 = vcmp.lt.s32.totalorder %v1190, 15
        %vm1845 = vcmp.lt.s32.totalorder %v1191, 15
        %vm1846 = vcmp.lt.s32.totalorder %v1192, 15
        %vm1847 = vcmp.lt.s32.totalorder %v1193, 15
        %vm1848 = vcmp.lt.s32.totalorder %v1194, 15
        %vm1849 = vcmp.lt.s32.totalorder %v1195, 15
        %vm1850 = vcmp.lt.s32.totalorder %v1196, 15
        %vm1851 = vcmp.lt.s32.totalorder %v1197, 15
        %vm1852 = vcmp.lt.s32.totalorder %v1198, 15
        %vm1853 = vcmp.lt.s32.totalorder %v1199, 15
        %vm1854 = vcmp.lt.s32.totalorder %v1200, 15
        %vm1855 = vcmp.lt.s32.totalorder %v1201, 15
        %vm1856 = vcmp.lt.s32.totalorder %v1202, 15
        %vm1857 = vcmp.lt.s32.totalorder %v1203, 15
        %vm1858 = vcmp.lt.s32.totalorder %v1204, 15
        %vm1859 = vcmp.lt.s32.totalorder %v1205, 15
        %vm1860 = vcmp.lt.s32.totalorder %v1206, 15
        %vm1861 = vcmp.lt.s32.totalorder %v1207, 15
        %vm1862 = vcmp.lt.s32.totalorder %v1208, 15
        %vm1863 = vcmp.lt.s32.totalorder %v1209, 15
        %vm1864 = vcmp.lt.s32.totalorder %v1210, 15
        %vm1865 = vcmp.lt.s32.totalorder %v1211, 15
        %vm1866 = vcmp.lt.s32.totalorder %v1212, 15
        %vm1867 = vcmp.lt.s32.totalorder %v1213, 15
        %vm1868 = vcmp.lt.s32.totalorder %v1214, 15
        %vm1869 = vcmp.lt.s32.totalorder %v1215, 15
        %vm1870 = vcmp.lt.s32.totalorder %v1216, 15
        %vm1871 = vcmp.lt.s32.totalorder %v1217, 15
        %vm1872 = vcmp.lt.s32.totalorder %v1218, 15
        %vm1873 = vcmp.lt.s32.totalorder %v1219, 15
        %vm1874 = vcmp.lt.s32.totalorder %v1220, 15
        %vm1875 = vcmp.lt.s32.totalorder %v1221, 15
        %vm1876 = vcmp.lt.s32.totalorder %v1222, 15
        %vm1877 = vcmp.lt.s32.totalorder %v1223, 15
        %vm1878 = vcmp.lt.s32.totalorder %v1224, 15
        %v1879 = vsel %vm1843, 1, 0
        %v1880 = vsel %vm1844, 1, 0
        %v1881 = vsel %vm1845, 1, 0
        %v1882 = vsel %vm1846, 1, 0
        %v1883 = vsel %vm1847, 1, 0
        %v1884 = vsel %vm1848, 1, 0
        %v1885 = vsel %vm1849, 1, 0
        %v1886 = vsel %vm1850, 1, 0
        %v1887 = vsel %vm1851, 1, 0
        %v1888 = vsel %vm1852, 1, 0
        %v1889 = vsel %vm1853, 1, 0
        %v1890 = vsel %vm1854, 1, 0
        %v1891 = vsel %vm1855, 1, 0
        %v1892 = vsel %vm1856, 1, 0
        %v1893 = vsel %vm1857, 1, 0
        %v1894 = vsel %vm1858, 1, 0
        %v1895 = vsel %vm1859, 1, 0
        %v1896 = vsel %vm1860, 1, 0
        %v1897 = vsel %vm1861, 1, 0
        %v1898 = vsel %vm1862, 1, 0
        %v1899 = vsel %vm1863, 1, 0
        %v1900 = vsel %vm1864, 1, 0
        %v1901 = vsel %vm1865, 1, 0
        %v1902 = vsel %vm1866, 1, 0
        %v1903 = vsel %vm1867, 1, 0
        %v1904 = vsel %vm1868, 1, 0
        %v1905 = vsel %vm1869, 1, 0
        %v1906 = vsel %vm1870, 1, 0
        %v1907 = vsel %vm1871, 1, 0
        %v1908 = vsel %vm1872, 1, 0
        %v1909 = vsel %vm1873, 1, 0
        %v1910 = vsel %vm1874, 1, 0
        %v1911 = vsel %vm1875, 1, 0
        %v1912 = vsel %vm1876, 1, 0
        %v1913 = vsel %vm1877, 1, 0
        %v1914 = vsel %vm1878, 1, 0
        %1915 = vset.pattern.permute.xlu0 0
        %1916 = vperm.xlu0 %1915, %v1879
        %v1917 = vpop.permute.xlu0 %1916
        %1918 = vset.pattern.permute.xlu0 0
        %1919 = vperm.xlu0 %1918, %v1880
        %v1920 = vpop.permute.xlu0 %1919
        %1921 = vset.pattern.permute.xlu0 0
        %1922 = vperm.xlu0 %1921, %v1881
        %v1923 = vpop.permute.xlu0 %1922
        %1924 = vset.pattern.permute.xlu0 0
        %1925 = vperm.xlu0 %1924, %v1882
        %v1926 = vpop.permute.xlu0 %1925
        %1927 = vset.pattern.permute.xlu0 0
        %1928 = vperm.xlu0 %1927, %v1883
        %v1929 = vpop.permute.xlu0 %1928
        %1930 = vset.pattern.permute.xlu0 0
        %1931 = vperm.xlu0 %1930, %v1884
        %v1932 = vpop.permute.xlu0 %1931
        %1933 = vset.pattern.permute.xlu0 0
        %1934 = vperm.xlu0 %1933, %v1885
        %v1935 = vpop.permute.xlu0 %1934
        %1936 = vset.pattern.permute.xlu0 0
        %1937 = vperm.xlu0 %1936, %v1886
        %v1938 = vpop.permute.xlu0 %1937
        %1939 = vset.pattern.permute.xlu0 0
        %1940 = vperm.xlu0 %1939, %v1887
        %v1941 = vpop.permute.xlu0 %1940
        %1942 = vset.pattern.permute.xlu0 0
        %1943 = vperm.xlu0 %1942, %v1888
        %v1944 = vpop.permute.xlu0 %1943
        %1945 = vset.pattern.permute.xlu0 0
        %1946 = vperm.xlu0 %1945, %v1889
        %v1947 = vpop.permute.xlu0 %1946
        %1948 = vset.pattern.permute.xlu0 0
        %1949 = vperm.xlu0 %1948, %v1890
        %v1950 = vpop.permute.xlu0 %1949
        %1951 = vset.pattern.permute.xlu0 0
        %1952 = vperm.xlu0 %1951, %v1891
        %v1953 = vpop.permute.xlu0 %1952
        %1954 = vset.pattern.permute.xlu0 0
        %1955 = vperm.xlu0 %1954, %v1892
        %v1956 = vpop.permute.xlu0 %1955
        %1957 = vset.pattern.permute.xlu0 0
        %1958 = vperm.xlu0 %1957, %v1893
        %v1959 = vpop.permute.xlu0 %1958
        %1960 = vset.pattern.permute.xlu0 0
        %1961 = vperm.xlu0 %1960, %v1894
        %v1962 = vpop.permute.xlu0 %1961
        %1963 = vset.pattern.permute.xlu0 0
        %1964 = vperm.xlu0 %1963, %v1895
        %v1965 = vpop.permute.xlu0 %1964
        %1966 = vset.pattern.permute.xlu0 0
        %1967 = vperm.xlu0 %1966, %v1896
        %v1968 = vpop.permute.xlu0 %1967
        %1969 = vset.pattern.permute.xlu0 0
        %1970 = vperm.xlu0 %1969, %v1897
        %v1971 = vpop.permute.xlu0 %1970
        %1972 = vset.pattern.permute.xlu0 0
        %1973 = vperm.xlu0 %1972, %v1898
        %v1974 = vpop.permute.xlu0 %1973
        %1975 = vset.pattern.permute.xlu0 0
        %1976 = vperm.xlu0 %1975, %v1899
        %v1977 = vpop.permute.xlu0 %1976
        %1978 = vset.pattern.permute.xlu0 0
        %1979 = vperm.xlu0 %1978, %v1900
        %v1980 = vpop.permute.xlu0 %1979
        %1981 = vset.pattern.permute.xlu0 0
        %1982 = vperm.xlu0 %1981, %v1901
        %v1983 = vpop.permute.xlu0 %1982
        %1984 = vset.pattern.permute.xlu0 0
        %1985 = vperm.xlu0 %1984, %v1902
        %v1986 = vpop.permute.xlu0 %1985
        %1987 = vset.pattern.permute.xlu0 0
        %1988 = vperm.xlu0 %1987, %v1903
        %v1989 = vpop.permute.xlu0 %1988
        %1990 = vset.pattern.permute.xlu0 0
        %1991 = vperm.xlu0 %1990, %v1904
        %v1992 = vpop.permute.xlu0 %1991
        %1993 = vset.pattern.permute.xlu0 0
        %1994 = vperm.xlu0 %1993, %v1905
        %v1995 = vpop.permute.xlu0 %1994
        %1996 = vset.pattern.permute.xlu0 0
        %1997 = vperm.xlu0 %1996, %v1906
        %v1998 = vpop.permute.xlu0 %1997
        %1999 = vset.pattern.permute.xlu0 0
        %2000 = vperm.xlu0 %1999, %v1907
        %v2001 = vpop.permute.xlu0 %2000
        %2002 = vset.pattern.permute.xlu0 0
        %2003 = vperm.xlu0 %2002, %v1908
        %v2004 = vpop.permute.xlu0 %2003
        %2005 = vset.pattern.permute.xlu0 0
        %2006 = vperm.xlu0 %2005, %v1909
        %v2007 = vpop.permute.xlu0 %2006
        %2008 = vset.pattern.permute.xlu0 0
        %2009 = vperm.xlu0 %2008, %v1910
        %v2010 = vpop.permute.xlu0 %2009
        %2011 = vset.pattern.permute.xlu0 0
        %2012 = vperm.xlu0 %2011, %v1911
        %v2013 = vpop.permute.xlu0 %2012
        %2014 = vset.pattern.permute.xlu0 0
        %2015 = vperm.xlu0 %2014, %v1912
        %v2016 = vpop.permute.xlu0 %2015
        %2017 = vset.pattern.permute.xlu0 0
        %2018 = vperm.xlu0 %2017, %v1913
        %v2019 = vpop.permute.xlu0 %2018
        %2020 = vset.pattern.permute.xlu0 0
        %2021 = vperm.xlu0 %2020, %v1914
        %v2022 = vpop.permute.xlu0 %2021
        %vm2023 = vcmp.eq.s32.totalorder %v1917, 1
        %vm2024 = vcmp.eq.s32.totalorder %v1920, 1
        %vm2025 = vcmp.eq.s32.totalorder %v1923, 1
        %vm2026 = vcmp.eq.s32.totalorder %v1926, 1
        %vm2027 = vcmp.eq.s32.totalorder %v1929, 1
        %vm2028 = vcmp.eq.s32.totalorder %v1932, 1
        %vm2029 = vcmp.eq.s32.totalorder %v1935, 1
        %vm2030 = vcmp.eq.s32.totalorder %v1938, 1
        %vm2031 = vcmp.eq.s32.totalorder %v1941, 1
        %vm2032 = vcmp.eq.s32.totalorder %v1944, 1
        %vm2033 = vcmp.eq.s32.totalorder %v1947, 1
        %vm2034 = vcmp.eq.s32.totalorder %v1950, 1
        %vm2035 = vcmp.eq.s32.totalorder %v1953, 1
        %vm2036 = vcmp.eq.s32.totalorder %v1956, 1
        %vm2037 = vcmp.eq.s32.totalorder %v1959, 1
        %vm2038 = vcmp.eq.s32.totalorder %v1962, 1
        %vm2039 = vcmp.eq.s32.totalorder %v1965, 1
        %vm2040 = vcmp.eq.s32.totalorder %v1968, 1
        %vm2041 = vcmp.eq.s32.totalorder %v1971, 1
        %vm2042 = vcmp.eq.s32.totalorder %v1974, 1
        %vm2043 = vcmp.eq.s32.totalorder %v1977, 1
        %vm2044 = vcmp.eq.s32.totalorder %v1980, 1
        %vm2045 = vcmp.eq.s32.totalorder %v1983, 1
        %vm2046 = vcmp.eq.s32.totalorder %v1986, 1
        %vm2047 = vcmp.eq.s32.totalorder %v1989, 1
        %vm2048 = vcmp.eq.s32.totalorder %v1992, 1
        %vm2049 = vcmp.eq.s32.totalorder %v1995, 1
        %vm2050 = vcmp.eq.s32.totalorder %v1998, 1
        %vm2051 = vcmp.eq.s32.totalorder %v2001, 1
        %vm2052 = vcmp.eq.s32.totalorder %v2004, 1
        %vm2053 = vcmp.eq.s32.totalorder %v2007, 1
        %vm2054 = vcmp.eq.s32.totalorder %v2010, 1
        %vm2055 = vcmp.eq.s32.totalorder %v2013, 1
        %vm2056 = vcmp.eq.s32.totalorder %v2016, 1
        %vm2057 = vcmp.eq.s32.totalorder %v2019, 1
        %vm2058 = vcmp.eq.s32.totalorder %v2022, 1
        %vm2059 = vmpackc.low %vm2023, %vm2023
        %vm2060 = vmpackc.low %vm2024, %vm2024
        %vm2061 = vmpackc.low %vm2025, %vm2025
        %vm2062 = vmpackc.low %vm2026, %vm2026
        %vm2063 = vmpackc.low %vm2027, %vm2027
        %vm2064 = vmpackc.low %vm2028, %vm2028
        %vm2065 = vmpackc.low %vm2029, %vm2029
        %vm2066 = vmpackc.low %vm2030, %vm2030
        %vm2067 = vmpackc.low %vm2031, %vm2031
        %vm2068 = vmpackc.low %vm2032, %vm2032
        %vm2069 = vmpackc.low %vm2033, %vm2033
        %vm2070 = vmpackc.low %vm2034, %vm2034
        %vm2071 = vmpackc.low %vm2035, %vm2035
        %vm2072 = vmpackc.low %vm2036, %vm2036
        %vm2073 = vmpackc.low %vm2037, %vm2037
        %vm2074 = vmpackc.low %vm2038, %vm2038
        %vm2075 = vmpackc.low %vm2039, %vm2039
        %vm2076 = vmpackc.low %vm2040, %vm2040
        %vm2077 = vmpackc.low %vm2041, %vm2041
        %vm2078 = vmpackc.low %vm2042, %vm2042
        %vm2079 = vmpackc.low %vm2043, %vm2043
        %vm2080 = vmpackc.low %vm2044, %vm2044
        %vm2081 = vmpackc.low %vm2045, %vm2045
        %vm2082 = vmpackc.low %vm2046, %vm2046
        %vm2083 = vmpackc.low %vm2047, %vm2047
        %vm2084 = vmpackc.low %vm2048, %vm2048
        %vm2085 = vmpackc.low %vm2049, %vm2049
        %vm2086 = vmpackc.low %vm2050, %vm2050
        %vm2087 = vmpackc.low %vm2051, %vm2051
        %vm2088 = vmpackc.low %vm2052, %vm2052
        %vm2089 = vmpackc.low %vm2053, %vm2053
        %vm2090 = vmpackc.low %vm2054, %vm2054
        %vm2091 = vmpackc.low %vm2055, %vm2055
        %vm2092 = vmpackc.low %vm2056, %vm2056
        %vm2093 = vmpackc.low %vm2057, %vm2057
        %vm2094 = vmpackc.low %vm2058, %vm2058
        %v2095 = vsel %vm2059, 65537, 0
        %v2096 = vsel %vm2060, 65537, 0
        %v2097 = vsel %vm2061, 65537, 0
        %v2098 = vsel %vm2062, 65537, 0
        %v2099 = vsel %vm2063, 65537, 0
        %v2100 = vsel %vm2064, 65537, 0
        %v2101 = vsel %vm2065, 65537, 0
        %v2102 = vsel %vm2066, 65537, 0
        %v2103 = vsel %vm2067, 65537, 0
        %v2104 = vsel %vm2068, 65537, 0
        %v2105 = vsel %vm2069, 65537, 0
        %v2106 = vsel %vm2070, 65537, 0
        %v2107 = vsel %vm2071, 65537, 0
        %v2108 = vsel %vm2072, 65537, 0
        %v2109 = vsel %vm2073, 65537, 0
        %v2110 = vsel %vm2074, 65537, 0
        %v2111 = vsel %vm2075, 65537, 0
        %v2112 = vsel %vm2076, 65537, 0
        %v2113 = vsel %vm2077, 65537, 0
        %v2114 = vsel %vm2078, 65537, 0
        %v2115 = vsel %vm2079, 65537, 0
        %v2116 = vsel %vm2080, 65537, 0
        %v2117 = vsel %vm2081, 65537, 0
        %v2118 = vsel %vm2082, 65537, 0
        %v2119 = vsel %vm2083, 65537, 0
        %v2120 = vsel %vm2084, 65537, 0
        %v2121 = vsel %vm2085, 65537, 0
        %v2122 = vsel %vm2086, 65537, 0
        %v2123 = vsel %vm2087, 65537, 0
        %v2124 = vsel %vm2088, 65537, 0
        %v2125 = vsel %vm2089, 65537, 0
        %v2126 = vsel %vm2090, 65537, 0
        %v2127 = vsel %vm2091, 65537, 0
        %v2128 = vsel %vm2092, 65537, 0
        %v2129 = vsel %vm2093, 65537, 0
        %v2130 = vsel %vm2094, 65537, 0
        %v2131 = vunpack.c.l.b16 %v2095
        %v2132 = vunpack.c.l.b16 %v2096
        %v2133 = vunpack.c.l.b16 %v2097
        %v2134 = vunpack.c.l.b16 %v2098
        %v2135 = vunpack.c.l.b16 %v2099
        %v2136 = vunpack.c.l.b16 %v2100
        %v2137 = vunpack.c.l.b16 %v2101
        %v2138 = vunpack.c.l.b16 %v2102
        %v2139 = vunpack.c.l.b16 %v2103
        %v2140 = vunpack.c.l.b16 %v2104
        %v2141 = vunpack.c.l.b16 %v2105
        %v2142 = vunpack.c.l.b16 %v2106
        %v2143 = vunpack.c.l.b16 %v2107
        %v2144 = vunpack.c.l.b16 %v2108
        %v2145 = vunpack.c.l.b16 %v2109
        %v2146 = vunpack.c.l.b16 %v2110
        %v2147 = vunpack.c.l.b16 %v2111
        %v2148 = vunpack.c.l.b16 %v2112
        %v2149 = vunpack.c.l.b16 %v2113
        %v2150 = vunpack.c.l.b16 %v2114
        %v2151 = vunpack.c.l.b16 %v2115
        %v2152 = vunpack.c.l.b16 %v2116
        %v2153 = vunpack.c.l.b16 %v2117
        %v2154 = vunpack.c.l.b16 %v2118
        %v2155 = vunpack.c.l.b16 %v2119
        %v2156 = vunpack.c.l.b16 %v2120
        %v2157 = vunpack.c.l.b16 %v2121
        %v2158 = vunpack.c.l.b16 %v2122
        %v2159 = vunpack.c.l.b16 %v2123
        %v2160 = vunpack.c.l.b16 %v2124
        %v2161 = vunpack.c.l.b16 %v2125
        %v2162 = vunpack.c.l.b16 %v2126
        %v2163 = vunpack.c.l.b16 %v2127
        %v2164 = vunpack.c.l.b16 %v2128
        %v2165 = vunpack.c.l.b16 %v2129
        %v2166 = vunpack.c.l.b16 %v2130
        %v2167 = vpack.c.b16 %v2132, %v2131
        %v2168 = vpack.c.b16 %v2134, %v2133
        %v2169 = vpack.c.b16 %v2136, %v2135
        %v2170 = vpack.c.b16 %v2138, %v2137
        %v2171 = vpack.c.b16 %v2140, %v2139
        %v2172 = vpack.c.b16 %v2142, %v2141
        %v2173 = vpack.c.b16 %v2144, %v2143
        %v2174 = vpack.c.b16 %v2146, %v2145
        %v2175 = vpack.c.b16 %v2148, %v2147
        %v2176 = vpack.c.b16 %v2150, %v2149
        %v2177 = vpack.c.b16 %v2152, %v2151
        %v2178 = vpack.c.b16 %v2154, %v2153
        %v2179 = vpack.c.b16 %v2156, %v2155
        %v2180 = vpack.c.b16 %v2158, %v2157
        %v2181 = vpack.c.b16 %v2160, %v2159
        %v2182 = vpack.c.b16 %v2162, %v2161
        %v2183 = vpack.c.b16 %v2164, %v2163
        %v2184 = vpack.c.b16 %v2166, %v2165
        %vm2185 = vcmp.ne.s16.totalorder %v2167, 0
        %vm2186 = vcmp.ne.s16.totalorder %v2168, 0
        %vm2187 = vcmp.ne.s16.totalorder %v2169, 0
        %vm2188 = vcmp.ne.s16.totalorder %v2170, 0
        %vm2189 = vcmp.ne.s16.totalorder %v2171, 0
        %vm2190 = vcmp.ne.s16.totalorder %v2172, 0
        %vm2191 = vcmp.ne.s16.totalorder %v2173, 0
        %vm2192 = vcmp.ne.s16.totalorder %v2174, 0
        %vm2193 = vcmp.ne.s16.totalorder %v2175, 0
        %vm2194 = vcmp.ne.s16.totalorder %v2176, 0
        %vm2195 = vcmp.ne.s16.totalorder %v2177, 0
        %vm2196 = vcmp.ne.s16.totalorder %v2178, 0
        %vm2197 = vcmp.ne.s16.totalorder %v2179, 0
        %vm2198 = vcmp.ne.s16.totalorder %v2180, 0
        %vm2199 = vcmp.ne.s16.totalorder %v2181, 0
        %vm2200 = vcmp.ne.s16.totalorder %v2182, 0
        %vm2201 = vcmp.ne.s16.totalorder %v2183, 0
        %vm2202 = vcmp.ne.s16.totalorder %v2184, 0
        %v2203 = vsel %vm2185, %v1394, 0
        %v2204 = vsel %vm2186, %v1397, 0
        %v2205 = vsel %vm2187, %v1400, 0
        %v2206 = vsel %vm2188, %v1403, 0
        %v2207 = vsel %vm2189, %v1406, 0
        %v2208 = vsel %vm2190, %v1409, 0
        %v2209 = vsel %vm2191, %v1412, 0
        %v2210 = vsel %vm2192, %v1415, 0
        %v2211 = vsel %vm2193, %v1418, 0
        %v2212 = vsel %vm2194, %v1421, 0
        %v2213 = vsel %vm2195, %v1424, 0
        %v2214 = vsel %vm2196, %v1427, 0
        %v2215 = vsel %vm2197, %v1430, 0
        %v2216 = vsel %vm2198, %v1433, 0
        %v2217 = vsel %vm2199, %v1436, 0
        %v2218 = vsel %vm2200, %v1439, 0
        %v2219 = vsel %vm2201, %v1442, 0
        %v2220 = vsel %vm2202, %v1464, 0
        %v2221 = vld [vmem:[%s5] sm:$0xf]
        %v2222 = vld [vmem:[%s5 + $0x4] sm:$0xf]
        %v2223 = vld [vmem:[%s5 + $0x8] sm:$0xf]
        %v2224 = vld [vmem:[%s5 + $0xc] sm:$0xf]
        %v2225 = vld [vmem:[%s5 + $0x10] sm:$0xf]
        %v2226 = vld [vmem:[%s5 + $0x14] sm:$0xf]
        %v2227 = vld [vmem:[%s5 + $0x18] sm:$0xf]
        %v2228 = vld [vmem:[%s5 + $0x1c] sm:$0xf]
        %v2229 = vld [vmem:[%s5 + $0x20] sm:$0xf]
        %v2230 = vld [vmem:[%s5 + $0x24] sm:$0xf]
        %v2231 = vld [vmem:[%s5 + $0x28] sm:$0xf]
        %v2232 = vld [vmem:[%s5 + $0x2c] sm:$0xf]
        %v2233 = vld [vmem:[%s5 + $0x30] sm:$0xf]
        %v2234 = vld [vmem:[%s5 + $0x34] sm:$0xf]
        %v2235 = vld [vmem:[%s5 + $0x38] sm:$0xf]
        %v2236 = vld [vmem:[%s5 + $0x3c] sm:$0xf]
        %v2237 = vld [vmem:[%s5 + $0x40] sm:$0xf]
        %v2238 = vld [vmem:[%s5 + $0x44] sm:$0xf]
        %v2239 = vld [vmem:[%s5 + $0x48] sm:$0xf]
        %v2240 = vld [vmem:[%s5 + $0x4c] sm:$0xf]
        %v2241 = vld [vmem:[%s5 + $0x50] sm:$0xf]
        %v2242 = vld [vmem:[%s5 + $0x54] sm:$0xf]
        %v2243 = vld [vmem:[%s5 + $0x58] sm:$0xf]
        %v2244 = vld [vmem:[%s5 + $0x5c] sm:$0xf]
        %v2245 = vld [vmem:[%s5 + $0x60] sm:$0xf]
        %v2246 = vld [vmem:[%s5 + $0x64] sm:$0xf]
        %v2247 = vld [vmem:[%s5 + $0x68] sm:$0xf]
        %v2248 = vld [vmem:[%s5 + $0x6c] sm:$0xf]
        %v2249 = vld [vmem:[%s5 + $0x70] sm:$0xf]
        %v2250 = vld [vmem:[%s5 + $0x74] sm:$0xf]
        %v2251 = vld [vmem:[%s5 + $0x78] sm:$0xf]
        %v2252 = vld [vmem:[%s5 + $0x7c] sm:$0xf]
        %v2253 = vld [vmem:[%s5 + $0x80] sm:$0xf]
        %v2254 = vld [vmem:[%s5 + $0x84] sm:$0xf]
        %v2255 = vld [vmem:[%s5 + $0x88] sm:$0xf]
        %v2256 = vld [vmem:[%s5 + $0x8c] sm:$0xf]
        %v2257 = vld [vmem:[%s5 + $0x90] sm:$0xf]
        %v2258 = vld [vmem:[%s5 + $0x94] sm:$0xf]
        %v2259 = vld [vmem:[%s5 + $0x98] sm:$0xf]
        %v2260 = vld [vmem:[%s5 + $0x9c] sm:$0xf]
        %v2261 = vld [vmem:[%s5 + $0xa0] sm:$0xf]
        %v2262 = vld [vmem:[%s5 + $0xa4] sm:$0xf]
        %v2263 = vld [vmem:[%s5 + $0xa8] sm:$0xf]
        %v2264 = vld [vmem:[%s5 + $0xac] sm:$0xf]
        %v2265 = vld [vmem:[%s5 + $0xb0] sm:$0xf]
        %v2266 = vld [vmem:[%s5 + $0xb4] sm:$0xf]
        %v2267 = vld [vmem:[%s5 + $0xb8] sm:$0xf]
        %v2268 = vld [vmem:[%s5 + $0xbc] sm:$0xf]
        %s2269 = scalar_lea.vmem %s5, 192
        %v2270 = vld [vmem:[%s2269] sm:$0xf]
        %v2271 = vld [vmem:[%s2269 + $0x4] sm:$0xf]
        %v2272 = vld [vmem:[%s2269 + $0x8] sm:$0xf]
        %v2273 = vld [vmem:[%s2269 + $0xc] sm:$0xf]
        %v2274 = vld [vmem:[%s2269 + $0x10] sm:$0xf]
        %v2275 = vld [vmem:[%s2269 + $0x14] sm:$0xf]
        %v2276 = vld [vmem:[%s2269 + $0x18] sm:$0xf]
        %v2277 = vld [vmem:[%s2269 + $0x1c] sm:$0xf]
        %v2278 = vld [vmem:[%s2269 + $0x20] sm:$0xf]
        %v2279 = vld [vmem:[%s2269 + $0x24] sm:$0xf]
        %v2280 = vld [vmem:[%s2269 + $0x28] sm:$0xf]
        %v2281 = vld [vmem:[%s2269 + $0x2c] sm:$0xf]
        %v2282 = vld [vmem:[%s2269 + $0x30] sm:$0xf]
        %v2283 = vld [vmem:[%s2269 + $0x34] sm:$0xf]
        %v2284 = vld [vmem:[%s2269 + $0x38] sm:$0xf]
        %v2285 = vld [vmem:[%s2269 + $0x3c] sm:$0xf]
        %v2286 = vld [vmem:[%s2269 + $0x40] sm:$0xf]
        %v2287 = vld [vmem:[%s2269 + $0x44] sm:$0xf]
        %v2288 = vld [vmem:[%s2269 + $0x48] sm:$0xf]
        %v2289 = vld [vmem:[%s2269 + $0x4c] sm:$0xf]
        %v2290 = vld [vmem:[%s2269 + $0x50] sm:$0xf]
        %v2291 = vld [vmem:[%s2269 + $0x54] sm:$0xf]
        %v2292 = vld [vmem:[%s2269 + $0x58] sm:$0xf]
        %v2293 = vld [vmem:[%s2269 + $0x5c] sm:$0xf]
        %v2294 = vld [vmem:[%s2269 + $0x60] sm:$0xf]
        %v2295 = vld [vmem:[%s2269 + $0x64] sm:$0xf]
        %v2296 = vld [vmem:[%s2269 + $0x68] sm:$0xf]
        %v2297 = vld [vmem:[%s2269 + $0x6c] sm:$0xf]
        %v2298 = vld [vmem:[%s2269 + $0x70] sm:$0xf]
        %v2299 = vld [vmem:[%s2269 + $0x74] sm:$0xf]
        %v2300 = vld [vmem:[%s2269 + $0x78] sm:$0xf]
        %v2301 = vld [vmem:[%s2269 + $0x7c] sm:$0xf]
        %v2302 = vld [vmem:[%s2269 + $0x80] sm:$0xf]
        %v2303 = vld [vmem:[%s2269 + $0x84] sm:$0xf]
        %v2304 = vld [vmem:[%s2269 + $0x88] sm:$0xf]
        %v2305 = vld [vmem:[%s2269 + $0x8c] sm:$0xf]
        %v2306 = vld [vmem:[%s2269 + $0x90] sm:$0xf]
        %v2307 = vld [vmem:[%s2269 + $0x94] sm:$0xf]
        %v2308 = vld [vmem:[%s2269 + $0x98] sm:$0xf]
        %v2309 = vld [vmem:[%s2269 + $0x9c] sm:$0xf]
        %v2310 = vld [vmem:[%s2269 + $0xa0] sm:$0xf]
        %v2311 = vld [vmem:[%s2269 + $0xa4] sm:$0xf]
        %v2312 = vld [vmem:[%s2269 + $0xa8] sm:$0xf]
        %v2313 = vld [vmem:[%s2269 + $0xac] sm:$0xf]
        %v2314 = vld [vmem:[%s2269 + $0xb0] sm:$0xf]
        %v2315 = vld [vmem:[%s2269 + $0xb4] sm:$0xf]
        %v2316 = vld [vmem:[%s2269 + $0xb8] sm:$0xf]
        %v2317 = vld [vmem:[%s2269 + $0xbc] sm:$0xf]
        %v2366 = vunpack.c.l.b16 %v2270
        %v2367 = vunpack.c.l.b16 %v2271
        %v2368 = vunpack.c.l.b16 %v2272
        %v2369 = vunpack.c.l.b16 %v2273
        %v2370 = vunpack.c.l.b16 %v2274
        %v2371 = vunpack.c.l.b16 %v2275
        %v2372 = vunpack.c.l.b16 %v2276
        %v2373 = vunpack.c.l.b16 %v2277
        %v2374 = vunpack.c.l.b16 %v2278
        %v2375 = vunpack.c.l.b16 %v2279
        %v2376 = vunpack.c.l.b16 %v2280
        %v2377 = vunpack.c.l.b16 %v2281
        %v2378 = vunpack.c.l.b16 %v2282
        %v2379 = vunpack.c.l.b16 %v2283
        %v2380 = vunpack.c.l.b16 %v2284
        %v2381 = vunpack.c.l.b16 %v2285
        %v2382 = vunpack.c.l.b16 %v2286
        %v2383 = vunpack.c.l.b16 %v2287
        %v2384 = vunpack.c.l.b16 %v2288
        %v2385 = vunpack.c.l.b16 %v2289
        %v2386 = vunpack.c.l.b16 %v2290
        %v2387 = vunpack.c.l.b16 %v2291
        %v2388 = vunpack.c.l.b16 %v2292
        %v2389 = vunpack.c.l.b16 %v2293
        %v2390 = vunpack.c.l.b16 %v2294
        %v2391 = vunpack.c.l.b16 %v2295
        %v2392 = vunpack.c.l.b16 %v2296
        %v2393 = vunpack.c.l.b16 %v2297
        %v2394 = vunpack.c.l.b16 %v2298
        %v2395 = vunpack.c.l.b16 %v2299
        %v2396 = vunpack.c.l.b16 %v2300
        %v2397 = vunpack.c.l.b16 %v2301
        %v2398 = vunpack.c.l.b16 %v2302
        %v2399 = vunpack.c.l.b16 %v2303
        %v2400 = vunpack.c.l.b16 %v2304
        %v2401 = vunpack.c.l.b16 %v2305
        %v2402 = vunpack.c.l.b16 %v2306
        %v2403 = vunpack.c.l.b16 %v2307
        %v2404 = vunpack.c.l.b16 %v2308
        %v2405 = vunpack.c.l.b16 %v2309
        %v2406 = vunpack.c.l.b16 %v2310
        %v2407 = vunpack.c.l.b16 %v2311
        %v2408 = vunpack.c.l.b16 %v2312
        %v2409 = vunpack.c.l.b16 %v2313
        %v2410 = vunpack.c.l.b16 %v2314
        %v2411 = vunpack.c.l.b16 %v2315
        %v2412 = vunpack.c.l.b16 %v2316
        %v2413 = vunpack.c.l.b16 %v2317
        %v2414 = vpack.c.b16 %v2367, %v2366
        %v2415 = vpack.c.b16 %v2369, %v2368
        %v2416 = vpack.c.b16 %v2371, %v2370
        %v2417 = vpack.c.b16 %v2373, %v2372
        %v2418 = vpack.c.b16 %v2375, %v2374
        %v2419 = vpack.c.b16 %v2377, %v2376
        %v2420 = vpack.c.b16 %v2379, %v2378
        %v2421 = vpack.c.b16 %v2381, %v2380
        %v2422 = vpack.c.b16 %v2383, %v2382
        %v2423 = vpack.c.b16 %v2385, %v2384
        %v2424 = vpack.c.b16 %v2387, %v2386
        %v2425 = vpack.c.b16 %v2389, %v2388
        %v2426 = vpack.c.b16 %v2391, %v2390
        %v2427 = vpack.c.b16 %v2393, %v2392
        %v2428 = vpack.c.b16 %v2395, %v2394
        %v2429 = vpack.c.b16 %v2397, %v2396
        %v2430 = vpack.c.b16 %v2399, %v2398
        %v2431 = vpack.c.b16 %v2401, %v2400
        %v2432 = vpack.c.b16 %v2403, %v2402
        %v2433 = vpack.c.b16 %v2405, %v2404
        %v2434 = vpack.c.b16 %v2407, %v2406
        %v2435 = vpack.c.b16 %v2409, %v2408
        %v2436 = vpack.c.b16 %v2411, %v2410
        %v2437 = vpack.c.b16 %v2413, %v2412
        %2462 = vmatprep.subr.bf16.mxu0 0
        %2463 = vmatpush1.bf16.msra.mxu0 %v2421
        %2464 = vmatprep.subr.bf16.mxu0 0
        %2465 = vmatpush1.bf16.msra.mxu0 %v2420
        %2466 = vmatprep.subr.bf16.mxu0 0
        %2467 = vmatpush1.bf16.msra.mxu0 %v2419
        %2468 = vmatprep.subr.bf16.mxu0 0
        %2469 = vmatpush1.bf16.msra.mxu0 %v2418
        %2470 = vmatprep.subr.bf16.mxu0 0
        %2471 = vmatpush1.bf16.msra.mxu0 %v2417
        %2472 = vmatprep.subr.bf16.mxu0 0
        %2473 = vmatpush1.bf16.msra.mxu0 %v2416
        %2474 = vmatprep.subr.bf16.mxu0 0
        %2475 = vmatpush1.bf16.msra.mxu0 %v2415
        %2476 = vmatprep.subr.bf16.mxu0 0
        %2477 = vmatpush1.bf16.msra.mxu0 %v2414
        %2478 = vmatprep.subr.bf16.mxu0 0
        %2479 = vmatpush2.bf16.msra.mxu0 %v2429
        %2480 = vmatprep.subr.bf16.mxu0 0
        %2481 = vmatpush2.bf16.msra.mxu0 %v2428
        %2482 = vmatprep.subr.bf16.mxu0 0
        %2483 = vmatpush2.bf16.msra.mxu0 %v2427
        %2484 = vmatprep.subr.bf16.mxu0 0
        %2485 = vmatpush2.bf16.msra.mxu0 %v2426
        %2486 = vmatprep.subr.bf16.mxu0 0
        %2487 = vmatpush2.bf16.msra.mxu0 %v2425
        %2488 = vmatprep.subr.bf16.mxu0 0
        %2489 = vmatpush2.bf16.msra.mxu0 %v2424
        %2490 = vmatprep.subr.bf16.mxu0 0
        %2491 = vmatpush2.bf16.msra.mxu0 %v2423
        %2492 = vmatprep.subr.bf16.mxu0 0
        %2493 = vmatpush2.bf16.msra.mxu0 %v2422
        %2494 = vmatprep.mubr.bf16.mxu0 %v1172
        %2495 = vmatmul.mubr.bf16.gmra.mxu0 %v1826
        %v2496 = vpop.f32.mrf.mxu0
        %v2497 = vadd.f32 0.0, %v2496
        %v2498 = vpop.f32.mrf.mxu0
        %v2499 = vpop.f32.mrf.mxu0
        %v2500 = vadd.f32 0.0, %v2499
        %v2501 = vpop.f32.mrf.mxu0
        %2502 = vmatprep.mubr.bf16.mxu0 %v1173
        %2503 = vmatmul.mubr.bf16.gmra.mxu0 %v1827
        %v2504 = vpop.f32.mrf.mxu0
        %v2505 = vadd.f32 0.0, %v2504
        %v2506 = vpop.f32.mrf.mxu0
        %v2507 = vpop.f32.mrf.mxu0
        %v2508 = vadd.f32 0.0, %v2507
        %v2509 = vpop.f32.mrf.mxu0
        %2510 = vmatprep.mubr.bf16.mxu0 %v1174
        %2511 = vmatmul.mubr.bf16.gmra.mxu0 %v1828
        %v2512 = vpop.f32.mrf.mxu0
        %v2513 = vadd.f32 0.0, %v2512
        %v2514 = vpop.f32.mrf.mxu0
        %v2515 = vpop.f32.mrf.mxu0
        %v2516 = vadd.f32 0.0, %v2515
        %v2517 = vpop.f32.mrf.mxu0
        %2518 = vmatprep.mubr.bf16.mxu0 %v1175
        %2519 = vmatmul.mubr.bf16.gmra.mxu0 %v1829
        %v2520 = vpop.f32.mrf.mxu0
        %v2521 = vadd.f32 0.0, %v2520
        %v2522 = vpop.f32.mrf.mxu0
        %v2523 = vpop.f32.mrf.mxu0
        %v2524 = vadd.f32 0.0, %v2523
        %v2525 = vpop.f32.mrf.mxu0
        %2526 = vmatprep.mubr.bf16.mxu0 %v1176
        %2527 = vmatmul.mubr.bf16.gmra.mxu0 %v1830
        %v2528 = vpop.f32.mrf.mxu0
        %v2529 = vadd.f32 0.0, %v2528
        %v2530 = vpop.f32.mrf.mxu0
        %v2531 = vpop.f32.mrf.mxu0
        %v2532 = vadd.f32 0.0, %v2531
        %v2533 = vpop.f32.mrf.mxu0
        %2534 = vmatprep.mubr.bf16.mxu0 %v1177
        %2535 = vmatmul.mubr.bf16.gmra.mxu0 %v1831
        %v2536 = vpop.f32.mrf.mxu0
        %v2537 = vadd.f32 0.0, %v2536
        %v2538 = vpop.f32.mrf.mxu0
        %v2539 = vpop.f32.mrf.mxu0
        %v2540 = vadd.f32 0.0, %v2539
        %v2541 = vpop.f32.mrf.mxu0
        %2542 = vmatprep.mubr.bf16.mxu0 %v1178
        %2543 = vmatmul.mubr.bf16.gmra.mxu0 %v1832
        %v2544 = vpop.f32.mrf.mxu0
        %v2545 = vadd.f32 0.0, %v2544
        %v2546 = vpop.f32.mrf.mxu0
        %v2547 = vpop.f32.mrf.mxu0
        %v2548 = vadd.f32 0.0, %v2547
        %v2549 = vpop.f32.mrf.mxu0
        %2550 = vmatprep.mubr.bf16.mxu0 %v1179
        %2551 = vmatmul.mubr.bf16.gmra.mxu0 %v1833
        %v2552 = vpop.f32.mrf.mxu0
        %v2553 = vadd.f32 0.0, %v2552
        %v2554 = vpop.f32.mrf.mxu0
        %v2555 = vpop.f32.mrf.mxu0
        %v2556 = vadd.f32 0.0, %v2555
        %v2557 = vpop.f32.mrf.mxu0
        %2558 = vmatprep.mubr.bf16.mxu0 %v1180
        %2559 = vmatmul.mubr.bf16.gmra.mxu0 %v1834
        %v2560 = vpop.f32.mrf.mxu0
        %v2561 = vadd.f32 0.0, %v2560
        %v2562 = vpop.f32.mrf.mxu0
        %v2563 = vpop.f32.mrf.mxu0
        %v2564 = vadd.f32 0.0, %v2563
        %v2565 = vpop.f32.mrf.mxu0
        %2566 = vmatprep.mubr.bf16.mxu0 %v1181
        %2567 = vmatmul.mubr.bf16.gmra.mxu0 %v1835
        %v2568 = vpop.f32.mrf.mxu0
        %v2569 = vadd.f32 0.0, %v2568
        %v2570 = vpop.f32.mrf.mxu0
        %v2571 = vpop.f32.mrf.mxu0
        %v2572 = vadd.f32 0.0, %v2571
        %v2573 = vpop.f32.mrf.mxu0
        %2574 = vmatprep.mubr.bf16.mxu0 %v1182
        %2575 = vmatmul.mubr.bf16.gmra.mxu0 %v1836
        %v2576 = vpop.f32.mrf.mxu0
        %v2577 = vadd.f32 0.0, %v2576
        %v2578 = vpop.f32.mrf.mxu0
        %v2579 = vpop.f32.mrf.mxu0
        %v2580 = vadd.f32 0.0, %v2579
        %v2581 = vpop.f32.mrf.mxu0
        %2582 = vmatprep.mubr.bf16.mxu0 %v1183
        %2583 = vmatmul.mubr.bf16.gmra.mxu0 %v1837
        %v2584 = vpop.f32.mrf.mxu0
        %v2585 = vadd.f32 0.0, %v2584
        %v2586 = vpop.f32.mrf.mxu0
        %v2587 = vpop.f32.mrf.mxu0
        %v2588 = vadd.f32 0.0, %v2587
        %v2589 = vpop.f32.mrf.mxu0
        %2590 = vmatprep.mubr.bf16.mxu0 %v1184
        %2591 = vmatmul.mubr.bf16.gmra.mxu0 %v1838
        %v2592 = vpop.f32.mrf.mxu0
        %v2593 = vadd.f32 0.0, %v2592
        %v2594 = vpop.f32.mrf.mxu0
        %v2595 = vpop.f32.mrf.mxu0
        %v2596 = vadd.f32 0.0, %v2595
        %v2597 = vpop.f32.mrf.mxu0
        %2598 = vmatprep.mubr.bf16.mxu0 %v1185
        %2599 = vmatmul.mubr.bf16.gmra.mxu0 %v1839
        %v2600 = vpop.f32.mrf.mxu0
        %v2601 = vadd.f32 0.0, %v2600
        %v2602 = vpop.f32.mrf.mxu0
        %v2603 = vpop.f32.mrf.mxu0
        %v2604 = vadd.f32 0.0, %v2603
        %v2605 = vpop.f32.mrf.mxu0
        %2606 = vmatprep.mubr.bf16.mxu0 %v1186
        %2607 = vmatmul.mubr.bf16.gmra.mxu0 %v1840
        %v2608 = vpop.f32.mrf.mxu0
        %v2609 = vadd.f32 0.0, %v2608
        %v2610 = vpop.f32.mrf.mxu0
        %v2611 = vpop.f32.mrf.mxu0
        %v2612 = vadd.f32 0.0, %v2611
        %v2613 = vpop.f32.mrf.mxu0
        %2614 = vmatprep.mubr.bf16.mxu0 %v1187
        %2615 = vmatmul.mubr.bf16.gmra.mxu0 %v1841
        %v2616 = vpop.f32.mrf.mxu0
        %v2617 = vadd.f32 0.0, %v2616
        %v2618 = vpop.f32.mrf.mxu0
        %v2619 = vpop.f32.mrf.mxu0
        %v2620 = vadd.f32 0.0, %v2619
        %v2621 = vpop.f32.mrf.mxu0
        %2622 = vdwg.mxu0
        %2623 = vmatprep.subr.bf16.mxu0 0
        %2624 = vmatpush1.bf16.msra.mxu0 %v2437
        %2625 = vmatprep.subr.bf16.mxu0 0
        %2626 = vmatpush1.bf16.msra.mxu0 %v2436
        %2627 = vmatprep.subr.bf16.mxu0 0
        %2628 = vmatpush1.bf16.msra.mxu0 %v2435
        %2629 = vmatprep.subr.bf16.mxu0 0
        %2630 = vmatpush1.bf16.msra.mxu0 %v2434
        %2631 = vmatprep.subr.bf16.mxu0 0
        %2632 = vmatpush1.bf16.msra.mxu0 %v2433
        %2633 = vmatprep.subr.bf16.mxu0 0
        %2634 = vmatpush1.bf16.msra.mxu0 %v2432
        %2635 = vmatprep.subr.bf16.mxu0 0
        %2636 = vmatpush1.bf16.msra.mxu0 %v2431
        %2637 = vmatprep.subr.bf16.mxu0 0
        %2638 = vmatpush1.bf16.msra.mxu0 %v2430
        %2639 = vmatprep.subr.bf16.mxu0 0
        %2640 = vmatpush2.bf16.msra.mxu0 0
        %2641 = vmatprep.subr.bf16.mxu0 0
        %2642 = vmatpush2.bf16.msra.mxu0 0
        %2643 = vmatprep.subr.bf16.mxu0 0
        %2644 = vmatpush2.bf16.msra.mxu0 0
        %2645 = vmatprep.subr.bf16.mxu0 0
        %2646 = vmatpush2.bf16.msra.mxu0 0
        %2647 = vmatprep.subr.bf16.mxu0 0
        %2648 = vmatpush2.bf16.msra.mxu0 0
        %2649 = vmatprep.subr.bf16.mxu0 0
        %2650 = vmatpush2.bf16.msra.mxu0 0
        %2651 = vmatprep.subr.bf16.mxu0 0
        %2652 = vmatpush2.bf16.msra.mxu0 0
        %2653 = vmatprep.subr.bf16.mxu0 0
        %2654 = vmatpush2.bf16.msra.mxu0 0
        %2655 = vmatprep.mubr.bf16.mxu0 0
        %2656 = vmatmul.mubr.bf16.gmra.mxu0 %v2204
        %v2657 = vpop.f32.mrf.mxu0
        %v2658 = vadd.f32 %v2497, %v2657
        %v2659 = vpop.f32.mrf.mxu0
        %v2660 = vpop.f32.mrf.mxu0
        %v2661 = vadd.f32 %v2500, %v2660
        %v2662 = vpop.f32.mrf.mxu0
        %2663 = vmatprep.mubr.bf16.mxu0 0
        %2664 = vmatmul.mubr.bf16.gmra.mxu0 %v2205
        %v2665 = vpop.f32.mrf.mxu0
        %v2666 = vadd.f32 %v2505, %v2665
        %v2667 = vpop.f32.mrf.mxu0
        %v2668 = vpop.f32.mrf.mxu0
        %v2669 = vadd.f32 %v2508, %v2668
        %v2670 = vpop.f32.mrf.mxu0
        %2671 = vmatprep.mubr.bf16.mxu0 0
        %2672 = vmatmul.mubr.bf16.gmra.mxu0 %v2206
        %v2673 = vpop.f32.mrf.mxu0
        %v2674 = vadd.f32 %v2513, %v2673
        %v2675 = vpop.f32.mrf.mxu0
        %v2676 = vpop.f32.mrf.mxu0
        %v2677 = vadd.f32 %v2516, %v2676
        %v2678 = vpop.f32.mrf.mxu0
        %2679 = vmatprep.mubr.bf16.mxu0 0
        %2680 = vmatmul.mubr.bf16.gmra.mxu0 %v2207
        %v2681 = vpop.f32.mrf.mxu0
        %v2682 = vadd.f32 %v2521, %v2681
        %v2683 = vpop.f32.mrf.mxu0
        %v2684 = vpop.f32.mrf.mxu0
        %v2685 = vadd.f32 %v2524, %v2684
        %v2686 = vpop.f32.mrf.mxu0
        %2687 = vmatprep.mubr.bf16.mxu0 0
        %2688 = vmatmul.mubr.bf16.gmra.mxu0 %v2208
        %v2689 = vpop.f32.mrf.mxu0
        %v2690 = vadd.f32 %v2529, %v2689
        %v2691 = vpop.f32.mrf.mxu0
        %v2692 = vpop.f32.mrf.mxu0
        %v2693 = vadd.f32 %v2532, %v2692
        %v2694 = vpop.f32.mrf.mxu0
        %2695 = vmatprep.mubr.bf16.mxu0 0
        %2696 = vmatmul.mubr.bf16.gmra.mxu0 %v2209
        %v2697 = vpop.f32.mrf.mxu0
        %v2698 = vadd.f32 %v2537, %v2697
        %v2699 = vpop.f32.mrf.mxu0
        %v2700 = vpop.f32.mrf.mxu0
        %v2701 = vadd.f32 %v2540, %v2700
        %v2702 = vpop.f32.mrf.mxu0
        %2703 = vmatprep.mubr.bf16.mxu0 0
        %2704 = vmatmul.mubr.bf16.gmra.mxu0 %v2210
        %v2705 = vpop.f32.mrf.mxu0
        %v2706 = vadd.f32 %v2545, %v2705
        %v2707 = vpop.f32.mrf.mxu0
        %v2708 = vpop.f32.mrf.mxu0
        %v2709 = vadd.f32 %v2548, %v2708
        %v2710 = vpop.f32.mrf.mxu0
        %2711 = vmatprep.mubr.bf16.mxu0 0
        %2712 = vmatmul.mubr.bf16.gmra.mxu0 %v2211
        %v2713 = vpop.f32.mrf.mxu0
        %v2714 = vadd.f32 %v2553, %v2713
        %v2715 = vpop.f32.mrf.mxu0
        %v2716 = vpop.f32.mrf.mxu0
        %v2717 = vadd.f32 %v2556, %v2716
        %v2718 = vpop.f32.mrf.mxu0
        %2719 = vmatprep.mubr.bf16.mxu0 0
        %2720 = vmatmul.mubr.bf16.gmra.mxu0 %v2212
        %v2721 = vpop.f32.mrf.mxu0
        %v2722 = vadd.f32 %v2561, %v2721
        %v2723 = vpop.f32.mrf.mxu0
        %v2724 = vpop.f32.mrf.mxu0
        %v2725 = vadd.f32 %v2564, %v2724
        %v2726 = vpop.f32.mrf.mxu0
        %2727 = vmatprep.mubr.bf16.mxu0 0
        %2728 = vmatmul.mubr.bf16.gmra.mxu0 %v2213
        %v2729 = vpop.f32.mrf.mxu0
        %v2730 = vadd.f32 %v2569, %v2729
        %v2731 = vpop.f32.mrf.mxu0
        %v2732 = vpop.f32.mrf.mxu0
        %v2733 = vadd.f32 %v2572, %v2732
        %v2734 = vpop.f32.mrf.mxu0
        %2735 = vmatprep.mubr.bf16.mxu0 0
        %2736 = vmatmul.mubr.bf16.gmra.mxu0 %v2214
        %v2737 = vpop.f32.mrf.mxu0
        %v2738 = vadd.f32 %v2577, %v2737
        %v2739 = vpop.f32.mrf.mxu0
        %v2740 = vpop.f32.mrf.mxu0
        %v2741 = vadd.f32 %v2580, %v2740
        %v2742 = vpop.f32.mrf.mxu0
        %2743 = vmatprep.mubr.bf16.mxu0 0
        %2744 = vmatmul.mubr.bf16.gmra.mxu0 %v2215
        %v2745 = vpop.f32.mrf.mxu0
        %v2746 = vadd.f32 %v2585, %v2745
        %v2747 = vpop.f32.mrf.mxu0
        %v2748 = vpop.f32.mrf.mxu0
        %v2749 = vadd.f32 %v2588, %v2748
        %v2750 = vpop.f32.mrf.mxu0
        %2751 = vmatprep.mubr.bf16.mxu0 0
        %2752 = vmatmul.mubr.bf16.gmra.mxu0 %v2216
        %v2753 = vpop.f32.mrf.mxu0
        %v2754 = vadd.f32 %v2593, %v2753
        %v2755 = vpop.f32.mrf.mxu0
        %v2756 = vpop.f32.mrf.mxu0
        %v2757 = vadd.f32 %v2596, %v2756
        %v2758 = vpop.f32.mrf.mxu0
        %2759 = vmatprep.mubr.bf16.mxu0 0
        %2760 = vmatmul.mubr.bf16.gmra.mxu0 %v2217
        %v2761 = vpop.f32.mrf.mxu0
        %v2762 = vadd.f32 %v2601, %v2761
        %v2763 = vpop.f32.mrf.mxu0
        %v2764 = vpop.f32.mrf.mxu0
        %v2765 = vadd.f32 %v2604, %v2764
        %v2766 = vpop.f32.mrf.mxu0
        %2767 = vmatprep.mubr.bf16.mxu0 0
        %2768 = vmatmul.mubr.bf16.gmra.mxu0 %v2218
        %v2769 = vpop.f32.mrf.mxu0
        %v2770 = vadd.f32 %v2609, %v2769
        %v2771 = vpop.f32.mrf.mxu0
        %v2772 = vpop.f32.mrf.mxu0
        %v2773 = vadd.f32 %v2612, %v2772
        %v2774 = vpop.f32.mrf.mxu0
        %2775 = vmatprep.mubr.bf16.mxu0 0
        %2776 = vmatmul.mubr.bf16.gmra.mxu0 %v2219
        %v2777 = vpop.f32.mrf.mxu0
        %v2778 = vadd.f32 %v2617, %v2777
        %v2779 = vpop.f32.mrf.mxu0
        %v2780 = vpop.f32.mrf.mxu0
        %v2781 = vadd.f32 %v2620, %v2780
        %v2782 = vpop.f32.mrf.mxu0
        %2783 = vdwg.mxu0
        %v2832 = vunpack.c.l.b16 %v2221
        %v2833 = vunpack.c.l.b16 %v2222
        %v2834 = vunpack.c.l.b16 %v2223
        %v2835 = vunpack.c.l.b16 %v2224
        %v2836 = vunpack.c.l.b16 %v2225
        %v2837 = vunpack.c.l.b16 %v2226
        %v2838 = vunpack.c.l.b16 %v2227
        %v2839 = vunpack.c.l.b16 %v2228
        %v2840 = vunpack.c.l.b16 %v2229
        %v2841 = vunpack.c.l.b16 %v2230
        %v2842 = vunpack.c.l.b16 %v2231
        %v2843 = vunpack.c.l.b16 %v2232
        %v2844 = vunpack.c.l.b16 %v2233
        %v2845 = vunpack.c.l.b16 %v2234
        %v2846 = vunpack.c.l.b16 %v2235
        %v2847 = vunpack.c.l.b16 %v2236
        %v2848 = vunpack.c.l.b16 %v2237
        %v2849 = vunpack.c.l.b16 %v2238
        %v2850 = vunpack.c.l.b16 %v2239
        %v2851 = vunpack.c.l.b16 %v2240
        %v2852 = vunpack.c.l.b16 %v2241
        %v2853 = vunpack.c.l.b16 %v2242
        %v2854 = vunpack.c.l.b16 %v2243
        %v2855 = vunpack.c.l.b16 %v2244
        %v2856 = vunpack.c.l.b16 %v2245
        %v2857 = vunpack.c.l.b16 %v2246
        %v2858 = vunpack.c.l.b16 %v2247
        %v2859 = vunpack.c.l.b16 %v2248
        %v2860 = vunpack.c.l.b16 %v2249
        %v2861 = vunpack.c.l.b16 %v2250
        %v2862 = vunpack.c.l.b16 %v2251
        %v2863 = vunpack.c.l.b16 %v2252
        %v2864 = vunpack.c.l.b16 %v2253
        %v2865 = vunpack.c.l.b16 %v2254
        %v2866 = vunpack.c.l.b16 %v2255
        %v2867 = vunpack.c.l.b16 %v2256
        %v2868 = vunpack.c.l.b16 %v2257
        %v2869 = vunpack.c.l.b16 %v2258
        %v2870 = vunpack.c.l.b16 %v2259
        %v2871 = vunpack.c.l.b16 %v2260
        %v2872 = vunpack.c.l.b16 %v2261
        %v2873 = vunpack.c.l.b16 %v2262
        %v2874 = vunpack.c.l.b16 %v2263
        %v2875 = vunpack.c.l.b16 %v2264
        %v2876 = vunpack.c.l.b16 %v2265
        %v2877 = vunpack.c.l.b16 %v2266
        %v2878 = vunpack.c.l.b16 %v2267
        %v2879 = vunpack.c.l.b16 %v2268
        %v2880 = vpack.c.b16 %v2833, %v2832
        %v2881 = vpack.c.b16 %v2835, %v2834
        %v2882 = vpack.c.b16 %v2837, %v2836
        %v2883 = vpack.c.b16 %v2839, %v2838
        %v2884 = vpack.c.b16 %v2841, %v2840
        %v2885 = vpack.c.b16 %v2843, %v2842
        %v2886 = vpack.c.b16 %v2845, %v2844
        %v2887 = vpack.c.b16 %v2847, %v2846
        %v2888 = vpack.c.b16 %v2849, %v2848
        %v2889 = vpack.c.b16 %v2851, %v2850
        %v2890 = vpack.c.b16 %v2853, %v2852
        %v2891 = vpack.c.b16 %v2855, %v2854
        %v2892 = vpack.c.b16 %v2857, %v2856
        %v2893 = vpack.c.b16 %v2859, %v2858
        %v2894 = vpack.c.b16 %v2861, %v2860
        %v2895 = vpack.c.b16 %v2863, %v2862
        %v2896 = vpack.c.b16 %v2865, %v2864
        %v2897 = vpack.c.b16 %v2867, %v2866
        %v2898 = vpack.c.b16 %v2869, %v2868
        %v2899 = vpack.c.b16 %v2871, %v2870
        %v2900 = vpack.c.b16 %v2873, %v2872
        %v2901 = vpack.c.b16 %v2875, %v2874
        %v2902 = vpack.c.b16 %v2877, %v2876
        %v2903 = vpack.c.b16 %v2879, %v2878
        %2928 = vmatprep.subr.bf16.mxu0 0
        %2929 = vmatpush1.bf16.msra.mxu0 %v2887
        %2930 = vmatprep.subr.bf16.mxu0 0
        %2931 = vmatpush1.bf16.msra.mxu0 %v2886
        %2932 = vmatprep.subr.bf16.mxu0 0
        %2933 = vmatpush1.bf16.msra.mxu0 %v2885
        %2934 = vmatprep.subr.bf16.mxu0 0
        %2935 = vmatpush1.bf16.msra.mxu0 %v2884
        %2936 = vmatprep.subr.bf16.mxu0 0
        %2937 = vmatpush1.bf16.msra.mxu0 %v2883
        %2938 = vmatprep.subr.bf16.mxu0 0
        %2939 = vmatpush1.bf16.msra.mxu0 %v2882
        %2940 = vmatprep.subr.bf16.mxu0 0
        %2941 = vmatpush1.bf16.msra.mxu0 %v2881
        %2942 = vmatprep.subr.bf16.mxu0 0
        %2943 = vmatpush1.bf16.msra.mxu0 %v2880
        %2944 = vmatprep.subr.bf16.mxu0 0
        %2945 = vmatpush2.bf16.msra.mxu0 %v2895
        %2946 = vmatprep.subr.bf16.mxu0 0
        %2947 = vmatpush2.bf16.msra.mxu0 %v2894
        %2948 = vmatprep.subr.bf16.mxu0 0
        %2949 = vmatpush2.bf16.msra.mxu0 %v2893
        %2950 = vmatprep.subr.bf16.mxu0 0
        %2951 = vmatpush2.bf16.msra.mxu0 %v2892
        %2952 = vmatprep.subr.bf16.mxu0 0
        %2953 = vmatpush2.bf16.msra.mxu0 %v2891
        %2954 = vmatprep.subr.bf16.mxu0 0
        %2955 = vmatpush2.bf16.msra.mxu0 %v2890
        %2956 = vmatprep.subr.bf16.mxu0 0
        %2957 = vmatpush2.bf16.msra.mxu0 %v2889
        %2958 = vmatprep.subr.bf16.mxu0 0
        %2959 = vmatpush2.bf16.msra.mxu0 %v2888
        %2960 = vmatprep.mubr.bf16.mxu0 %v1171
        %2961 = vmatmul.mubr.bf16.gmra.mxu0 %v1825
        %v2962 = vpop.f32.mrf.mxu0
        %v2963 = vadd.f32 %v2658, %v2962
        %v2964 = vpop.f32.mrf.mxu0
        %v2965 = vpop.f32.mrf.mxu0
        %v2966 = vadd.f32 %v2661, %v2965
        %v2967 = vpop.f32.mrf.mxu0
        %2968 = vmatprep.mubr.bf16.mxu0 %v1172
        %2969 = vmatmul.mubr.bf16.gmra.mxu0 %v1826
        %v2970 = vpop.f32.mrf.mxu0
        %v2971 = vadd.f32 %v2666, %v2970
        %v2972 = vpop.f32.mrf.mxu0
        %v2973 = vpop.f32.mrf.mxu0
        %v2974 = vadd.f32 %v2669, %v2973
        %v2975 = vpop.f32.mrf.mxu0
        %2976 = vmatprep.mubr.bf16.mxu0 %v1173
        %2977 = vmatmul.mubr.bf16.gmra.mxu0 %v1827
        %v2978 = vpop.f32.mrf.mxu0
        %v2979 = vadd.f32 %v2674, %v2978
        %v2980 = vpop.f32.mrf.mxu0
        %v2981 = vpop.f32.mrf.mxu0
        %v2982 = vadd.f32 %v2677, %v2981
        %v2983 = vpop.f32.mrf.mxu0
        %2984 = vmatprep.mubr.bf16.mxu0 %v1174
        %2985 = vmatmul.mubr.bf16.gmra.mxu0 %v1828
        %v2986 = vpop.f32.mrf.mxu0
        %v2987 = vadd.f32 %v2682, %v2986
        %v2988 = vpop.f32.mrf.mxu0
        %v2989 = vpop.f32.mrf.mxu0
        %v2990 = vadd.f32 %v2685, %v2989
        %v2991 = vpop.f32.mrf.mxu0
        %2992 = vmatprep.mubr.bf16.mxu0 %v1175
        %2993 = vmatmul.mubr.bf16.gmra.mxu0 %v1829
        %v2994 = vpop.f32.mrf.mxu0
        %v2995 = vadd.f32 %v2690, %v2994
        %v2996 = vpop.f32.mrf.mxu0
        %v2997 = vpop.f32.mrf.mxu0
        %v2998 = vadd.f32 %v2693, %v2997
        %v2999 = vpop.f32.mrf.mxu0
        %3000 = vmatprep.mubr.bf16.mxu0 %v1176
        %3001 = vmatmul.mubr.bf16.gmra.mxu0 %v1830
        %v3002 = vpop.f32.mrf.mxu0
        %v3003 = vadd.f32 %v2698, %v3002
        %v3004 = vpop.f32.mrf.mxu0
        %v3005 = vpop.f32.mrf.mxu0
        %v3006 = vadd.f32 %v2701, %v3005
        %v3007 = vpop.f32.mrf.mxu0
        %3008 = vmatprep.mubr.bf16.mxu0 %v1177
        %3009 = vmatmul.mubr.bf16.gmra.mxu0 %v1831
        %v3010 = vpop.f32.mrf.mxu0
        %v3011 = vadd.f32 %v2706, %v3010
        %v3012 = vpop.f32.mrf.mxu0
        %v3013 = vpop.f32.mrf.mxu0
        %v3014 = vadd.f32 %v2709, %v3013
        %v3015 = vpop.f32.mrf.mxu0
        %3016 = vmatprep.mubr.bf16.mxu0 %v1178
        %3017 = vmatmul.mubr.bf16.gmra.mxu0 %v1832
        %v3018 = vpop.f32.mrf.mxu0
        %v3019 = vadd.f32 %v2714, %v3018
        %v3020 = vpop.f32.mrf.mxu0
        %v3021 = vpop.f32.mrf.mxu0
        %v3022 = vadd.f32 %v2717, %v3021
        %v3023 = vpop.f32.mrf.mxu0
        %3024 = vmatprep.mubr.bf16.mxu0 %v1179
        %3025 = vmatmul.mubr.bf16.gmra.mxu0 %v1833
        %v3026 = vpop.f32.mrf.mxu0
        %v3027 = vadd.f32 %v2722, %v3026
        %v3028 = vpop.f32.mrf.mxu0
        %v3029 = vpop.f32.mrf.mxu0
        %v3030 = vadd.f32 %v2725, %v3029
        %v3031 = vpop.f32.mrf.mxu0
        %3032 = vmatprep.mubr.bf16.mxu0 %v1180
        %3033 = vmatmul.mubr.bf16.gmra.mxu0 %v1834
        %v3034 = vpop.f32.mrf.mxu0
        %v3035 = vadd.f32 %v2730, %v3034
        %v3036 = vpop.f32.mrf.mxu0
        %v3037 = vpop.f32.mrf.mxu0
        %v3038 = vadd.f32 %v2733, %v3037
        %v3039 = vpop.f32.mrf.mxu0
        %3040 = vmatprep.mubr.bf16.mxu0 %v1181
        %3041 = vmatmul.mubr.bf16.gmra.mxu0 %v1835
        %v3042 = vpop.f32.mrf.mxu0
        %v3043 = vadd.f32 %v2738, %v3042
        %v3044 = vpop.f32.mrf.mxu0
        %v3045 = vpop.f32.mrf.mxu0
        %v3046 = vadd.f32 %v2741, %v3045
        %v3047 = vpop.f32.mrf.mxu0
        %3048 = vmatprep.mubr.bf16.mxu0 %v1182
        %3049 = vmatmul.mubr.bf16.gmra.mxu0 %v1836
        %v3050 = vpop.f32.mrf.mxu0
        %v3051 = vadd.f32 %v2746, %v3050
        %v3052 = vpop.f32.mrf.mxu0
        %v3053 = vpop.f32.mrf.mxu0
        %v3054 = vadd.f32 %v2749, %v3053
        %v3055 = vpop.f32.mrf.mxu0
        %3056 = vmatprep.mubr.bf16.mxu0 %v1183
        %3057 = vmatmul.mubr.bf16.gmra.mxu0 %v1837
        %v3058 = vpop.f32.mrf.mxu0
        %v3059 = vadd.f32 %v2754, %v3058
        %v3060 = vpop.f32.mrf.mxu0
        %v3061 = vpop.f32.mrf.mxu0
        %v3062 = vadd.f32 %v2757, %v3061
        %v3063 = vpop.f32.mrf.mxu0
        %3064 = vmatprep.mubr.bf16.mxu0 %v1184
        %3065 = vmatmul.mubr.bf16.gmra.mxu0 %v1838
        %v3066 = vpop.f32.mrf.mxu0
        %v3067 = vadd.f32 %v2762, %v3066
        %v3068 = vpop.f32.mrf.mxu0
        %v3069 = vpop.f32.mrf.mxu0
        %v3070 = vadd.f32 %v2765, %v3069
        %v3071 = vpop.f32.mrf.mxu0
        %3072 = vmatprep.mubr.bf16.mxu0 %v1185
        %3073 = vmatmul.mubr.bf16.gmra.mxu0 %v1839
        %v3074 = vpop.f32.mrf.mxu0
        %v3075 = vadd.f32 %v2770, %v3074
        %v3076 = vpop.f32.mrf.mxu0
        %v3077 = vpop.f32.mrf.mxu0
        %v3078 = vadd.f32 %v2773, %v3077
        %v3079 = vpop.f32.mrf.mxu0
        %3080 = vmatprep.mubr.bf16.mxu0 %v1186
        %3081 = vmatmul.mubr.bf16.gmra.mxu0 %v1840
        %v3082 = vpop.f32.mrf.mxu0
        %v3083 = vadd.f32 %v2778, %v3082
        %v3084 = vpop.f32.mrf.mxu0
        %v3085 = vpop.f32.mrf.mxu0
        %v3086 = vadd.f32 %v2781, %v3085
        %v3087 = vpop.f32.mrf.mxu0
        %3088 = vdwg.mxu0
        %3089 = vmatprep.subr.bf16.mxu0 0
        %3090 = vmatpush1.bf16.msra.mxu0 %v2903
        %3091 = vmatprep.subr.bf16.mxu0 0
        %3092 = vmatpush1.bf16.msra.mxu0 %v2902
        %3093 = vmatprep.subr.bf16.mxu0 0
        %3094 = vmatpush1.bf16.msra.mxu0 %v2901
        %3095 = vmatprep.subr.bf16.mxu0 0
        %3096 = vmatpush1.bf16.msra.mxu0 %v2900
        %3097 = vmatprep.subr.bf16.mxu0 0
        %3098 = vmatpush1.bf16.msra.mxu0 %v2899
        %3099 = vmatprep.subr.bf16.mxu0 0
        %3100 = vmatpush1.bf16.msra.mxu0 %v2898
        %3101 = vmatprep.subr.bf16.mxu0 0
        %3102 = vmatpush1.bf16.msra.mxu0 %v2897
        %3103 = vmatprep.subr.bf16.mxu0 0
        %3104 = vmatpush1.bf16.msra.mxu0 %v2896
        %3105 = vmatprep.subr.bf16.mxu0 0
        %3106 = vmatpush2.bf16.msra.mxu0 0
        %3107 = vmatprep.subr.bf16.mxu0 0
        %3108 = vmatpush2.bf16.msra.mxu0 0
        %3109 = vmatprep.subr.bf16.mxu0 0
        %3110 = vmatpush2.bf16.msra.mxu0 0
        %3111 = vmatprep.subr.bf16.mxu0 0
        %3112 = vmatpush2.bf16.msra.mxu0 0
        %3113 = vmatprep.subr.bf16.mxu0 0
        %3114 = vmatpush2.bf16.msra.mxu0 0
        %3115 = vmatprep.subr.bf16.mxu0 0
        %3116 = vmatpush2.bf16.msra.mxu0 0
        %3117 = vmatprep.subr.bf16.mxu0 0
        %3118 = vmatpush2.bf16.msra.mxu0 0
        %3119 = vmatprep.subr.bf16.mxu0 0
        %3120 = vmatpush2.bf16.msra.mxu0 0
        %3121 = vmatprep.mubr.bf16.mxu0 0
        %3122 = vmatmul.mubr.bf16.gmra.mxu0 %v2203
        %v3123 = vpop.f32.mrf.mxu0
        %v3124 = vadd.f32 %v2963, %v3123
        %v3125 = vpop.f32.mrf.mxu0
        %v3126 = vpop.f32.mrf.mxu0
        %v3127 = vadd.f32 %v2966, %v3126
        %v3128 = vpop.f32.mrf.mxu0
        %3129 = vmatprep.mubr.bf16.mxu0 0
        %3130 = vmatmul.mubr.bf16.gmra.mxu0 %v2204
        %v3131 = vpop.f32.mrf.mxu0
        %v3132 = vadd.f32 %v2971, %v3131
        %v3133 = vpop.f32.mrf.mxu0
        %v3134 = vpop.f32.mrf.mxu0
        %v3135 = vadd.f32 %v2974, %v3134
        %v3136 = vpop.f32.mrf.mxu0
        %3137 = vmatprep.mubr.bf16.mxu0 0
        %3138 = vmatmul.mubr.bf16.gmra.mxu0 %v2205
        %v3139 = vpop.f32.mrf.mxu0
        %v3140 = vadd.f32 %v2979, %v3139
        %v3141 = vpop.f32.mrf.mxu0
        %v3142 = vpop.f32.mrf.mxu0
        %v3143 = vadd.f32 %v2982, %v3142
        %v3144 = vpop.f32.mrf.mxu0
        %3145 = vmatprep.mubr.bf16.mxu0 0
        %3146 = vmatmul.mubr.bf16.gmra.mxu0 %v2206
        %v3147 = vpop.f32.mrf.mxu0
        %v3148 = vadd.f32 %v2987, %v3147
        %v3149 = vpop.f32.mrf.mxu0
        %v3150 = vpop.f32.mrf.mxu0
        %v3151 = vadd.f32 %v2990, %v3150
        %v3152 = vpop.f32.mrf.mxu0
        %3153 = vmatprep.mubr.bf16.mxu0 0
        %3154 = vmatmul.mubr.bf16.gmra.mxu0 %v2207
        %v3155 = vpop.f32.mrf.mxu0
        %v3156 = vadd.f32 %v2995, %v3155
        %v3157 = vpop.f32.mrf.mxu0
        %v3158 = vpop.f32.mrf.mxu0
        %v3159 = vadd.f32 %v2998, %v3158
        %v3160 = vpop.f32.mrf.mxu0
        %3161 = vmatprep.mubr.bf16.mxu0 0
        %3162 = vmatmul.mubr.bf16.gmra.mxu0 %v2208
        %v3163 = vpop.f32.mrf.mxu0
        %v3164 = vadd.f32 %v3003, %v3163
        %v3165 = vpop.f32.mrf.mxu0
        %v3166 = vpop.f32.mrf.mxu0
        %v3167 = vadd.f32 %v3006, %v3166
        %v3168 = vpop.f32.mrf.mxu0
        %3169 = vmatprep.mubr.bf16.mxu0 0
        %3170 = vmatmul.mubr.bf16.gmra.mxu0 %v2209
        %v3171 = vpop.f32.mrf.mxu0
        %v3172 = vadd.f32 %v3011, %v3171
        %v3173 = vpop.f32.mrf.mxu0
        %v3174 = vpop.f32.mrf.mxu0
        %v3175 = vadd.f32 %v3014, %v3174
        %v3176 = vpop.f32.mrf.mxu0
        %3177 = vmatprep.mubr.bf16.mxu0 0
        %3178 = vmatmul.mubr.bf16.gmra.mxu0 %v2210
        %v3179 = vpop.f32.mrf.mxu0
        %v3180 = vadd.f32 %v3019, %v3179
        %v3181 = vpop.f32.mrf.mxu0
        %v3182 = vpop.f32.mrf.mxu0
        %v3183 = vadd.f32 %v3022, %v3182
        %v3184 = vpop.f32.mrf.mxu0
        %3185 = vmatprep.mubr.bf16.mxu0 0
        %3186 = vmatmul.mubr.bf16.gmra.mxu0 %v2211
        %v3187 = vpop.f32.mrf.mxu0
        %v3188 = vadd.f32 %v3027, %v3187
        %v3189 = vpop.f32.mrf.mxu0
        %v3190 = vpop.f32.mrf.mxu0
        %v3191 = vadd.f32 %v3030, %v3190
        %v3192 = vpop.f32.mrf.mxu0
        %3193 = vmatprep.mubr.bf16.mxu0 0
        %3194 = vmatmul.mubr.bf16.gmra.mxu0 %v2212
        %v3195 = vpop.f32.mrf.mxu0
        %v3196 = vadd.f32 %v3035, %v3195
        %v3197 = vpop.f32.mrf.mxu0
        %v3198 = vpop.f32.mrf.mxu0
        %v3199 = vadd.f32 %v3038, %v3198
        %v3200 = vpop.f32.mrf.mxu0
        %3201 = vmatprep.mubr.bf16.mxu0 0
        %3202 = vmatmul.mubr.bf16.gmra.mxu0 %v2213
        %v3203 = vpop.f32.mrf.mxu0
        %v3204 = vadd.f32 %v3043, %v3203
        %v3205 = vpop.f32.mrf.mxu0
        %v3206 = vpop.f32.mrf.mxu0
        %v3207 = vadd.f32 %v3046, %v3206
        %v3208 = vpop.f32.mrf.mxu0
        %3209 = vmatprep.mubr.bf16.mxu0 0
        %3210 = vmatmul.mubr.bf16.gmra.mxu0 %v2214
        %v3211 = vpop.f32.mrf.mxu0
        %v3212 = vadd.f32 %v3051, %v3211
        %v3213 = vpop.f32.mrf.mxu0
        %v3214 = vpop.f32.mrf.mxu0
        %v3215 = vadd.f32 %v3054, %v3214
        %v3216 = vpop.f32.mrf.mxu0
        %3217 = vmatprep.mubr.bf16.mxu0 0
        %3218 = vmatmul.mubr.bf16.gmra.mxu0 %v2215
        %v3219 = vpop.f32.mrf.mxu0
        %v3220 = vadd.f32 %v3059, %v3219
        %v3221 = vpop.f32.mrf.mxu0
        %v3222 = vpop.f32.mrf.mxu0
        %v3223 = vadd.f32 %v3062, %v3222
        %v3224 = vpop.f32.mrf.mxu0
        %3225 = vmatprep.mubr.bf16.mxu0 0
        %3226 = vmatmul.mubr.bf16.gmra.mxu0 %v2216
        %v3227 = vpop.f32.mrf.mxu0
        %v3228 = vadd.f32 %v3067, %v3227
        %v3229 = vpop.f32.mrf.mxu0
        %v3230 = vpop.f32.mrf.mxu0
        %v3231 = vadd.f32 %v3070, %v3230
        %v3232 = vpop.f32.mrf.mxu0
        %3233 = vmatprep.mubr.bf16.mxu0 0
        %3234 = vmatmul.mubr.bf16.gmra.mxu0 %v2217
        %v3235 = vpop.f32.mrf.mxu0
        %v3236 = vadd.f32 %v3075, %v3235
        %v3237 = vpop.f32.mrf.mxu0
        %v3238 = vpop.f32.mrf.mxu0
        %v3239 = vadd.f32 %v3078, %v3238
        %v3240 = vpop.f32.mrf.mxu0
        %3241 = vmatprep.mubr.bf16.mxu0 0
        %3242 = vmatmul.mubr.bf16.gmra.mxu0 %v2218
        %v3243 = vpop.f32.mrf.mxu0
        %v3244 = vadd.f32 %v3083, %v3243
        %v3245 = vpop.f32.mrf.mxu0
        %v3246 = vpop.f32.mrf.mxu0
        %v3247 = vadd.f32 %v3086, %v3246
        %v3248 = vpop.f32.mrf.mxu0
        %3249 = vdwg.mxu0
        %s3250 = scalar_lea.vmem %s5, 384
        %v3251 = vld [vmem:[%s3250] sm:$0xf]
        %v3252 = vld [vmem:[%s3250 + $0x4] sm:$0xf]
        %v3253 = vld [vmem:[%s3250 + $0x8] sm:$0xf]
        %v3254 = vld [vmem:[%s3250 + $0xc] sm:$0xf]
        %v3255 = vld [vmem:[%s3250 + $0x10] sm:$0xf]
        %v3256 = vld [vmem:[%s3250 + $0x14] sm:$0xf]
        %v3257 = vld [vmem:[%s3250 + $0x18] sm:$0xf]
        %v3258 = vld [vmem:[%s3250 + $0x1c] sm:$0xf]
        %v3259 = vld [vmem:[%s3250 + $0x20] sm:$0xf]
        %v3260 = vld [vmem:[%s3250 + $0x24] sm:$0xf]
        %v3261 = vld [vmem:[%s3250 + $0x28] sm:$0xf]
        %v3262 = vld [vmem:[%s3250 + $0x2c] sm:$0xf]
        %v3263 = vld [vmem:[%s3250 + $0x30] sm:$0xf]
        %v3264 = vld [vmem:[%s3250 + $0x34] sm:$0xf]
        %v3265 = vld [vmem:[%s3250 + $0x38] sm:$0xf]
        %v3266 = vld [vmem:[%s3250 + $0x3c] sm:$0xf]
        %v3267 = vld [vmem:[%s3250 + $0x40] sm:$0xf]
        %v3268 = vld [vmem:[%s3250 + $0x44] sm:$0xf]
        %v3269 = vld [vmem:[%s3250 + $0x48] sm:$0xf]
        %v3270 = vld [vmem:[%s3250 + $0x4c] sm:$0xf]
        %v3271 = vld [vmem:[%s3250 + $0x50] sm:$0xf]
        %v3272 = vld [vmem:[%s3250 + $0x54] sm:$0xf]
        %v3273 = vld [vmem:[%s3250 + $0x58] sm:$0xf]
        %v3274 = vld [vmem:[%s3250 + $0x5c] sm:$0xf]
        %v3275 = vld [vmem:[%s3250 + $0x60] sm:$0xf]
        %v3276 = vld [vmem:[%s3250 + $0x64] sm:$0xf]
        %v3277 = vld [vmem:[%s3250 + $0x68] sm:$0xf]
        %v3278 = vld [vmem:[%s3250 + $0x6c] sm:$0xf]
        %v3279 = vld [vmem:[%s3250 + $0x70] sm:$0xf]
        %v3280 = vld [vmem:[%s3250 + $0x74] sm:$0xf]
        %v3281 = vld [vmem:[%s3250 + $0x78] sm:$0xf]
        %v3282 = vld [vmem:[%s3250 + $0x7c] sm:$0xf]
        %v3283 = vld [vmem:[%s3250 + $0x80] sm:$0xf]
        %v3284 = vld [vmem:[%s3250 + $0x84] sm:$0xf]
        %v3285 = vld [vmem:[%s3250 + $0x88] sm:$0xf]
        %v3286 = vld [vmem:[%s3250 + $0x8c] sm:$0xf]
        %v3287 = vld [vmem:[%s3250 + $0x90] sm:$0xf]
        %v3288 = vld [vmem:[%s3250 + $0x94] sm:$0xf]
        %v3289 = vld [vmem:[%s3250 + $0x98] sm:$0xf]
        %v3290 = vld [vmem:[%s3250 + $0x9c] sm:$0xf]
        %v3291 = vld [vmem:[%s3250 + $0xa0] sm:$0xf]
        %v3292 = vld [vmem:[%s3250 + $0xa4] sm:$0xf]
        %v3293 = vld [vmem:[%s3250 + $0xa8] sm:$0xf]
        %v3294 = vld [vmem:[%s3250 + $0xac] sm:$0xf]
        %v3295 = vld [vmem:[%s3250 + $0xb0] sm:$0xf]
        %v3296 = vld [vmem:[%s3250 + $0xb4] sm:$0xf]
        %v3297 = vld [vmem:[%s3250 + $0xb8] sm:$0xf]
        %v3298 = vld [vmem:[%s3250 + $0xbc] sm:$0xf]
        %v3347 = vunpack.c.l.b16 %v3251
        %v3348 = vunpack.c.l.b16 %v3252
        %v3349 = vunpack.c.l.b16 %v3253
        %v3350 = vunpack.c.l.b16 %v3254
        %v3351 = vunpack.c.l.b16 %v3255
        %v3352 = vunpack.c.l.b16 %v3256
        %v3353 = vunpack.c.l.b16 %v3257
        %v3354 = vunpack.c.l.b16 %v3258
        %v3355 = vunpack.c.l.b16 %v3259
        %v3356 = vunpack.c.l.b16 %v3260
        %v3357 = vunpack.c.l.b16 %v3261
        %v3358 = vunpack.c.l.b16 %v3262
        %v3359 = vunpack.c.l.b16 %v3263
        %v3360 = vunpack.c.l.b16 %v3264
        %v3361 = vunpack.c.l.b16 %v3265
        %v3362 = vunpack.c.l.b16 %v3266
        %v3363 = vunpack.c.l.b16 %v3267
        %v3364 = vunpack.c.l.b16 %v3268
        %v3365 = vunpack.c.l.b16 %v3269
        %v3366 = vunpack.c.l.b16 %v3270
        %v3367 = vunpack.c.l.b16 %v3271
        %v3368 = vunpack.c.l.b16 %v3272
        %v3369 = vunpack.c.l.b16 %v3273
        %v3370 = vunpack.c.l.b16 %v3274
        %v3371 = vunpack.c.l.b16 %v3275
        %v3372 = vunpack.c.l.b16 %v3276
        %v3373 = vunpack.c.l.b16 %v3277
        %v3374 = vunpack.c.l.b16 %v3278
        %v3375 = vunpack.c.l.b16 %v3279
        %v3376 = vunpack.c.l.b16 %v3280
        %v3377 = vunpack.c.l.b16 %v3281
        %v3378 = vunpack.c.l.b16 %v3282
        %v3379 = vunpack.c.l.b16 %v3283
        %v3380 = vunpack.c.l.b16 %v3284
        %v3381 = vunpack.c.l.b16 %v3285
        %v3382 = vunpack.c.l.b16 %v3286
        %v3383 = vunpack.c.l.b16 %v3287
        %v3384 = vunpack.c.l.b16 %v3288
        %v3385 = vunpack.c.l.b16 %v3289
        %v3386 = vunpack.c.l.b16 %v3290
        %v3387 = vunpack.c.l.b16 %v3291
        %v3388 = vunpack.c.l.b16 %v3292
        %v3389 = vunpack.c.l.b16 %v3293
        %v3390 = vunpack.c.l.b16 %v3294
        %v3391 = vunpack.c.l.b16 %v3295
        %v3392 = vunpack.c.l.b16 %v3296
        %v3393 = vunpack.c.l.b16 %v3297
        %v3394 = vunpack.c.l.b16 %v3298
        %v3395 = vpack.c.b16 %v3348, %v3347
        %v3396 = vpack.c.b16 %v3350, %v3349
        %v3397 = vpack.c.b16 %v3352, %v3351
        %v3398 = vpack.c.b16 %v3354, %v3353
        %v3399 = vpack.c.b16 %v3356, %v3355
        %v3400 = vpack.c.b16 %v3358, %v3357
        %v3401 = vpack.c.b16 %v3360, %v3359
        %v3402 = vpack.c.b16 %v3362, %v3361
        %v3403 = vpack.c.b16 %v3364, %v3363
        %v3404 = vpack.c.b16 %v3366, %v3365
        %v3405 = vpack.c.b16 %v3368, %v3367
        %v3406 = vpack.c.b16 %v3370, %v3369
        %v3407 = vpack.c.b16 %v3372, %v3371
        %v3408 = vpack.c.b16 %v3374, %v3373
        %v3409 = vpack.c.b16 %v3376, %v3375
        %v3410 = vpack.c.b16 %v3378, %v3377
        %v3411 = vpack.c.b16 %v3380, %v3379
        %v3412 = vpack.c.b16 %v3382, %v3381
        %v3413 = vpack.c.b16 %v3384, %v3383
        %v3414 = vpack.c.b16 %v3386, %v3385
        %v3415 = vpack.c.b16 %v3388, %v3387
        %v3416 = vpack.c.b16 %v3390, %v3389
        %v3417 = vpack.c.b16 %v3392, %v3391
        %v3418 = vpack.c.b16 %v3394, %v3393
        %3443 = vmatprep.subr.bf16.mxu0 0
        %3444 = vmatpush1.bf16.msra.mxu0 %v3402
        %3445 = vmatprep.subr.bf16.mxu0 0
        %3446 = vmatpush1.bf16.msra.mxu0 %v3401
        %3447 = vmatprep.subr.bf16.mxu0 0
        %3448 = vmatpush1.bf16.msra.mxu0 %v3400
        %3449 = vmatprep.subr.bf16.mxu0 0
        %3450 = vmatpush1.bf16.msra.mxu0 %v3399
        %3451 = vmatprep.subr.bf16.mxu0 0
        %3452 = vmatpush1.bf16.msra.mxu0 %v3398
        %3453 = vmatprep.subr.bf16.mxu0 0
        %3454 = vmatpush1.bf16.msra.mxu0 %v3397
        %3455 = vmatprep.subr.bf16.mxu0 0
        %3456 = vmatpush1.bf16.msra.mxu0 %v3396
        %3457 = vmatprep.subr.bf16.mxu0 0
        %3458 = vmatpush1.bf16.msra.mxu0 %v3395
        %3459 = vmatprep.subr.bf16.mxu0 0
        %3460 = vmatpush2.bf16.msra.mxu0 %v3410
        %3461 = vmatprep.subr.bf16.mxu0 0
        %3462 = vmatpush2.bf16.msra.mxu0 %v3409
        %3463 = vmatprep.subr.bf16.mxu0 0
        %3464 = vmatpush2.bf16.msra.mxu0 %v3408
        %3465 = vmatprep.subr.bf16.mxu0 0
        %3466 = vmatpush2.bf16.msra.mxu0 %v3407
        %3467 = vmatprep.subr.bf16.mxu0 0
        %3468 = vmatpush2.bf16.msra.mxu0 %v3406
        %3469 = vmatprep.subr.bf16.mxu0 0
        %3470 = vmatpush2.bf16.msra.mxu0 %v3405
        %3471 = vmatprep.subr.bf16.mxu0 0
        %3472 = vmatpush2.bf16.msra.mxu0 %v3404
        %3473 = vmatprep.subr.bf16.mxu0 0
        %3474 = vmatpush2.bf16.msra.mxu0 %v3403
        %3475 = vmatprep.mubr.bf16.mxu0 %v1173
        %3476 = vmatmul.mubr.bf16.gmra.mxu0 %v1827
        %v3477 = vpop.f32.mrf.mxu0
        %v3478 = vadd.f32 0.0, %v3477
        %v3479 = vpop.f32.mrf.mxu0
        %v3480 = vpop.f32.mrf.mxu0
        %v3481 = vadd.f32 0.0, %v3480
        %v3482 = vpop.f32.mrf.mxu0
        %3483 = vmatprep.mubr.bf16.mxu0 %v1174
        %3484 = vmatmul.mubr.bf16.gmra.mxu0 %v1828
        %v3485 = vpop.f32.mrf.mxu0
        %v3486 = vadd.f32 0.0, %v3485
        %v3487 = vpop.f32.mrf.mxu0
        %v3488 = vpop.f32.mrf.mxu0
        %v3489 = vadd.f32 0.0, %v3488
        %v3490 = vpop.f32.mrf.mxu0
        %3491 = vmatprep.mubr.bf16.mxu0 %v1175
        %3492 = vmatmul.mubr.bf16.gmra.mxu0 %v1829
        %v3493 = vpop.f32.mrf.mxu0
        %v3494 = vadd.f32 0.0, %v3493
        %v3495 = vpop.f32.mrf.mxu0
        %v3496 = vpop.f32.mrf.mxu0
        %v3497 = vadd.f32 0.0, %v3496
        %v3498 = vpop.f32.mrf.mxu0
        %3499 = vmatprep.mubr.bf16.mxu0 %v1176
        %3500 = vmatmul.mubr.bf16.gmra.mxu0 %v1830
        %v3501 = vpop.f32.mrf.mxu0
        %v3502 = vadd.f32 0.0, %v3501
        %v3503 = vpop.f32.mrf.mxu0
        %v3504 = vpop.f32.mrf.mxu0
        %v3505 = vadd.f32 0.0, %v3504
        %v3506 = vpop.f32.mrf.mxu0
        %3507 = vmatprep.mubr.bf16.mxu0 %v1177
        %3508 = vmatmul.mubr.bf16.gmra.mxu0 %v1831
        %v3509 = vpop.f32.mrf.mxu0
        %v3510 = vadd.f32 0.0, %v3509
        %v3511 = vpop.f32.mrf.mxu0
        %v3512 = vpop.f32.mrf.mxu0
        %v3513 = vadd.f32 0.0, %v3512
        %v3514 = vpop.f32.mrf.mxu0
        %3515 = vmatprep.mubr.bf16.mxu0 %v1178
        %3516 = vmatmul.mubr.bf16.gmra.mxu0 %v1832
        %v3517 = vpop.f32.mrf.mxu0
        %v3518 = vadd.f32 0.0, %v3517
        %v3519 = vpop.f32.mrf.mxu0
        %v3520 = vpop.f32.mrf.mxu0
        %v3521 = vadd.f32 0.0, %v3520
        %v3522 = vpop.f32.mrf.mxu0
        %3523 = vmatprep.mubr.bf16.mxu0 %v1179
        %3524 = vmatmul.mubr.bf16.gmra.mxu0 %v1833
        %v3525 = vpop.f32.mrf.mxu0
        %v3526 = vadd.f32 0.0, %v3525
        %v3527 = vpop.f32.mrf.mxu0
        %v3528 = vpop.f32.mrf.mxu0
        %v3529 = vadd.f32 0.0, %v3528
        %v3530 = vpop.f32.mrf.mxu0
        %3531 = vmatprep.mubr.bf16.mxu0 %v1180
        %3532 = vmatmul.mubr.bf16.gmra.mxu0 %v1834
        %v3533 = vpop.f32.mrf.mxu0
        %v3534 = vadd.f32 0.0, %v3533
        %v3535 = vpop.f32.mrf.mxu0
        %v3536 = vpop.f32.mrf.mxu0
        %v3537 = vadd.f32 0.0, %v3536
        %v3538 = vpop.f32.mrf.mxu0
        %3539 = vmatprep.mubr.bf16.mxu0 %v1181
        %3540 = vmatmul.mubr.bf16.gmra.mxu0 %v1835
        %v3541 = vpop.f32.mrf.mxu0
        %v3542 = vadd.f32 0.0, %v3541
        %v3543 = vpop.f32.mrf.mxu0
        %v3544 = vpop.f32.mrf.mxu0
        %v3545 = vadd.f32 0.0, %v3544
        %v3546 = vpop.f32.mrf.mxu0
        %3547 = vmatprep.mubr.bf16.mxu0 %v1182
        %3548 = vmatmul.mubr.bf16.gmra.mxu0 %v1836
        %v3549 = vpop.f32.mrf.mxu0
        %v3550 = vadd.f32 0.0, %v3549
        %v3551 = vpop.f32.mrf.mxu0
        %v3552 = vpop.f32.mrf.mxu0
        %v3553 = vadd.f32 0.0, %v3552
        %v3554 = vpop.f32.mrf.mxu0
        %3555 = vmatprep.mubr.bf16.mxu0 %v1183
        %3556 = vmatmul.mubr.bf16.gmra.mxu0 %v1837
        %v3557 = vpop.f32.mrf.mxu0
        %v3558 = vadd.f32 0.0, %v3557
        %v3559 = vpop.f32.mrf.mxu0
        %v3560 = vpop.f32.mrf.mxu0
        %v3561 = vadd.f32 0.0, %v3560
        %v3562 = vpop.f32.mrf.mxu0
        %3563 = vmatprep.mubr.bf16.mxu0 %v1184
        %3564 = vmatmul.mubr.bf16.gmra.mxu0 %v1838
        %v3565 = vpop.f32.mrf.mxu0
        %v3566 = vadd.f32 0.0, %v3565
        %v3567 = vpop.f32.mrf.mxu0
        %v3568 = vpop.f32.mrf.mxu0
        %v3569 = vadd.f32 0.0, %v3568
        %v3570 = vpop.f32.mrf.mxu0
        %3571 = vmatprep.mubr.bf16.mxu0 %v1185
        %3572 = vmatmul.mubr.bf16.gmra.mxu0 %v1839
        %v3573 = vpop.f32.mrf.mxu0
        %v3574 = vadd.f32 0.0, %v3573
        %v3575 = vpop.f32.mrf.mxu0
        %v3576 = vpop.f32.mrf.mxu0
        %v3577 = vadd.f32 0.0, %v3576
        %v3578 = vpop.f32.mrf.mxu0
        %3579 = vmatprep.mubr.bf16.mxu0 %v1186
        %3580 = vmatmul.mubr.bf16.gmra.mxu0 %v1840
        %v3581 = vpop.f32.mrf.mxu0
        %v3582 = vadd.f32 0.0, %v3581
        %v3583 = vpop.f32.mrf.mxu0
        %v3584 = vpop.f32.mrf.mxu0
        %v3585 = vadd.f32 0.0, %v3584
        %v3586 = vpop.f32.mrf.mxu0
        %3587 = vmatprep.mubr.bf16.mxu0 %v1187
        %3588 = vmatmul.mubr.bf16.gmra.mxu0 %v1841
        %v3589 = vpop.f32.mrf.mxu0
        %v3590 = vadd.f32 0.0, %v3589
        %v3591 = vpop.f32.mrf.mxu0
        %v3592 = vpop.f32.mrf.mxu0
        %v3593 = vadd.f32 0.0, %v3592
        %v3594 = vpop.f32.mrf.mxu0
        %3595 = vmatprep.mubr.bf16.mxu0 %v1188
        %3596 = vmatmul.mubr.bf16.gmra.mxu0 %v1842
        %v3597 = vpop.f32.mrf.mxu0
        %v3598 = vadd.f32 0.0, %v3597
        %v3599 = vpop.f32.mrf.mxu0
        %v3600 = vpop.f32.mrf.mxu0
        %v3601 = vadd.f32 0.0, %v3600
        %v3602 = vpop.f32.mrf.mxu0
        %3603 = vdwg.mxu0
        %3604 = vmatprep.subr.bf16.mxu0 0
        %3605 = vmatpush1.bf16.msra.mxu0 %v3418
        %3606 = vmatprep.subr.bf16.mxu0 0
        %3607 = vmatpush1.bf16.msra.mxu0 %v3417
        %3608 = vmatprep.subr.bf16.mxu0 0
        %3609 = vmatpush1.bf16.msra.mxu0 %v3416
        %3610 = vmatprep.subr.bf16.mxu0 0
        %3611 = vmatpush1.bf16.msra.mxu0 %v3415
        %3612 = vmatprep.subr.bf16.mxu0 0
        %3613 = vmatpush1.bf16.msra.mxu0 %v3414
        %3614 = vmatprep.subr.bf16.mxu0 0
        %3615 = vmatpush1.bf16.msra.mxu0 %v3413
        %3616 = vmatprep.subr.bf16.mxu0 0
        %3617 = vmatpush1.bf16.msra.mxu0 %v3412
        %3618 = vmatprep.subr.bf16.mxu0 0
        %3619 = vmatpush1.bf16.msra.mxu0 %v3411
        %3620 = vmatprep.subr.bf16.mxu0 0
        %3621 = vmatpush2.bf16.msra.mxu0 0
        %3622 = vmatprep.subr.bf16.mxu0 0
        %3623 = vmatpush2.bf16.msra.mxu0 0
        %3624 = vmatprep.subr.bf16.mxu0 0
        %3625 = vmatpush2.bf16.msra.mxu0 0
        %3626 = vmatprep.subr.bf16.mxu0 0
        %3627 = vmatpush2.bf16.msra.mxu0 0
        %3628 = vmatprep.subr.bf16.mxu0 0
        %3629 = vmatpush2.bf16.msra.mxu0 0
        %3630 = vmatprep.subr.bf16.mxu0 0
        %3631 = vmatpush2.bf16.msra.mxu0 0
        %3632 = vmatprep.subr.bf16.mxu0 0
        %3633 = vmatpush2.bf16.msra.mxu0 0
        %3634 = vmatprep.subr.bf16.mxu0 0
        %3635 = vmatpush2.bf16.msra.mxu0 0
        %3636 = vmatprep.mubr.bf16.mxu0 0
        %3637 = vmatmul.mubr.bf16.gmra.mxu0 %v2205
        %v3638 = vpop.f32.mrf.mxu0
        %v3639 = vadd.f32 %v3478, %v3638
        %v3640 = vpop.f32.mrf.mxu0
        %v3641 = vpop.f32.mrf.mxu0
        %v3642 = vadd.f32 %v3481, %v3641
        %v3643 = vpop.f32.mrf.mxu0
        %3644 = vmatprep.mubr.bf16.mxu0 0
        %3645 = vmatmul.mubr.bf16.gmra.mxu0 %v2206
        %v3646 = vpop.f32.mrf.mxu0
        %v3647 = vadd.f32 %v3486, %v3646
        %v3648 = vpop.f32.mrf.mxu0
        %v3649 = vpop.f32.mrf.mxu0
        %v3650 = vadd.f32 %v3489, %v3649
        %v3651 = vpop.f32.mrf.mxu0
        %3652 = vmatprep.mubr.bf16.mxu0 0
        %3653 = vmatmul.mubr.bf16.gmra.mxu0 %v2207
        %v3654 = vpop.f32.mrf.mxu0
        %v3655 = vadd.f32 %v3494, %v3654
        %v3656 = vpop.f32.mrf.mxu0
        %v3657 = vpop.f32.mrf.mxu0
        %v3658 = vadd.f32 %v3497, %v3657
        %v3659 = vpop.f32.mrf.mxu0
        %3660 = vmatprep.mubr.bf16.mxu0 0
        %3661 = vmatmul.mubr.bf16.gmra.mxu0 %v2208
        %v3662 = vpop.f32.mrf.mxu0
        %v3663 = vadd.f32 %v3502, %v3662
        %v3664 = vpop.f32.mrf.mxu0
        %v3665 = vpop.f32.mrf.mxu0
        %v3666 = vadd.f32 %v3505, %v3665
        %v3667 = vpop.f32.mrf.mxu0
        %3668 = vmatprep.mubr.bf16.mxu0 0
        %3669 = vmatmul.mubr.bf16.gmra.mxu0 %v2209
        %v3670 = vpop.f32.mrf.mxu0
        %v3671 = vadd.f32 %v3510, %v3670
        %v3672 = vpop.f32.mrf.mxu0
        %v3673 = vpop.f32.mrf.mxu0
        %v3674 = vadd.f32 %v3513, %v3673
        %v3675 = vpop.f32.mrf.mxu0
        %3676 = vmatprep.mubr.bf16.mxu0 0
        %3677 = vmatmul.mubr.bf16.gmra.mxu0 %v2210
        %v3678 = vpop.f32.mrf.mxu0
        %v3679 = vadd.f32 %v3518, %v3678
        %v3680 = vpop.f32.mrf.mxu0
        %v3681 = vpop.f32.mrf.mxu0
        %v3682 = vadd.f32 %v3521, %v3681
        %v3683 = vpop.f32.mrf.mxu0
        %3684 = vmatprep.mubr.bf16.mxu0 0
        %3685 = vmatmul.mubr.bf16.gmra.mxu0 %v2211
        %v3686 = vpop.f32.mrf.mxu0
        %v3687 = vadd.f32 %v3526, %v3686
        %v3688 = vpop.f32.mrf.mxu0
        %v3689 = vpop.f32.mrf.mxu0
        %v3690 = vadd.f32 %v3529, %v3689
        %v3691 = vpop.f32.mrf.mxu0
        %3692 = vmatprep.mubr.bf16.mxu0 0
        %3693 = vmatmul.mubr.bf16.gmra.mxu0 %v2212
        %v3694 = vpop.f32.mrf.mxu0
        %v3695 = vadd.f32 %v3534, %v3694
        %v3696 = vpop.f32.mrf.mxu0
        %v3697 = vpop.f32.mrf.mxu0
        %v3698 = vadd.f32 %v3537, %v3697
        %v3699 = vpop.f32.mrf.mxu0
        %3700 = vmatprep.mubr.bf16.mxu0 0
        %3701 = vmatmul.mubr.bf16.gmra.mxu0 %v2213
        %v3702 = vpop.f32.mrf.mxu0
        %v3703 = vadd.f32 %v3542, %v3702
        %v3704 = vpop.f32.mrf.mxu0
        %v3705 = vpop.f32.mrf.mxu0
        %v3706 = vadd.f32 %v3545, %v3705
        %v3707 = vpop.f32.mrf.mxu0
        %3708 = vmatprep.mubr.bf16.mxu0 0
        %3709 = vmatmul.mubr.bf16.gmra.mxu0 %v2214
        %v3710 = vpop.f32.mrf.mxu0
        %v3711 = vadd.f32 %v3550, %v3710
        %v3712 = vpop.f32.mrf.mxu0
        %v3713 = vpop.f32.mrf.mxu0
        %v3714 = vadd.f32 %v3553, %v3713
        %v3715 = vpop.f32.mrf.mxu0
        %3716 = vmatprep.mubr.bf16.mxu0 0
        %3717 = vmatmul.mubr.bf16.gmra.mxu0 %v2215
        %v3718 = vpop.f32.mrf.mxu0
        %v3719 = vadd.f32 %v3558, %v3718
        %v3720 = vpop.f32.mrf.mxu0
        %v3721 = vpop.f32.mrf.mxu0
        %v3722 = vadd.f32 %v3561, %v3721
        %v3723 = vpop.f32.mrf.mxu0
        %3724 = vmatprep.mubr.bf16.mxu0 0
        %3725 = vmatmul.mubr.bf16.gmra.mxu0 %v2216
        %v3726 = vpop.f32.mrf.mxu0
        %v3727 = vadd.f32 %v3566, %v3726
        %v3728 = vpop.f32.mrf.mxu0
        %v3729 = vpop.f32.mrf.mxu0
        %v3730 = vadd.f32 %v3569, %v3729
        %v3731 = vpop.f32.mrf.mxu0
        %3732 = vmatprep.mubr.bf16.mxu0 0
        %3733 = vmatmul.mubr.bf16.gmra.mxu0 %v2217
        %v3734 = vpop.f32.mrf.mxu0
        %v3735 = vadd.f32 %v3574, %v3734
        %v3736 = vpop.f32.mrf.mxu0
        %v3737 = vpop.f32.mrf.mxu0
        %v3738 = vadd.f32 %v3577, %v3737
        %v3739 = vpop.f32.mrf.mxu0
        %3740 = vmatprep.mubr.bf16.mxu0 0
        %3741 = vmatmul.mubr.bf16.gmra.mxu0 %v2218
        %v3742 = vpop.f32.mrf.mxu0
        %v3743 = vadd.f32 %v3582, %v3742
        %v3744 = vpop.f32.mrf.mxu0
        %v3745 = vpop.f32.mrf.mxu0
        %v3746 = vadd.f32 %v3585, %v3745
        %v3747 = vpop.f32.mrf.mxu0
        %3748 = vmatprep.mubr.bf16.mxu0 0
        %3749 = vmatmul.mubr.bf16.gmra.mxu0 %v2219
        %v3750 = vpop.f32.mrf.mxu0
        %v3751 = vadd.f32 %v3590, %v3750
        %v3752 = vpop.f32.mrf.mxu0
        %v3753 = vpop.f32.mrf.mxu0
        %v3754 = vadd.f32 %v3593, %v3753
        %v3755 = vpop.f32.mrf.mxu0
        %3756 = vmatprep.mubr.bf16.mxu0 0
        %3757 = vmatmul.mubr.bf16.gmra.mxu0 %v2220
        %v3758 = vpop.f32.mrf.mxu0
        %v3759 = vadd.f32 %v3598, %v3758
        %v3760 = vpop.f32.mrf.mxu0
        %v3761 = vpop.f32.mrf.mxu0
        %v3762 = vadd.f32 %v3601, %v3761
        %v3763 = vpop.f32.mrf.mxu0
        %3764 = vdwg.mxu0
        %v3765 = vadd.f32 %v3124, %v3639
        %v3766 = vadd.f32 %v3127, %v3642
        %v3767 = vadd.f32 %v3132, %v3647
        %v3768 = vadd.f32 %v3135, %v3650
        %v3769 = vadd.f32 %v3140, %v3655
        %v3770 = vadd.f32 %v3143, %v3658
        %v3771 = vadd.f32 %v3148, %v3663
        %v3772 = vadd.f32 %v3151, %v3666
        %v3773 = vadd.f32 %v3156, %v3671
        %v3774 = vadd.f32 %v3159, %v3674
        %v3775 = vadd.f32 %v3164, %v3679
        %v3776 = vadd.f32 %v3167, %v3682
        %v3777 = vadd.f32 %v3172, %v3687
        %v3778 = vadd.f32 %v3175, %v3690
        %v3779 = vadd.f32 %v3180, %v3695
        %v3780 = vadd.f32 %v3183, %v3698
        %v3781 = vadd.f32 %v3188, %v3703
        %v3782 = vadd.f32 %v3191, %v3706
        %v3783 = vadd.f32 %v3196, %v3711
        %v3784 = vadd.f32 %v3199, %v3714
        %v3785 = vadd.f32 %v3204, %v3719
        %v3786 = vadd.f32 %v3207, %v3722
        %v3787 = vadd.f32 %v3212, %v3727
        %v3788 = vadd.f32 %v3215, %v3730
        %v3789 = vadd.f32 %v3220, %v3735
        %v3790 = vadd.f32 %v3223, %v3738
        %v3791 = vadd.f32 %v3228, %v3743
        %v3792 = vadd.f32 %v3231, %v3746
        %v3793 = vadd.f32 %v3236, %v3751
        %v3794 = vadd.f32 %v3239, %v3754
        %v3795 = vadd.f32 %v3244, %v3759
        %v3796 = vadd.f32 %v3247, %v3762
        %v3797 = vld [vmem:[%s6] sm:$0x1]
        %v3799 = vlaneseq
        %v3800 = vshrl.u32 %v3799, 7
        %v3801 = vsub.s32 0, %v3800
        %v3802 = vrot.slane %v3797, %v3801
        %v3804 = vadd.f32 %v3765, %v3802
        %v3805 = vadd.f32 %v3766, %v3802
        %v3806 = vadd.f32 %v3767, %v3802
        %v3807 = vadd.f32 %v3768, %v3802
        %v3808 = vadd.f32 %v3769, %v3802
        %v3809 = vadd.f32 %v3770, %v3802
        %v3810 = vadd.f32 %v3771, %v3802
        %v3811 = vadd.f32 %v3772, %v3802
        %v3812 = vadd.f32 %v3773, %v3802
        %v3813 = vadd.f32 %v3774, %v3802
        %v3814 = vadd.f32 %v3775, %v3802
        %v3815 = vadd.f32 %v3776, %v3802
        %v3816 = vadd.f32 %v3777, %v3802
        %v3817 = vadd.f32 %v3778, %v3802
        %v3818 = vadd.f32 %v3779, %v3802
        %v3819 = vadd.f32 %v3780, %v3802
        %v3820 = vadd.f32 %v3781, %v3802
        %v3821 = vadd.f32 %v3782, %v3802
        %v3822 = vadd.f32 %v3783, %v3802
        %v3823 = vadd.f32 %v3784, %v3802
        %v3824 = vadd.f32 %v3785, %v3802
        %v3825 = vadd.f32 %v3786, %v3802
        %v3826 = vadd.f32 %v3787, %v3802
        %v3827 = vadd.f32 %v3788, %v3802
        %v3828 = vadd.f32 %v3789, %v3802
        %v3829 = vadd.f32 %v3790, %v3802
        %v3830 = vadd.f32 %v3791, %v3802
        %v3831 = vadd.f32 %v3792, %v3802
        %v3832 = vadd.f32 %v3793, %v3802
        %v3833 = vadd.f32 %v3794, %v3802
        %v3834 = vadd.f32 %v3795, %v3802
        %v3835 = vadd.f32 %v3796, %v3802
        %v3836 = vmax.f32 %v3804, 0.0
        %v3837 = vmax.f32 %v3805, 0.0
        %v3838 = vmax.f32 %v3806, 0.0
        %v3839 = vmax.f32 %v3807, 0.0
        %v3840 = vmax.f32 %v3808, 0.0
        %v3841 = vmax.f32 %v3809, 0.0
        %v3842 = vmax.f32 %v3810, 0.0
        %v3843 = vmax.f32 %v3811, 0.0
        %v3844 = vmax.f32 %v3812, 0.0
        %v3845 = vmax.f32 %v3813, 0.0
        %v3846 = vmax.f32 %v3814, 0.0
        %v3847 = vmax.f32 %v3815, 0.0
        %v3848 = vmax.f32 %v3816, 0.0
        %v3849 = vmax.f32 %v3817, 0.0
        %v3850 = vmax.f32 %v3818, 0.0
        %v3851 = vmax.f32 %v3819, 0.0
        %v3852 = vmax.f32 %v3820, 0.0
        %v3853 = vmax.f32 %v3821, 0.0
        %v3854 = vmax.f32 %v3822, 0.0
        %v3855 = vmax.f32 %v3823, 0.0
        %v3856 = vmax.f32 %v3824, 0.0
        %v3857 = vmax.f32 %v3825, 0.0
        %v3858 = vmax.f32 %v3826, 0.0
        %v3859 = vmax.f32 %v3827, 0.0
        %v3860 = vmax.f32 %v3828, 0.0
        %v3861 = vmax.f32 %v3829, 0.0
        %v3862 = vmax.f32 %v3830, 0.0
        %v3863 = vmax.f32 %v3831, 0.0
        %v3864 = vmax.f32 %v3832, 0.0
        %v3865 = vmax.f32 %v3833, 0.0
        %v3866 = vmax.f32 %v3834, 0.0
        %v3867 = vmax.f32 %v3835, 0.0
        %v3868 = vpack.c.bf16 %v3837, %v3836
        %v3869 = vpack.c.bf16 %v3839, %v3838
        %v3870 = vpack.c.bf16 %v3841, %v3840
        %v3871 = vpack.c.bf16 %v3843, %v3842
        %v3872 = vpack.c.bf16 %v3845, %v3844
        %v3873 = vpack.c.bf16 %v3847, %v3846
        %v3874 = vpack.c.bf16 %v3849, %v3848
        %v3875 = vpack.c.bf16 %v3851, %v3850
        %v3876 = vpack.c.bf16 %v3853, %v3852
        %v3877 = vpack.c.bf16 %v3855, %v3854
        %v3878 = vpack.c.bf16 %v3857, %v3856
        %v3879 = vpack.c.bf16 %v3859, %v3858
        %v3880 = vpack.c.bf16 %v3861, %v3860
        %v3881 = vpack.c.bf16 %v3863, %v3862
        %v3882 = vpack.c.bf16 %v3865, %v3864
        %v3883 = vpack.c.bf16 %v3867, %v3866
        %v3884 = vld [vmem:[#allocation7] sm:$0xf]
        %v3885 = vld [vmem:[#allocation7 + $0x4] sm:$0xf]
        %v3886 = vld [vmem:[#allocation7 + $0x8] sm:$0xf]
        %v3887 = vld [vmem:[#allocation7 + $0xc] sm:$0xf]
        %v3888 = vld [vmem:[#allocation7 + $0x10] sm:$0xf]
        %v3889 = vld [vmem:[#allocation7 + $0x14] sm:$0xf]
        %v3890 = vld [vmem:[#allocation7 + $0x18] sm:$0xf]
        %v3891 = vld [vmem:[#allocation7 + $0x1c] sm:$0xf]
        %v3892 = vld [vmem:[#allocation7 + $0x20] sm:$0xf]
        %v3893 = vld [vmem:[#allocation7 + $0x24] sm:$0xf]
        %v3894 = vld [vmem:[#allocation7 + $0x28] sm:$0xf]
        %v3895 = vld [vmem:[#allocation7 + $0x2c] sm:$0xf]
        %v3896 = vld [vmem:[#allocation7 + $0x30] sm:$0xf]
        %v3897 = vld [vmem:[#allocation7 + $0x34] sm:$0xf]
        %v3898 = vld [vmem:[#allocation7 + $0x38] sm:$0xf]
        %v3899 = vld [vmem:[#allocation7 + $0x3c] sm:$0xf]
        %v3900 = vld [vmem:[%s8] sm:$0x1]
        %v3902 = vlaneseq
        %v3903 = vshrl.u32 %v3902, 7
        %v3904 = vsub.s32 0, %v3903
        %v3905 = vrot.slane %v3900, %v3904
        %v3923 = vunpack.c.l.b16 %v3884
        %v3924 = vunpack.c.l.b16 %v3885
        %v3925 = vunpack.c.l.b16 %v3886
        %v3926 = vunpack.c.l.b16 %v3887
        %v3927 = vunpack.c.l.b16 %v3888
        %v3928 = vunpack.c.l.b16 %v3889
        %v3929 = vunpack.c.l.b16 %v3890
        %v3930 = vunpack.c.l.b16 %v3891
        %v3931 = vunpack.c.l.b16 %v3892
        %v3932 = vunpack.c.l.b16 %v3893
        %v3933 = vunpack.c.l.b16 %v3894
        %v3934 = vunpack.c.l.b16 %v3895
        %v3935 = vunpack.c.l.b16 %v3896
        %v3936 = vunpack.c.l.b16 %v3897
        %v3937 = vunpack.c.l.b16 %v3898
        %v3938 = vunpack.c.l.b16 %v3899
        %v3939 = vpack.c.b16 %v3924, %v3923
        %v3940 = vpack.c.b16 %v3926, %v3925
        %v3941 = vpack.c.b16 %v3928, %v3927
        %v3942 = vpack.c.b16 %v3930, %v3929
        %v3943 = vpack.c.b16 %v3932, %v3931
        %v3944 = vpack.c.b16 %v3934, %v3933
        %v3945 = vpack.c.b16 %v3936, %v3935
        %v3946 = vpack.c.b16 %v3938, %v3937
        %3955 = vmatprep.subr.bf16.mxu0 0
        %3956 = vmatpush1.bf16.msra.mxu0 %v3946
        %3957 = vmatprep.subr.bf16.mxu0 0
        %3958 = vmatpush1.bf16.msra.mxu0 %v3945
        %3959 = vmatprep.subr.bf16.mxu0 0
        %3960 = vmatpush1.bf16.msra.mxu0 %v3944
        %3961 = vmatprep.subr.bf16.mxu0 0
        %3962 = vmatpush1.bf16.msra.mxu0 %v3943
        %3963 = vmatprep.subr.bf16.mxu0 0
        %3964 = vmatpush1.bf16.msra.mxu0 %v3942
        %3965 = vmatprep.subr.bf16.mxu0 0
        %3966 = vmatpush1.bf16.msra.mxu0 %v3941
        %3967 = vmatprep.subr.bf16.mxu0 0
        %3968 = vmatpush1.bf16.msra.mxu0 %v3940
        %3969 = vmatprep.subr.bf16.mxu0 0
        %3970 = vmatpush1.bf16.msra.mxu0 %v3939
        %3971 = vmatprep.subr.bf16.mxu0 0
        %3972 = vmatpush2.bf16.msra.mxu0 0
        %3973 = vmatprep.subr.bf16.mxu0 0
        %3974 = vmatpush2.bf16.msra.mxu0 0
        %3975 = vmatprep.subr.bf16.mxu0 0
        %3976 = vmatpush2.bf16.msra.mxu0 0
        %3977 = vmatprep.subr.bf16.mxu0 0
        %3978 = vmatpush2.bf16.msra.mxu0 0
        %3979 = vmatprep.subr.bf16.mxu0 0
        %3980 = vmatpush2.bf16.msra.mxu0 0
        %3981 = vmatprep.subr.bf16.mxu0 0
        %3982 = vmatpush2.bf16.msra.mxu0 0
        %3983 = vmatprep.subr.bf16.mxu0 0
        %3984 = vmatpush2.bf16.msra.mxu0 0
        %3985 = vmatprep.subr.bf16.mxu0 0
        %3986 = vmatpush2.bf16.msra.mxu0 0
        %3987 = vmatprep.mubr.bf16.mxu0 0
        %3988 = vmatmul.mubr.bf16.gmra.mxu0 %v3868
        %v3989 = vpop.f32.mrf.mxu0
        %v3990 = vadd.f32 %v3905, %v3989
        %v3991 = vpop.f32.mrf.mxu0
        %v3992 = vpop.f32.mrf.mxu0
        %v3993 = vadd.f32 %v3905, %v3992
        %v3994 = vpop.f32.mrf.mxu0
        %3995 = vmatprep.mubr.bf16.mxu0 0
        %3996 = vmatmul.mubr.bf16.gmra.mxu0 %v3869
        %v3997 = vpop.f32.mrf.mxu0
        %v3998 = vadd.f32 %v3905, %v3997
        %v3999 = vpop.f32.mrf.mxu0
        %v4000 = vpop.f32.mrf.mxu0
        %v4001 = vadd.f32 %v3905, %v4000
        %v4002 = vpop.f32.mrf.mxu0
        %4003 = vmatprep.mubr.bf16.mxu0 0
        %4004 = vmatmul.mubr.bf16.gmra.mxu0 %v3870
        %v4005 = vpop.f32.mrf.mxu0
        %v4006 = vadd.f32 %v3905, %v4005
        %v4007 = vpop.f32.mrf.mxu0
        %v4008 = vpop.f32.mrf.mxu0
        %v4009 = vadd.f32 %v3905, %v4008
        %v4010 = vpop.f32.mrf.mxu0
        %4011 = vmatprep.mubr.bf16.mxu0 0
        %4012 = vmatmul.mubr.bf16.gmra.mxu0 %v3871
        %v4013 = vpop.f32.mrf.mxu0
        %v4014 = vadd.f32 %v3905, %v4013
        %v4015 = vpop.f32.mrf.mxu0
        %v4016 = vpop.f32.mrf.mxu0
        %v4017 = vadd.f32 %v3905, %v4016
        %v4018 = vpop.f32.mrf.mxu0
        %4019 = vmatprep.mubr.bf16.mxu0 0
        %4020 = vmatmul.mubr.bf16.gmra.mxu0 %v3872
        %v4021 = vpop.f32.mrf.mxu0
        %v4022 = vadd.f32 %v3905, %v4021
        %v4023 = vpop.f32.mrf.mxu0
        %v4024 = vpop.f32.mrf.mxu0
        %v4025 = vadd.f32 %v3905, %v4024
        %v4026 = vpop.f32.mrf.mxu0
        %4027 = vmatprep.mubr.bf16.mxu0 0
        %4028 = vmatmul.mubr.bf16.gmra.mxu0 %v3873
        %v4029 = vpop.f32.mrf.mxu0
        %v4030 = vadd.f32 %v3905, %v4029
        %v4031 = vpop.f32.mrf.mxu0
        %v4032 = vpop.f32.mrf.mxu0
        %v4033 = vadd.f32 %v3905, %v4032
        %v4034 = vpop.f32.mrf.mxu0
        %4035 = vmatprep.mubr.bf16.mxu0 0
        %4036 = vmatmul.mubr.bf16.gmra.mxu0 %v3874
        %v4037 = vpop.f32.mrf.mxu0
        %v4038 = vadd.f32 %v3905, %v4037
        %v4039 = vpop.f32.mrf.mxu0
        %v4040 = vpop.f32.mrf.mxu0
        %v4041 = vadd.f32 %v3905, %v4040
        %v4042 = vpop.f32.mrf.mxu0
        %4043 = vmatprep.mubr.bf16.mxu0 0
        %4044 = vmatmul.mubr.bf16.gmra.mxu0 %v3875
        %v4045 = vpop.f32.mrf.mxu0
        %v4046 = vadd.f32 %v3905, %v4045
        %v4047 = vpop.f32.mrf.mxu0
        %v4048 = vpop.f32.mrf.mxu0
        %v4049 = vadd.f32 %v3905, %v4048
        %v4050 = vpop.f32.mrf.mxu0
        %4051 = vmatprep.mubr.bf16.mxu0 0
        %4052 = vmatmul.mubr.bf16.gmra.mxu0 %v3876
        %v4053 = vpop.f32.mrf.mxu0
        %v4054 = vadd.f32 %v3905, %v4053
        %v4055 = vpop.f32.mrf.mxu0
        %v4056 = vpop.f32.mrf.mxu0
        %v4057 = vadd.f32 %v3905, %v4056
        %v4058 = vpop.f32.mrf.mxu0
        %4059 = vmatprep.mubr.bf16.mxu0 0
        %4060 = vmatmul.mubr.bf16.gmra.mxu0 %v3877
        %v4061 = vpop.f32.mrf.mxu0
        %v4062 = vadd.f32 %v3905, %v4061
        %v4063 = vpop.f32.mrf.mxu0
        %v4064 = vpop.f32.mrf.mxu0
        %v4065 = vadd.f32 %v3905, %v4064
        %v4066 = vpop.f32.mrf.mxu0
        %4067 = vmatprep.mubr.bf16.mxu0 0
        %4068 = vmatmul.mubr.bf16.gmra.mxu0 %v3878
        %v4069 = vpop.f32.mrf.mxu0
        %v4070 = vadd.f32 %v3905, %v4069
        %v4071 = vpop.f32.mrf.mxu0
        %v4072 = vpop.f32.mrf.mxu0
        %v4073 = vadd.f32 %v3905, %v4072
        %v4074 = vpop.f32.mrf.mxu0
        %4075 = vmatprep.mubr.bf16.mxu0 0
        %4076 = vmatmul.mubr.bf16.gmra.mxu0 %v3879
        %v4077 = vpop.f32.mrf.mxu0
        %v4078 = vadd.f32 %v3905, %v4077
        %v4079 = vpop.f32.mrf.mxu0
        %v4080 = vpop.f32.mrf.mxu0
        %v4081 = vadd.f32 %v3905, %v4080
        %v4082 = vpop.f32.mrf.mxu0
        %4083 = vmatprep.mubr.bf16.mxu0 0
        %4084 = vmatmul.mubr.bf16.gmra.mxu0 %v3880
        %v4085 = vpop.f32.mrf.mxu0
        %v4086 = vadd.f32 %v3905, %v4085
        %v4087 = vpop.f32.mrf.mxu0
        %v4088 = vpop.f32.mrf.mxu0
        %v4089 = vadd.f32 %v3905, %v4088
        %v4090 = vpop.f32.mrf.mxu0
        %4091 = vmatprep.mubr.bf16.mxu0 0
        %4092 = vmatmul.mubr.bf16.gmra.mxu0 %v3881
        %v4093 = vpop.f32.mrf.mxu0
        %v4094 = vadd.f32 %v3905, %v4093
        %v4095 = vpop.f32.mrf.mxu0
        %v4096 = vpop.f32.mrf.mxu0
        %v4097 = vadd.f32 %v3905, %v4096
        %v4098 = vpop.f32.mrf.mxu0
        %4099 = vmatprep.mubr.bf16.mxu0 0
        %4100 = vmatmul.mubr.bf16.gmra.mxu0 %v3882
        %v4101 = vpop.f32.mrf.mxu0
        %v4102 = vadd.f32 %v3905, %v4101
        %v4103 = vpop.f32.mrf.mxu0
        %v4104 = vpop.f32.mrf.mxu0
        %v4105 = vadd.f32 %v3905, %v4104
        %v4106 = vpop.f32.mrf.mxu0
        %4107 = vmatprep.mubr.bf16.mxu0 0
        %4108 = vmatmul.mubr.bf16.gmra.mxu0 %v3883
        %v4109 = vpop.f32.mrf.mxu0
        %v4110 = vadd.f32 %v3905, %v4109
        %v4111 = vpop.f32.mrf.mxu0
        %v4112 = vpop.f32.mrf.mxu0
        %v4113 = vadd.f32 %v3905, %v4112
        %v4114 = vpop.f32.mrf.mxu0
        %4115 = vdwg.mxu0
        %v4116 = vld [vmem:[#allocation8] sm:$0xf]
        %v4117 = vld [vmem:[#allocation8 + $0x4] sm:$0xf]
        %v4118 = vld [vmem:[#allocation8 + $0x8] sm:$0xf]
        %v4119 = vld [vmem:[#allocation8 + $0xc] sm:$0xf]
        %v4120 = vld [vmem:[#allocation8 + $0x10] sm:$0xf]
        %v4121 = vld [vmem:[#allocation8 + $0x14] sm:$0xf]
        %v4122 = vld [vmem:[#allocation8 + $0x18] sm:$0xf]
        %v4123 = vld [vmem:[#allocation8 + $0x1c] sm:$0xf]
        %v4124 = vld [vmem:[#allocation8 + $0x20] sm:$0xf]
        %v4125 = vld [vmem:[#allocation8 + $0x24] sm:$0xf]
        %v4126 = vld [vmem:[#allocation8 + $0x28] sm:$0xf]
        %v4127 = vld [vmem:[#allocation8 + $0x2c] sm:$0xf]
        %v4128 = vld [vmem:[#allocation8 + $0x30] sm:$0xf]
        %v4129 = vld [vmem:[#allocation8 + $0x34] sm:$0xf]
        %v4130 = vld [vmem:[#allocation8 + $0x38] sm:$0xf]
        %v4131 = vld [vmem:[#allocation8 + $0x3c] sm:$0xf]
        %v4132 = vld [vmem:[%s10] sm:$0x1]
        %v4134 = vlaneseq
        %v4135 = vshrl.u32 %v4134, 7
        %v4136 = vsub.s32 0, %v4135
        %v4137 = vrot.slane %v4132, %v4136
        %v4155 = vunpack.c.l.b16 %v4116
        %v4156 = vunpack.c.l.b16 %v4117
        %v4157 = vunpack.c.l.b16 %v4118
        %v4158 = vunpack.c.l.b16 %v4119
        %v4159 = vunpack.c.l.b16 %v4120
        %v4160 = vunpack.c.l.b16 %v4121
        %v4161 = vunpack.c.l.b16 %v4122
        %v4162 = vunpack.c.l.b16 %v4123
        %v4163 = vunpack.c.l.b16 %v4124
        %v4164 = vunpack.c.l.b16 %v4125
        %v4165 = vunpack.c.l.b16 %v4126
        %v4166 = vunpack.c.l.b16 %v4127
        %v4167 = vunpack.c.l.b16 %v4128
        %v4168 = vunpack.c.l.b16 %v4129
        %v4169 = vunpack.c.l.b16 %v4130
        %v4170 = vunpack.c.l.b16 %v4131
        %v4171 = vpack.c.b16 %v4156, %v4155
        %v4172 = vpack.c.b16 %v4158, %v4157
        %v4173 = vpack.c.b16 %v4160, %v4159
        %v4174 = vpack.c.b16 %v4162, %v4161
        %v4175 = vpack.c.b16 %v4164, %v4163
        %v4176 = vpack.c.b16 %v4166, %v4165
        %v4177 = vpack.c.b16 %v4168, %v4167
        %v4178 = vpack.c.b16 %v4170, %v4169
        %4187 = vmatprep.subr.bf16.mxu0 0
        %4188 = vmatpush1.bf16.msra.mxu0 %v4178
        %4189 = vmatprep.subr.bf16.mxu0 0
        %4190 = vmatpush1.bf16.msra.mxu0 %v4177
        %4191 = vmatprep.subr.bf16.mxu0 0
        %4192 = vmatpush1.bf16.msra.mxu0 %v4176
        %4193 = vmatprep.subr.bf16.mxu0 0
        %4194 = vmatpush1.bf16.msra.mxu0 %v4175
        %4195 = vmatprep.subr.bf16.mxu0 0
        %4196 = vmatpush1.bf16.msra.mxu0 %v4174
        %4197 = vmatprep.subr.bf16.mxu0 0
        %4198 = vmatpush1.bf16.msra.mxu0 %v4173
        %4199 = vmatprep.subr.bf16.mxu0 0
        %4200 = vmatpush1.bf16.msra.mxu0 %v4172
        %4201 = vmatprep.subr.bf16.mxu0 0
        %4202 = vmatpush1.bf16.msra.mxu0 %v4171
        %4203 = vmatprep.subr.bf16.mxu0 0
        %4204 = vmatpush2.bf16.msra.mxu0 0
        %4205 = vmatprep.subr.bf16.mxu0 0
        %4206 = vmatpush2.bf16.msra.mxu0 0
        %4207 = vmatprep.subr.bf16.mxu0 0
        %4208 = vmatpush2.bf16.msra.mxu0 0
        %4209 = vmatprep.subr.bf16.mxu0 0
        %4210 = vmatpush2.bf16.msra.mxu0 0
        %4211 = vmatprep.subr.bf16.mxu0 0
        %4212 = vmatpush2.bf16.msra.mxu0 0
        %4213 = vmatprep.subr.bf16.mxu0 0
        %4214 = vmatpush2.bf16.msra.mxu0 0
        %4215 = vmatprep.subr.bf16.mxu0 0
        %4216 = vmatpush2.bf16.msra.mxu0 0
        %4217 = vmatprep.subr.bf16.mxu0 0
        %4218 = vmatpush2.bf16.msra.mxu0 0
        %4219 = vmatprep.mubr.bf16.mxu0 0
        %4220 = vmatmul.mubr.bf16.gmra.mxu0 %v623
        %v4221 = vpop.f32.mrf.mxu0
        %v4222 = vadd.f32 %v4137, %v4221
        %v4223 = vpop.f32.mrf.mxu0
        %v4224 = vpop.f32.mrf.mxu0
        %v4225 = vadd.f32 %v4137, %v4224
        %v4226 = vpop.f32.mrf.mxu0
        %4227 = vmatprep.mubr.bf16.mxu0 0
        %4228 = vmatmul.mubr.bf16.gmra.mxu0 %v624
        %v4229 = vpop.f32.mrf.mxu0
        %v4230 = vadd.f32 %v4137, %v4229
        %v4231 = vpop.f32.mrf.mxu0
        %v4232 = vpop.f32.mrf.mxu0
        %v4233 = vadd.f32 %v4137, %v4232
        %v4234 = vpop.f32.mrf.mxu0
        %4235 = vmatprep.mubr.bf16.mxu0 0
        %4236 = vmatmul.mubr.bf16.gmra.mxu0 %v625
        %v4237 = vpop.f32.mrf.mxu0
        %v4238 = vadd.f32 %v4137, %v4237
        %v4239 = vpop.f32.mrf.mxu0
        %v4240 = vpop.f32.mrf.mxu0
        %v4241 = vadd.f32 %v4137, %v4240
        %v4242 = vpop.f32.mrf.mxu0
        %4243 = vmatprep.mubr.bf16.mxu0 0
        %4244 = vmatmul.mubr.bf16.gmra.mxu0 %v626
        %v4245 = vpop.f32.mrf.mxu0
        %v4246 = vadd.f32 %v4137, %v4245
        %v4247 = vpop.f32.mrf.mxu0
        %v4248 = vpop.f32.mrf.mxu0
        %v4249 = vadd.f32 %v4137, %v4248
        %v4250 = vpop.f32.mrf.mxu0
        %4251 = vmatprep.mubr.bf16.mxu0 0
        %4252 = vmatmul.mubr.bf16.gmra.mxu0 %v627
        %v4253 = vpop.f32.mrf.mxu0
        %v4254 = vadd.f32 %v4137, %v4253
        %v4255 = vpop.f32.mrf.mxu0
        %v4256 = vpop.f32.mrf.mxu0
        %v4257 = vadd.f32 %v4137, %v4256
        %v4258 = vpop.f32.mrf.mxu0
        %4259 = vmatprep.mubr.bf16.mxu0 0
        %4260 = vmatmul.mubr.bf16.gmra.mxu0 %v628
        %v4261 = vpop.f32.mrf.mxu0
        %v4262 = vadd.f32 %v4137, %v4261
        %v4263 = vpop.f32.mrf.mxu0
        %v4264 = vpop.f32.mrf.mxu0
        %v4265 = vadd.f32 %v4137, %v4264
        %v4266 = vpop.f32.mrf.mxu0
        %4267 = vmatprep.mubr.bf16.mxu0 0
        %4268 = vmatmul.mubr.bf16.gmra.mxu0 %v629
        %v4269 = vpop.f32.mrf.mxu0
        %v4270 = vadd.f32 %v4137, %v4269
        %v4271 = vpop.f32.mrf.mxu0
        %v4272 = vpop.f32.mrf.mxu0
        %v4273 = vadd.f32 %v4137, %v4272
        %v4274 = vpop.f32.mrf.mxu0
        %4275 = vmatprep.mubr.bf16.mxu0 0
        %4276 = vmatmul.mubr.bf16.gmra.mxu0 %v630
        %v4277 = vpop.f32.mrf.mxu0
        %v4278 = vadd.f32 %v4137, %v4277
        %v4279 = vpop.f32.mrf.mxu0
        %v4280 = vpop.f32.mrf.mxu0
        %v4281 = vadd.f32 %v4137, %v4280
        %v4282 = vpop.f32.mrf.mxu0
        %4283 = vmatprep.mubr.bf16.mxu0 0
        %4284 = vmatmul.mubr.bf16.gmra.mxu0 %v631
        %v4285 = vpop.f32.mrf.mxu0
        %v4286 = vadd.f32 %v4137, %v4285
        %v4287 = vpop.f32.mrf.mxu0
        %v4288 = vpop.f32.mrf.mxu0
        %v4289 = vadd.f32 %v4137, %v4288
        %v4290 = vpop.f32.mrf.mxu0
        %4291 = vmatprep.mubr.bf16.mxu0 0
        %4292 = vmatmul.mubr.bf16.gmra.mxu0 %v632
        %v4293 = vpop.f32.mrf.mxu0
        %v4294 = vadd.f32 %v4137, %v4293
        %v4295 = vpop.f32.mrf.mxu0
        %v4296 = vpop.f32.mrf.mxu0
        %v4297 = vadd.f32 %v4137, %v4296
        %v4298 = vpop.f32.mrf.mxu0
        %4299 = vmatprep.mubr.bf16.mxu0 0
        %4300 = vmatmul.mubr.bf16.gmra.mxu0 %v633
        %v4301 = vpop.f32.mrf.mxu0
        %v4302 = vadd.f32 %v4137, %v4301
        %v4303 = vpop.f32.mrf.mxu0
        %v4304 = vpop.f32.mrf.mxu0
        %v4305 = vadd.f32 %v4137, %v4304
        %v4306 = vpop.f32.mrf.mxu0
        %4307 = vmatprep.mubr.bf16.mxu0 0
        %4308 = vmatmul.mubr.bf16.gmra.mxu0 %v634
        %v4309 = vpop.f32.mrf.mxu0
        %v4310 = vadd.f32 %v4137, %v4309
        %v4311 = vpop.f32.mrf.mxu0
        %v4312 = vpop.f32.mrf.mxu0
        %v4313 = vadd.f32 %v4137, %v4312
        %v4314 = vpop.f32.mrf.mxu0
        %4315 = vmatprep.mubr.bf16.mxu0 0
        %4316 = vmatmul.mubr.bf16.gmra.mxu0 %v635
        %v4317 = vpop.f32.mrf.mxu0
        %v4318 = vadd.f32 %v4137, %v4317
        %v4319 = vpop.f32.mrf.mxu0
        %v4320 = vpop.f32.mrf.mxu0
        %v4321 = vadd.f32 %v4137, %v4320
        %v4322 = vpop.f32.mrf.mxu0
        %4323 = vmatprep.mubr.bf16.mxu0 0
        %4324 = vmatmul.mubr.bf16.gmra.mxu0 %v636
        %v4325 = vpop.f32.mrf.mxu0
        %v4326 = vadd.f32 %v4137, %v4325
        %v4327 = vpop.f32.mrf.mxu0
        %v4328 = vpop.f32.mrf.mxu0
        %v4329 = vadd.f32 %v4137, %v4328
        %v4330 = vpop.f32.mrf.mxu0
        %4331 = vmatprep.mubr.bf16.mxu0 0
        %4332 = vmatmul.mubr.bf16.gmra.mxu0 %v637
        %v4333 = vpop.f32.mrf.mxu0
        %v4334 = vadd.f32 %v4137, %v4333
        %v4335 = vpop.f32.mrf.mxu0
        %v4336 = vpop.f32.mrf.mxu0
        %v4337 = vadd.f32 %v4137, %v4336
        %v4338 = vpop.f32.mrf.mxu0
        %4339 = vmatprep.mubr.bf16.mxu0 0
        %4340 = vmatmul.mubr.bf16.gmra.mxu0 %v638
        %v4341 = vpop.f32.mrf.mxu0
        %v4342 = vadd.f32 %v4137, %v4341
        %v4343 = vpop.f32.mrf.mxu0
        %v4344 = vpop.f32.mrf.mxu0
        %v4345 = vadd.f32 %v4137, %v4344
        %v4346 = vpop.f32.mrf.mxu0
        %4347 = vdwg.mxu0
        %v4348 = vadd.f32 %v3990, %v4222
        %v4349 = vadd.f32 %v3993, %v4225
        %v4350 = vadd.f32 %v3998, %v4230
        %v4351 = vadd.f32 %v4001, %v4233
        %v4352 = vadd.f32 %v4006, %v4238
        %v4353 = vadd.f32 %v4009, %v4241
        %v4354 = vadd.f32 %v4014, %v4246
        %v4355 = vadd.f32 %v4017, %v4249
        %v4356 = vadd.f32 %v4022, %v4254
        %v4357 = vadd.f32 %v4025, %v4257
        %v4358 = vadd.f32 %v4030, %v4262
        %v4359 = vadd.f32 %v4033, %v4265
        %v4360 = vadd.f32 %v4038, %v4270
        %v4361 = vadd.f32 %v4041, %v4273
        %v4362 = vadd.f32 %v4046, %v4278
        %v4363 = vadd.f32 %v4049, %v4281
        %v4364 = vadd.f32 %v4054, %v4286
        %v4365 = vadd.f32 %v4057, %v4289
        %v4366 = vadd.f32 %v4062, %v4294
        %v4367 = vadd.f32 %v4065, %v4297
        %v4368 = vadd.f32 %v4070, %v4302
        %v4369 = vadd.f32 %v4073, %v4305
        %v4370 = vadd.f32 %v4078, %v4310
        %v4371 = vadd.f32 %v4081, %v4313
        %v4372 = vadd.f32 %v4086, %v4318
        %v4373 = vadd.f32 %v4089, %v4321
        %v4374 = vadd.f32 %v4094, %v4326
        %v4375 = vadd.f32 %v4097, %v4329
        %v4376 = vadd.f32 %v4102, %v4334
        %v4377 = vadd.f32 %v4105, %v4337
        %v4378 = vadd.f32 %v4110, %v4342
        %v4379 = vadd.f32 %v4113, %v4345
        %v4380 = vmax.f32 %v4348, 0.0
        %v4381 = vmax.f32 %v4349, 0.0
        %v4382 = vmax.f32 %v4350, 0.0
        %v4383 = vmax.f32 %v4351, 0.0
        %v4384 = vmax.f32 %v4352, 0.0
        %v4385 = vmax.f32 %v4353, 0.0
        %v4386 = vmax.f32 %v4354, 0.0
        %v4387 = vmax.f32 %v4355, 0.0
        %v4388 = vmax.f32 %v4356, 0.0
        %v4389 = vmax.f32 %v4357, 0.0
        %v4390 = vmax.f32 %v4358, 0.0
        %v4391 = vmax.f32 %v4359, 0.0
        %v4392 = vmax.f32 %v4360, 0.0
        %v4393 = vmax.f32 %v4361, 0.0
        %v4394 = vmax.f32 %v4362, 0.0
        %v4395 = vmax.f32 %v4363, 0.0
        %v4396 = vmax.f32 %v4364, 0.0
        %v4397 = vmax.f32 %v4365, 0.0
        %v4398 = vmax.f32 %v4366, 0.0
        %v4399 = vmax.f32 %v4367, 0.0
        %v4400 = vmax.f32 %v4368, 0.0
        %v4401 = vmax.f32 %v4369, 0.0
        %v4402 = vmax.f32 %v4370, 0.0
        %v4403 = vmax.f32 %v4371, 0.0
        %v4404 = vmax.f32 %v4372, 0.0
        %v4405 = vmax.f32 %v4373, 0.0
        %v4406 = vmax.f32 %v4374, 0.0
        %v4407 = vmax.f32 %v4375, 0.0
        %v4408 = vmax.f32 %v4376, 0.0
        %v4409 = vmax.f32 %v4377, 0.0
        %v4410 = vmax.f32 %v4378, 0.0
        %v4411 = vmax.f32 %v4379, 0.0
        %v4412 = vpack.c.bf16 %v4381, %v4380
        %v4413 = vpack.c.bf16 %v4383, %v4382
        %v4414 = vpack.c.bf16 %v4385, %v4384
        %v4415 = vpack.c.bf16 %v4387, %v4386
        %v4416 = vpack.c.bf16 %v4389, %v4388
        %v4417 = vpack.c.bf16 %v4391, %v4390
        %v4418 = vpack.c.bf16 %v4393, %v4392
        %v4419 = vpack.c.bf16 %v4395, %v4394
        %v4420 = vpack.c.bf16 %v4397, %v4396
        %v4421 = vpack.c.bf16 %v4399, %v4398
        %v4422 = vpack.c.bf16 %v4401, %v4400
        %v4423 = vpack.c.bf16 %v4403, %v4402
        %v4424 = vpack.c.bf16 %v4405, %v4404
        %v4425 = vpack.c.bf16 %v4407, %v4406
        %v4426 = vpack.c.bf16 %v4409, %v4408
        %v4427 = vpack.c.bf16 %v4411, %v4410
        %v4444 = vunpack.c.l.b16 %v4412
        %v4445 = vunpack.c.h.b16 %v4412
        %v4446 = vunpack.c.l.b16 %v4413
        %v4447 = vunpack.c.h.b16 %v4413
        %v4448 = vunpack.c.l.b16 %v4414
        %v4449 = vunpack.c.h.b16 %v4414
        %v4450 = vunpack.c.l.b16 %v4415
        %v4451 = vunpack.c.h.b16 %v4415
        %v4452 = vunpack.c.l.b16 %v4416
        %v4453 = vunpack.c.h.b16 %v4416
        %v4454 = vunpack.c.l.b16 %v4417
        %v4455 = vunpack.c.h.b16 %v4417
        %v4456 = vunpack.c.l.b16 %v4418
        %v4457 = vunpack.c.h.b16 %v4418
        %v4458 = vunpack.c.l.b16 %v4419
        %v4459 = vunpack.c.h.b16 %v4419
        %v4460 = vunpack.c.l.b16 %v4420
        %v4461 = vunpack.c.h.b16 %v4420
        %v4462 = vunpack.c.l.b16 %v4421
        %v4463 = vunpack.c.h.b16 %v4421
        %v4464 = vunpack.c.l.b16 %v4422
        %v4465 = vunpack.c.h.b16 %v4422
        %v4466 = vunpack.c.l.b16 %v4423
        %v4467 = vunpack.c.h.b16 %v4423
        %v4468 = vunpack.c.l.b16 %v4424
        %v4469 = vunpack.c.h.b16 %v4424
        %v4470 = vunpack.c.l.b16 %v4425
        %v4471 = vunpack.c.h.b16 %v4425
        %v4472 = vunpack.c.l.b16 %v4426
        %v4473 = vunpack.c.h.b16 %v4426
        %v4474 = vunpack.c.l.b16 %v4427
        %v4475 = vunpack.c.h.b16 %v4427
        %v4476 = vpack.c.b16 %v4444, %v4444
        %v4477 = vpack.c.b16 %v4445, %v4445
        %v4478 = vpack.c.b16 %v4446, %v4446
        %v4479 = vpack.c.b16 %v4447, %v4447
        %v4480 = vpack.c.b16 %v4448, %v4448
        %v4481 = vpack.c.b16 %v4449, %v4449
        %v4482 = vpack.c.b16 %v4450, %v4450
        %v4483 = vpack.c.b16 %v4451, %v4451
        %v4484 = vpack.c.b16 %v4452, %v4452
        %v4485 = vpack.c.b16 %v4453, %v4453
        %v4486 = vpack.c.b16 %v4454, %v4454
        %v4487 = vpack.c.b16 %v4455, %v4455
        %v4488 = vpack.c.b16 %v4456, %v4456
        %v4489 = vpack.c.b16 %v4457, %v4457
        %v4490 = vpack.c.b16 %v4458, %v4458
        %v4491 = vpack.c.b16 %v4459, %v4459
        %v4492 = vpack.c.b16 %v4460, %v4460
        %v4493 = vpack.c.b16 %v4461, %v4461
        %v4494 = vpack.c.b16 %v4462, %v4462
        %v4495 = vpack.c.b16 %v4463, %v4463
        %v4496 = vpack.c.b16 %v4464, %v4464
        %v4497 = vpack.c.b16 %v4465, %v4465
        %v4498 = vpack.c.b16 %v4466, %v4466
        %v4499 = vpack.c.b16 %v4467, %v4467
        %v4500 = vpack.c.b16 %v4468, %v4468
        %v4501 = vpack.c.b16 %v4469, %v4469
        %v4502 = vpack.c.b16 %v4470, %v4470
        %v4503 = vpack.c.b16 %v4471, %v4471
        %v4504 = vpack.c.b16 %v4472, %v4472
        %v4505 = vpack.c.b16 %v4473, %v4473
        %v4506 = vpack.c.b16 %v4474, %v4474
        %v4507 = vpack.c.b16 %v4475, %v4475
        %4540 = vst [vmem:[%s477] sm:$0xf] %v4476
        %4541 = vst [vmem:[%s477 + $0x4] sm:$0xf] %v4477
        %4542 = vst [vmem:[%s477 + $0x8] sm:$0xf] %v4478
        %4543 = vst [vmem:[%s477 + $0xc] sm:$0xf] %v4479
        %4544 = vst [vmem:[%s477 + $0x10] sm:$0xf] %v4480
        %4545 = vst [vmem:[%s477 + $0x14] sm:$0xf] %v4481
        %4546 = vst [vmem:[%s477 + $0x18] sm:$0xf] %v4482
        %4547 = vst [vmem:[%s477 + $0x1c] sm:$0xf] %v4483
        %4548 = vst [vmem:[%s477 + $0x20] sm:$0xf] %v4484
        %4549 = vst [vmem:[%s477 + $0x24] sm:$0xf] %v4485
        %4550 = vst [vmem:[%s477 + $0x28] sm:$0xf] %v4486
        %4551 = vst [vmem:[%s477 + $0x2c] sm:$0xf] %v4487
        %4552 = vst [vmem:[%s477 + $0x30] sm:$0xf] %v4488
        %4553 = vst [vmem:[%s477 + $0x34] sm:$0xf] %v4489
        %4554 = vst [vmem:[%s477 + $0x38] sm:$0xf] %v4490
        %4555 = vst [vmem:[%s477 + $0x3c] sm:$0xf] %v4491
        %4556 = vst [vmem:[%s477 + $0x40] sm:$0xf] %v4492
        %4557 = vst [vmem:[%s477 + $0x44] sm:$0xf] %v4493
        %4558 = vst [vmem:[%s477 + $0x48] sm:$0xf] %v4494
        %4559 = vst [vmem:[%s477 + $0x4c] sm:$0xf] %v4495
        %4560 = vst [vmem:[%s477 + $0x50] sm:$0xf] %v4496
        %4561 = vst [vmem:[%s477 + $0x54] sm:$0xf] %v4497
        %4562 = vst [vmem:[%s477 + $0x58] sm:$0xf] %v4498
        %4563 = vst [vmem:[%s477 + $0x5c] sm:$0xf] %v4499
        %4564 = vst [vmem:[%s477 + $0x60] sm:$0xf] %v4500
        %4565 = vst [vmem:[%s477 + $0x64] sm:$0xf] %v4501
        %4566 = vst [vmem:[%s477 + $0x68] sm:$0xf] %v4502
        %4567 = vst [vmem:[%s477 + $0x6c] sm:$0xf] %v4503
        %4568 = vst [vmem:[%s477 + $0x70] sm:$0xf] %v4504
        %4569 = vst [vmem:[%s477 + $0x74] sm:$0xf] %v4505
        %4570 = vst [vmem:[%s477 + $0x78] sm:$0xf] %v4506
        %4571 = vst [vmem:[%s477 + $0x7c] sm:$0xf] %v4507
        %s4572 = sand.u32 %s293, 1
        %s4573 = scalar_lea.sflag [#allocation4], %s4572
        %s4574 = sand.u32 %s293, 1
        %s4575 = smul.addr %s4574, 128
        %s4576 = scalar_lea.vmem [#allocation10], %s4575
        // Predicated region
        $region81: #{tpu_custom_call.1} parent=63 // pred_check
          %p4577 = pneg %p303
        $region82: #{tpu_custom_call.1} parent=63 // pred_check_branch
          %4579 = sbr.rel (%p4577) target = $region84
        $region83: #{tpu_custom_call.1} parent=63 // pred_region
          %s4580 = smul.u32 16, %s35
          %s4582 = ssub.s32 2048, 2048
          %4583 = vsyncadd %s4573, %s4582
          %s4584 = smul.addr %s4580, 2
          %s4585 = smul.addr %s34, 32
          %s4586 = sadd.s32 %s4584, %s4585
          %s4587 = smul.addr %s4586, 64
          %s4588 = scalar_lea.hbm %s11, %s4587
          %s4589 = sshll.u32 %s4576, 4
          %s4590 = int_to_ptr.vmem [resolvable:$true] %s4589
          %4595 = dma.vmem_to_hbm [thread:$0]  %s4590, 2048, %s4588, %s4573, 64, 64, 4
        $region84: #{tpu_custom_call.1} parent=63 // pred_fallthru
          _
      $region64: #{tpu_custom_call.1} parent=5 // pred_fallthru
        _
      %p4596 = scmp.le.s32.totalorder 2, %s25
      // Predicated region
      $region85: #{tpu_custom_call.1} parent=5 // pred_check
        %p4597 = pneg %p4596
      $region86: #{tpu_custom_call.1} parent=5 // pred_check_branch
        %4599 = sbr.rel (%p4597) target = $region88
      $region87: #{tpu_custom_call.1} parent=5 // pred_region
        %s4600 = ssub.s32 %s25, 2
        // Predicated region
        $region89: #{tpu_custom_call.1} parent=87 // pred_check
          %p4601 = pneg %p309
        $region90: #{tpu_custom_call.1} parent=87 // pred_check_branch
          %4603 = sbr.rel (%p4601) target = $region92
        $region91: #{tpu_custom_call.1} parent=87 // pred_region
          %s4604 = sand.u32 %s294, 1
          %s4605 = scalar_lea.sflag [#allocation4], %s4604
          %s4606 = sand.u32 %s294, 1
          %s4607 = smul.addr %s4606, 128
          %s4608 = scalar_lea.vmem [#allocation10], %s4607
          %4609 = dma.done %s4605, 2048
        $region92: #{tpu_custom_call.1} parent=87 // pred_fallthru
          _
      $region88: #{tpu_custom_call.1} parent=5 // pred_fallthru
        _
    $region6: #{tpu_custom_call.1} parent=1 // loop_footer
      %s29 = sadd.s32 1, %s25
    $region7: #{tpu_custom_call.1} parent=1 // loop_footer_branch
      %24 = sbr.rel target = $region3
    $region8: #{tpu_custom_call.1} parent=1 // loop_exit
      _
    %4610 = vsyncpa [#allocation3], 1
    %s4611 = scalar_lea.sflag [#allocation3], 1
    %4612 = vsyncpa %s4611, 1
    %4613 = vsyncpa [#allocation6], 1
    %4614 = vsyncpa [#allocation9], 1
    %4615 = vsyncpa [#allocation4], 1
    %s4616 = scalar_lea.sflag [#allocation4], 1
    %4617 = vsyncpa %s4616, 1

</llo_original>
